<compile_context>
chip_gen: v5e
topology: v5e:2x2
jax: 0.10.0
libtpu: 0.0.40
codegen_flags: <defaults>
</compile_context>

<pallas_src>
import jax
import jax.numpy as jnp
from jax.experimental import pallas as pl
from jax.experimental.pallas import tpu as pltpu

EPS = 1e-5
LANE = 128
SUBLANE = 8


def _round_up(x, m):
    return ((x + m - 1) // m) * m


def _vmem():
    return pl.BlockSpec(memory_space=pltpu.MemorySpace.VMEM)


# ---------------------------------------------------------------------------
# Fused kernel: frontend + n_layers GRU + head, single invocation.
# Sequences enter time-major flattened and batch-padded: row = t*Bp + b.
# ---------------------------------------------------------------------------
def _make_grunet_kernel(T, Bp, Hp, half, n_layers, mxu_dtype):
    f32 = jnp.float32

    def sigmoid_t(x):
        # sigmoid via a single EUP tanh: sigmoid(x) = 0.5*tanh(0.5*x) + 0.5
        return 0.5 * jnp.tanh(0.5 * x) + 0.5

    def kernel(*refs):
        n_in = 9 + 4 * n_layers
        in_refs = refs[:n_in]
        out_ref, hout_ref = refs[n_in], refs[n_in + 1]

        (rgb_ref, aud_ref, h0_ref,
         w_rgb_ref, b_rgb_ref, w_aud_ref, b_aud_ref) = in_refs[:7]
        w_fc_ref = in_refs[7 + 4 * n_layers]
        b_fc_ref = in_refs[8 + 4 * n_layers]

        # ---- frontend: Linear (eval-BN folded in) + ReLU, all T*Bp rows ----
        rgb_act = jnp.maximum(
            jnp.dot(rgb_ref[...].astype(mxu_dtype), w_rgb_ref[...],
                    preferred_element_type=f32) + b_rgb_ref[...], 0.0)
        aud_act = jnp.maximum(
            jnp.dot(aud_ref[...].astype(mxu_dtype), w_aud_ref[...],
                    preferred_element_type=f32) + b_aud_ref[...], 0.0)

        layer_in = None
        h = None
        for l in range(n_layers):
            wih_ref, whh_ref, gbias_ref, bhhn_ref = in_refs[7 + 4 * l: 11 + 4 * l]
            is_last = (l == n_layers - 1)

            # ---- hoisted x @ W_ih for all T steps: one packed matmul ----
            if l == 0:
                wih = wih_ref[...]                              # (2*half, 3*Hp)
                gates = (jnp.dot(rgb_act.astype(mxu_dtype), wih[:half, :],
                                 preferred_element_type=f32)
                         + jnp.dot(aud_act.astype(mxu_dtype), wih[half:, :],
                                   preferred_element_type=f32)
                         + gbias_ref[...])
            else:
                gates = (jnp.dot(layer_in.astype(mxu_dtype), wih_ref[...],
                                 preferred_element_type=f32)
                         + gbias_ref[...])
            # gates: (T*Bp, 3*Hp) f32; each gate (r|z|n) on its own 128-lane panel

            whh = whh_ref[...]                                  # (Hp, 3*Hp)
            bhh_n = bhhn_ref[...]                               # (1, Hp)
            h = h0_ref[l]                                       # (Bp, Hp), f32

            ys = []
            # TODO(synk): for production T, switch to lax.fori_loop over a
            # (T, Bp, 3*Hp) VMEM scratch with pl.ds leading-dim indexing
            # (unroll=2-4) to bound vreg live ranges.
            for t in range(T):
                xg = gates[t * Bp:(t + 1) * Bp, :]              # tile-aligned slice
                # TODO(synk): stage whh in the MXU across the T steps with
                # pltpu.matmul_push_rhs / matmul_acc_lhs / matmul_pop.
                hg = jnp.dot(h.astype(mxu_dtype), whh,
                             preferred_element_type=f32)
                rz = sigmoid_t(xg[:, :2 * Hp] + hg[:, :2 * Hp])  # r|z fused
                r, z = rz[:, :Hp], rz[:, Hp:]
                n = jnp.tanh(xg[:, 2 * Hp:] + r * (hg[:, 2 * Hp:] + bhh_n))
                h = (1.0 - z) * n + z * h
                if not is_last:
                    ys.append(h)

            hout_ref[l] = h                                     # lane-dense store
            if not is_last:
                layer_in = jnp.concatenate(ys, axis=0)          # (T*Bp, Hp), aligned

        # head: fc(relu(h_T of top layer)) -> lane-dense (Bp, Op) store
        out_ref[...] = (jnp.dot(jnp.maximum(h, 0.0).astype(mxu_dtype),
                                w_fc_ref[...], preferred_element_type=f32)
                        + b_fc_ref[...])
    return kernel


def grunet_forward(rgb, aud, h0, kp, *, output_dim):
    """rgb: (B,T,rgb_size), aud: (B,T,audio_size), h0: (L,B,H); kp = pack_params(...)."""
    B, T, R = rgb.shape
    A = aud.shape[-1]
    L, _, H = h0.shape
    half = kp["w_rgb"].shape[1]
    Hp = kp["gru"][0]["whh"].shape[0]
    Op = kp["w_fc"].shape[1]
    Bp = _round_up(B, SUBLANE)
    mxu_dtype = kp["w_fc"].dtype

    # Time-major, batch padded to the 8-sublane tile (row = t*Bp + b).
    # TODO(synk): at production sizes express this layout via BlockSpec
    # index_maps instead of a host-side transpose.
    def to_tm(x):
        x = jnp.transpose(x, (1, 0, 2))
        x = jnp.pad(x, ((0, 0), (0, Bp - B), (0, 0)))
        return x.reshape(T * Bp, x.shape[-1])

    rgb_tm, aud_tm = to_tm(rgb), to_tm(aud)
    h0_pad = jnp.pad(h0, ((0, 0), (0, Bp - B), (0, Hp - H)))

    args = [rgb_tm, aud_tm, h0_pad,
            kp["w_rgb"], kp["b_rgb"], kp["w_aud"], kp["b_aud"]]
    for lp in kp["gru"]:
        args += [lp["wih"], lp["whh"], lp["gbias"], lp["bhh_n"]]
    args += [kp["w_fc"], kp["b_fc"]]

    kernel = _make_grunet_kernel(T, Bp, Hp, half, L, mxu_dtype)

    out_pad, hout_pad = pl.pallas_call(
        kernel,
        out_shape=(jax.ShapeDtypeStruct((Bp, Op), jnp.float32),
                   jax.ShapeDtypeStruct((L, Bp, Hp), jnp.float32)),
        in_specs=[_vmem()] * len(args),
        out_specs=(_vmem(), _vmem()),
        compiler_params=pltpu.CompilerParams(vmem_limit_bytes=32 * 1024 * 1024),
        # TODO(synk): on v7x add a 'parallel' batch-tile grid axis so the
        # recurrence is split across both TensorCores at production batch.
    )(*args)
    return out_pad[:B, :output_dim], hout_pad[:, :B, :H]


# ---------------------------------------------------------------------------
# Deterministic synthetic parameters (module layout, PyTorch gate order r,z,n)
# ---------------------------------------------------------------------------
def init_params(key, rgb_size, audio_size, input_dim, hidden_dim, output_dim, n_layers):
    half = input_dim // 2
    ks = iter(jax.random.split(key, 16 + 4 * n_layers))

    def nrm(shape, scale=0.1):
        return scale * jax.random.normal(next(ks), shape, jnp.float32)

    def uni(shape, lo=0.5, hi=1.5):
        return jax.random.uniform(next(ks), shape, jnp.float32, lo, hi)

    p = {
        "w_rgb": nrm((rgb_size, half)),     "b_rgb": nrm((1, half)),
        "w_aud": nrm((audio_size, half)),   "b_aud": nrm((1, half)),
        "w_fc": nrm((hidden_dim, output_dim)), "b_fc": nrm((1, output_dim)),
    }
    # BatchNorm1d eval-mode params -> per-feature scale/shift
    for name in ("rgb", "aud"):
        gamma, beta = uni((1, half)), nrm((1, half))
        mean, var = nrm((1, half)), uni((1, half))
        scale = gamma / jnp.sqrt(var + EPS)
        p[f"{name}_scale"] = scale
        p[f"{name}_shift"] = beta - mean * scale

    p["gru"] = []
    for l in range(n_layers):
        din = input_dim if l == 0 else hidden_dim
        p["gru"].append({
            "wih": nrm((3, din, hidden_dim)),
            "whh": nrm((3, hidden_dim, hidden_dim)),
            "bih": nrm((3, 1, hidden_dim)),
            "bhh": nrm((3, 1, hidden_dim)),
        })
    return p


def pack_params(p, hidden_dim, output_dim, matmul_dtype=jnp.float32):
    """Fold eval-BN into the frontend Linears, pack GRU gates (r|z|n) onto
    128-lane-aligned panels, pad the head lane-dense, and store all matmul
    operands in `matmul_dtype` (bf16 recommended on v6e/v7x)."""
    H, O = hidden_dim, output_dim
    Hp, Op = _round_up(H, LANE), _round_up(O, LANE)
    mdt = matmul_dtype

    kp = {
        "w_rgb": (p["w_rgb"] * p["rgb_scale"]).astype(mdt),
        "b_rgb": p["b_rgb"] * p["rgb_scale"] + p["rgb_shift"],
        "w_aud": (p["w_aud"] * p["aud_scale"]).astype(mdt),
        "b_aud": p["b_aud"] * p["aud_scale"] + p["aud_shift"],
        "w_fc": jnp.zeros((Hp, Op), mdt).at[:H, :O].set(p["w_fc"].astype(mdt)),
        "b_fc": jnp.zeros((1, Op), jnp.float32).at[:, :O].set(p["b_fc"]),
        "gru": [],
    }
    for l, lp in enumerate(p["gru"]):
        din = lp["wih"].shape[1]
        din_p = din if l == 0 else Hp
        wih = jnp.zeros((din_p, 3 * Hp), mdt)
        whh = jnp.zeros((Hp, 3 * Hp), mdt)
        gbias = jnp.zeros((1, 3 * Hp), jnp.float32)
        for g in range(3):
            wih = wih.at[:din, g * Hp:g * Hp + H].set(lp["wih"][g].astype(mdt))
            whh = whh.at[:H, g * Hp:g * Hp + H].set(lp["whh"][g].astype(mdt))
            b = lp["bih"][g] + lp["bhh"][g] if g < 2 else lp["bih"][g]
            gbias = gbias.at[:, g * Hp:g * Hp + H].set(b)
        bhh_n = jnp.zeros((1, Hp), jnp.float32).at[:, :H].set(lp["bhh"][2])
        kp["gru"].append({"wih": wih, "whh": whh, "gbias": gbias, "bhh_n": bhh_n})
    return kp


# ---------------------------------------------------------------------------
# Pure-JAX reference (unfolded BN, per-gate weights) for correctness check
# ---------------------------------------------------------------------------
def reference_forward(rgb, aud, h0, p):
    prec = jax.lax.Precision.HIGHEST
    rgb_in = jnp.einsum("btr,rh->bth", rgb, p["w_rgb"], precision=prec) + p["b_rgb"]
    aud_in = jnp.einsum("bta,ah->bth", aud, p["w_aud"], precision=prec) + p["b_aud"]
    rgb_in = jax.nn.relu(rgb_in * p["rgb_scale"] + p["rgb_shift"])
    aud_in = jax.nn.relu(aud_in * p["aud_scale"] + p["aud_shift"])
    x = jnp.concatenate([rgb_in, aud_in], axis=-1)        # (B, T, D)
    x_tm = jnp.transpose(x, (1, 0, 2))                    # (T, B, D)

    h_finals = []
    layer_in = x_tm
    for l, lp in enumerate(p["gru"]):
        wih, whh, bih, bhh = lp["wih"], lp["whh"], lp["bih"], lp["bhh"]

        def step(h, x_t):
            r = jax.nn.sigmoid(x_t @ wih[0] + bih[0] + h @ whh[0] + bhh[0])
            z = jax.nn.sigmoid(x_t @ wih[1] + bih[1] + h @ whh[1] + bhh[1])
            n = jnp.tanh(x_t @ wih[2] + bih[2] + r * (h @ whh[2] + bhh[2]))
            h_new = (1.0 - z) * n + z * h
            return h_new, h_new

        hT, ys = jax.lax.scan(step, h0[l], layer_in)
        h_finals.append(hT)
        layer_in = ys

    out = jax.nn.relu(h_finals[-1]) @ p["w_fc"] + p["b_fc"]
    return out, jnp.stack(h_finals, axis=0)


if __name__ == "__main__":
    # Small shapes consistent with the module
    B, T = 2, 8
    rgb_size, audio_size = 48, 40
    input_dim, hidden_dim, output_dim, n_layers = 64, 32, 10, 2

    key = jax.random.PRNGKey(0)
    kp_key, kr, ka, _ = jax.random.split(key, 4)
    params = init_params(kp_key, rgb_size, audio_size, input_dim, hidden_dim,
                         output_dim, n_layers)

    rgb = jax.random.normal(kr, (B, T, rgb_size), jnp.float32)
    aud = jax.random.normal(ka, (B, T, audio_size), jnp.float32)
    h0 = jnp.zeros((n_layers, B, hidden_dim), jnp.float32)   # init_hidden()

    out_ref, h_ref = reference_forward(rgb, aud, h0, params)

    fwd = jax.jit(grunet_forward, static_argnames="output_dim")

    # f32 MXU-input path (numerically strict; default choice on v5e)
    packed_f32 = pack_params(params, hidden_dim, output_dim, jnp.float32)
    out32, h32 = fwd(rgb, aud, h0, packed_f32, output_dim=output_dim)
    out32 = jax.block_until_ready(out32)
    h32 = jax.block_until_ready(h32)
    assert out32.shape == (B, output_dim) and h32.shape == (n_layers, B, hidden_dim)
    assert jnp.allclose(out32, out_ref, atol=1e-3, rtol=1e-3), "f32 output mismatch"
    assert jnp.allclose(h32, h_ref, atol=1e-3, rtol=1e-3), "f32 hidden mismatch"

    # bf16 MXU-input path (v6e/v7x throughput; gate math / h stay f32)
    packed_bf16 = pack_params(params, hidden_dim, output_dim, jnp.bfloat16)
    out16, h16 = fwd(rgb, aud, h0, packed_bf16, output_dim=output_dim)
    out16 = jax.block_until_ready(out16)
    h16 = jax.block_until_ready(h16)
    assert jnp.allclose(out16, out_ref, atol=1e-1, rtol=1e-1), "bf16 output mismatch"
    assert jnp.allclose(h16, h_ref, atol=1e-1, rtol=1e-1), "bf16 hidden mismatch"

    print("KERNEL_OK")
</pallas_src>

<mosaic_0001>
module attributes {stable_mosaic.version = 11 : i64} {
  func.func @kernel(%arg0: memref<64x48xf32, #tpu.memory_space<vmem>>, %arg1: memref<64x40xf32, #tpu.memory_space<vmem>>, %arg2: memref<2x8x128xf32, #tpu.memory_space<vmem>>, %arg3: memref<48x32xf32, #tpu.memory_space<vmem>>, %arg4: memref<1x32xf32, #tpu.memory_space<vmem>>, %arg5: memref<40x32xf32, #tpu.memory_space<vmem>>, %arg6: memref<1x32xf32, #tpu.memory_space<vmem>>, %arg7: memref<64x384xf32, #tpu.memory_space<vmem>>, %arg8: memref<128x384xf32, #tpu.memory_space<vmem>>, %arg9: memref<1x384xf32, #tpu.memory_space<vmem>>, %arg10: memref<1x128xf32, #tpu.memory_space<vmem>>, %arg11: memref<128x384xf32, #tpu.memory_space<vmem>>, %arg12: memref<128x384xf32, #tpu.memory_space<vmem>>, %arg13: memref<1x384xf32, #tpu.memory_space<vmem>>, %arg14: memref<1x128xf32, #tpu.memory_space<vmem>>, %arg15: memref<128x128xf32, #tpu.memory_space<vmem>>, %arg16: memref<1x128xf32, #tpu.memory_space<vmem>>, %arg17: memref<8x128xf32, #tpu.memory_space<vmem>>, %arg18: memref<2x8x128xf32, #tpu.memory_space<vmem>>) attributes {dimension_semantics = [], scalar_prefetch = 0 : i64, scratch_operands = 0 : i64, tpu.core_type = #tpu.core_type<tc>} {
    %c0 = arith.constant 0 : index
    %c0_0 = arith.constant 0 : index
    %0 = vector.load %arg0[%c0, %c0_0] : memref<64x48xf32, #tpu.memory_space<vmem>>, vector<64x48xf32>
    %c0_1 = arith.constant 0 : index
    %c0_2 = arith.constant 0 : index
    %1 = vector.load %arg3[%c0_1, %c0_2] : memref<48x32xf32, #tpu.memory_space<vmem>>, vector<48x32xf32>
    %cst = arith.constant dense<0.000000e+00> : vector<64x32xf32>
    %2 = tpu.matmul %0, %1, %cst {dimension_numbers = #tpu.dot_dimension_numbers<[1], [0], [0], [1], [0, 0, 1, 1], [], []>} : vector<64x48xf32>, vector<48x32xf32>, vector<64x32xf32> -> vector<64x32xf32>
    %c0_3 = arith.constant 0 : index
    %c0_4 = arith.constant 0 : index
    %3 = vector.load %arg4[%c0_3, %c0_4] : memref<1x32xf32, #tpu.memory_space<vmem>>, vector<1x32xf32>
    %4 = vector.broadcast %3 : vector<1x32xf32> to vector<64x32xf32>
    %5 = arith.addf %2, %4 : vector<64x32xf32>
    %cst_5 = arith.constant 0.000000e+00 : f32
    %6 = vector.broadcast %cst_5 : f32 to vector<64x32xf32>
    %7 = arith.maximumf %5, %6 : vector<64x32xf32>
    %c0_6 = arith.constant 0 : index
    %c0_7 = arith.constant 0 : index
    %8 = vector.load %arg1[%c0_6, %c0_7] : memref<64x40xf32, #tpu.memory_space<vmem>>, vector<64x40xf32>
    %c0_8 = arith.constant 0 : index
    %c0_9 = arith.constant 0 : index
    %9 = vector.load %arg5[%c0_8, %c0_9] : memref<40x32xf32, #tpu.memory_space<vmem>>, vector<40x32xf32>
    %cst_10 = arith.constant dense<0.000000e+00> : vector<64x32xf32>
    %10 = tpu.matmul %8, %9, %cst_10 {dimension_numbers = #tpu.dot_dimension_numbers<[1], [0], [0], [1], [0, 0, 1, 1], [], []>} : vector<64x40xf32>, vector<40x32xf32>, vector<64x32xf32> -> vector<64x32xf32>
    %c0_11 = arith.constant 0 : index
    %c0_12 = arith.constant 0 : index
    %11 = vector.load %arg6[%c0_11, %c0_12] : memref<1x32xf32, #tpu.memory_space<vmem>>, vector<1x32xf32>
    %12 = vector.broadcast %11 : vector<1x32xf32> to vector<64x32xf32>
    %13 = arith.addf %10, %12 : vector<64x32xf32>
    %cst_13 = arith.constant 0.000000e+00 : f32
    %14 = vector.broadcast %cst_13 : f32 to vector<64x32xf32>
    %15 = arith.maximumf %13, %14 : vector<64x32xf32>
    %c0_14 = arith.constant 0 : index
    %c0_15 = arith.constant 0 : index
    %16 = vector.load %arg7[%c0_14, %c0_15] : memref<64x384xf32, #tpu.memory_space<vmem>>, vector<64x384xf32>
    %17 = vector.extract_strided_slice %16 {offsets = [0, 0], sizes = [32, 384], strides = [1, 1]} : vector<64x384xf32> to vector<32x384xf32>
    %cst_16 = arith.constant dense<0.000000e+00> : vector<64x384xf32>
    %18 = tpu.matmul %7, %17, %cst_16 {dimension_numbers = #tpu.dot_dimension_numbers<[1], [0], [0], [1], [0, 0, 1, 1], [], []>} : vector<64x32xf32>, vector<32x384xf32>, vector<64x384xf32> -> vector<64x384xf32>
    %19 = vector.extract_strided_slice %16 {offsets = [32, 0], sizes = [32, 384], strides = [1, 1]} : vector<64x384xf32> to vector<32x384xf32>
    %cst_17 = arith.constant dense<0.000000e+00> : vector<64x384xf32>
    %20 = tpu.matmul %15, %19, %cst_17 {dimension_numbers = #tpu.dot_dimension_numbers<[1], [0], [0], [1], [0, 0, 1, 1], [], []>} : vector<64x32xf32>, vector<32x384xf32>, vector<64x384xf32> -> vector<64x384xf32>
    %21 = arith.addf %18, %20 : vector<64x384xf32>
    %c0_18 = arith.constant 0 : index
    %c0_19 = arith.constant 0 : index
    %22 = vector.load %arg9[%c0_18, %c0_19] : memref<1x384xf32, #tpu.memory_space<vmem>>, vector<1x384xf32>
    %23 = vector.broadcast %22 : vector<1x384xf32> to vector<64x384xf32>
    %24 = arith.addf %21, %23 : vector<64x384xf32>
    %c0_20 = arith.constant 0 : index
    %c0_21 = arith.constant 0 : index
    %25 = vector.load %arg8[%c0_20, %c0_21] : memref<128x384xf32, #tpu.memory_space<vmem>>, vector<128x384xf32>
    %c0_22 = arith.constant 0 : index
    %c0_23 = arith.constant 0 : index
    %26 = vector.load %arg10[%c0_22, %c0_23] : memref<1x128xf32, #tpu.memory_space<vmem>>, vector<1x128xf32>
    %c0_24 = arith.constant 0 : index
    %c0_25 = arith.constant 0 : index
    %c0_26 = arith.constant 0 : index
    %27 = vector.load %arg2[%c0_24, %c0_25, %c0_26] : memref<2x8x128xf32, #tpu.memory_space<vmem>>, vector<1x8x128xf32>
    %28 = vector.shape_cast %27 : vector<1x8x128xf32> to vector<8x128xf32>
    %29 = vector.extract_strided_slice %24 {offsets = [0, 0], sizes = [8, 384], strides = [1, 1]} : vector<64x384xf32> to vector<8x384xf32>
    %cst_27 = arith.constant dense<0.000000e+00> : vector<8x384xf32>
    %30 = tpu.matmul %28, %25, %cst_27 {dimension_numbers = #tpu.dot_dimension_numbers<[1], [0], [0], [1], [0, 0, 1, 1], [], []>} : vector<8x128xf32>, vector<128x384xf32>, vector<8x384xf32> -> vector<8x384xf32>
    %31 = vector.extract_strided_slice %29 {offsets = [0, 0], sizes = [8, 256], strides = [1, 1]} : vector<8x384xf32> to vector<8x256xf32>
    %32 = vector.extract_strided_slice %30 {offsets = [0, 0], sizes = [8, 256], strides = [1, 1]} : vector<8x384xf32> to vector<8x256xf32>
    %33 = arith.addf %31, %32 : vector<8x256xf32>
    %cst_28 = arith.constant 5.000000e-01 : f32
    %34 = vector.broadcast %cst_28 : f32 to vector<8x256xf32>
    %35 = arith.mulf %34, %33 : vector<8x256xf32>
    %36 = math.tanh %35 : vector<8x256xf32>
    %cst_29 = arith.constant 5.000000e-01 : f32
    %37 = vector.broadcast %cst_29 : f32 to vector<8x256xf32>
    %38 = arith.mulf %37, %36 : vector<8x256xf32>
    %cst_30 = arith.constant 5.000000e-01 : f32
    %39 = vector.broadcast %cst_30 : f32 to vector<8x256xf32>
    %40 = arith.addf %38, %39 : vector<8x256xf32>
    %41 = vector.extract_strided_slice %40 {offsets = [0, 0], sizes = [8, 128], strides = [1, 1]} : vector<8x256xf32> to vector<8x128xf32>
    %42 = vector.extract_strided_slice %40 {offsets = [0, 128], sizes = [8, 128], strides = [1, 1]} : vector<8x256xf32> to vector<8x128xf32>
    %43 = vector.extract_strided_slice %29 {offsets = [0, 256], sizes = [8, 128], strides = [1, 1]} : vector<8x384xf32> to vector<8x128xf32>
    %44 = vector.extract_strided_slice %30 {offsets = [0, 256], sizes = [8, 128], strides = [1, 1]} : vector<8x384xf32> to vector<8x128xf32>
    %45 = vector.broadcast %26 : vector<1x128xf32> to vector<8x128xf32>
    %46 = arith.addf %44, %45 : vector<8x128xf32>
    %47 = arith.mulf %41, %46 : vector<8x128xf32>
    %48 = arith.addf %43, %47 : vector<8x128xf32>
    %49 = math.tanh %48 : vector<8x128xf32>
    %cst_31 = arith.constant 1.000000e+00 : f32
    %50 = vector.broadcast %cst_31 : f32 to vector<8x128xf32>
    %51 = arith.subf %50, %42 : vector<8x128xf32>
    %52 = arith.mulf %51, %49 : vector<8x128xf32>
    %53 = arith.mulf %42, %28 : vector<8x128xf32>
    %54 = arith.addf %52, %53 : vector<8x128xf32>
    %55 = vector.extract_strided_slice %24 {offsets = [8, 0], sizes = [8, 384], strides = [1, 1]} : vector<64x384xf32> to vector<8x384xf32>
    %cst_32 = arith.constant dense<0.000000e+00> : vector<8x384xf32>
    %56 = tpu.matmul %54, %25, %cst_32 {dimension_numbers = #tpu.dot_dimension_numbers<[1], [0], [0], [1], [0, 0, 1, 1], [], []>} : vector<8x128xf32>, vector<128x384xf32>, vector<8x384xf32> -> vector<8x384xf32>
    %57 = vector.extract_strided_slice %55 {offsets = [0, 0], sizes = [8, 256], strides = [1, 1]} : vector<8x384xf32> to vector<8x256xf32>
    %58 = vector.extract_strided_slice %56 {offsets = [0, 0], sizes = [8, 256], strides = [1, 1]} : vector<8x384xf32> to vector<8x256xf32>
    %59 = arith.addf %57, %58 : vector<8x256xf32>
    %cst_33 = arith.constant 5.000000e-01 : f32
    %60 = vector.broadcast %cst_33 : f32 to vector<8x256xf32>
    %61 = arith.mulf %60, %59 : vector<8x256xf32>
    %62 = math.tanh %61 : vector<8x256xf32>
    %cst_34 = arith.constant 5.000000e-01 : f32
    %63 = vector.broadcast %cst_34 : f32 to vector<8x256xf32>
    %64 = arith.mulf %63, %62 : vector<8x256xf32>
    %cst_35 = arith.constant 5.000000e-01 : f32
    %65 = vector.broadcast %cst_35 : f32 to vector<8x256xf32>
    %66 = arith.addf %64, %65 : vector<8x256xf32>
    %67 = vector.extract_strided_slice %66 {offsets = [0, 0], sizes = [8, 128], strides = [1, 1]} : vector<8x256xf32> to vector<8x128xf32>
    %68 = vector.extract_strided_slice %66 {offsets = [0, 128], sizes = [8, 128], strides = [1, 1]} : vector<8x256xf32> to vector<8x128xf32>
    %69 = vector.extract_strided_slice %55 {offsets = [0, 256], sizes = [8, 128], strides = [1, 1]} : vector<8x384xf32> to vector<8x128xf32>
    %70 = vector.extract_strided_slice %56 {offsets = [0, 256], sizes = [8, 128], strides = [1, 1]} : vector<8x384xf32> to vector<8x128xf32>
    %71 = vector.broadcast %26 : vector<1x128xf32> to vector<8x128xf32>
    %72 = arith.addf %70, %71 : vector<8x128xf32>
    %73 = arith.mulf %67, %72 : vector<8x128xf32>
    %74 = arith.addf %69, %73 : vector<8x128xf32>
    %75 = math.tanh %74 : vector<8x128xf32>
    %cst_36 = arith.constant 1.000000e+00 : f32
    %76 = vector.broadcast %cst_36 : f32 to vector<8x128xf32>
    %77 = arith.subf %76, %68 : vector<8x128xf32>
    %78 = arith.mulf %77, %75 : vector<8x128xf32>
    %79 = arith.mulf %68, %54 : vector<8x128xf32>
    %80 = arith.addf %78, %79 : vector<8x128xf32>
    %81 = vector.extract_strided_slice %24 {offsets = [16, 0], sizes = [8, 384], strides = [1, 1]} : vector<64x384xf32> to vector<8x384xf32>
    %cst_37 = arith.constant dense<0.000000e+00> : vector<8x384xf32>
    %82 = tpu.matmul %80, %25, %cst_37 {dimension_numbers = #tpu.dot_dimension_numbers<[1], [0], [0], [1], [0, 0, 1, 1], [], []>} : vector<8x128xf32>, vector<128x384xf32>, vector<8x384xf32> -> vector<8x384xf32>
    %83 = vector.extract_strided_slice %81 {offsets = [0, 0], sizes = [8, 256], strides = [1, 1]} : vector<8x384xf32> to vector<8x256xf32>
    %84 = vector.extract_strided_slice %82 {offsets = [0, 0], sizes = [8, 256], strides = [1, 1]} : vector<8x384xf32> to vector<8x256xf32>
    %85 = arith.addf %83, %84 : vector<8x256xf32>
    %cst_38 = arith.constant 5.000000e-01 : f32
    %86 = vector.broadcast %cst_38 : f32 to vector<8x256xf32>
    %87 = arith.mulf %86, %85 : vector<8x256xf32>
    %88 = math.tanh %87 : vector<8x256xf32>
    %cst_39 = arith.constant 5.000000e-01 : f32
    %89 = vector.broadcast %cst_39 : f32 to vector<8x256xf32>
    %90 = arith.mulf %89, %88 : vector<8x256xf32>
    %cst_40 = arith.constant 5.000000e-01 : f32
    %91 = vector.broadcast %cst_40 : f32 to vector<8x256xf32>
    %92 = arith.addf %90, %91 : vector<8x256xf32>
    %93 = vector.extract_strided_slice %92 {offsets = [0, 0], sizes = [8, 128], strides = [1, 1]} : vector<8x256xf32> to vector<8x128xf32>
    %94 = vector.extract_strided_slice %92 {offsets = [0, 128], sizes = [8, 128], strides = [1, 1]} : vector<8x256xf32> to vector<8x128xf32>
    %95 = vector.extract_strided_slice %81 {offsets = [0, 256], sizes = [8, 128], strides = [1, 1]} : vector<8x384xf32> to vector<8x128xf32>
    %96 = vector.extract_strided_slice %82 {offsets = [0, 256], sizes = [8, 128], strides = [1, 1]} : vector<8x384xf32> to vector<8x128xf32>
    %97 = vector.broadcast %26 : vector<1x128xf32> to vector<8x128xf32>
    %98 = arith.addf %96, %97 : vector<8x128xf32>
    %99 = arith.mulf %93, %98 : vector<8x128xf32>
    %100 = arith.addf %95, %99 : vector<8x128xf32>
    %101 = math.tanh %100 : vector<8x128xf32>
    %cst_41 = arith.constant 1.000000e+00 : f32
    %102 = vector.broadcast %cst_41 : f32 to vector<8x128xf32>
    %103 = arith.subf %102, %94 : vector<8x128xf32>
    %104 = arith.mulf %103, %101 : vector<8x128xf32>
    %105 = arith.mulf %94, %80 : vector<8x128xf32>
    %106 = arith.addf %104, %105 : vector<8x128xf32>
    %107 = vector.extract_strided_slice %24 {offsets = [24, 0], sizes = [8, 384], strides = [1, 1]} : vector<64x384xf32> to vector<8x384xf32>
    %cst_42 = arith.constant dense<0.000000e+00> : vector<8x384xf32>
    %108 = tpu.matmul %106, %25, %cst_42 {dimension_numbers = #tpu.dot_dimension_numbers<[1], [0], [0], [1], [0, 0, 1, 1], [], []>} : vector<8x128xf32>, vector<128x384xf32>, vector<8x384xf32> -> vector<8x384xf32>
    %109 = vector.extract_strided_slice %107 {offsets = [0, 0], sizes = [8, 256], strides = [1, 1]} : vector<8x384xf32> to vector<8x256xf32>
    %110 = vector.extract_strided_slice %108 {offsets = [0, 0], sizes = [8, 256], strides = [1, 1]} : vector<8x384xf32> to vector<8x256xf32>
    %111 = arith.addf %109, %110 : vector<8x256xf32>
    %cst_43 = arith.constant 5.000000e-01 : f32
    %112 = vector.broadcast %cst_43 : f32 to vector<8x256xf32>
    %113 = arith.mulf %112, %111 : vector<8x256xf32>
    %114 = math.tanh %113 : vector<8x256xf32>
    %cst_44 = arith.constant 5.000000e-01 : f32
    %115 = vector.broadcast %cst_44 : f32 to vector<8x256xf32>
    %116 = arith.mulf %115, %114 : vector<8x256xf32>
    %cst_45 = arith.constant 5.000000e-01 : f32
    %117 = vector.broadcast %cst_45 : f32 to vector<8x256xf32>
    %118 = arith.addf %116, %117 : vector<8x256xf32>
    %119 = vector.extract_strided_slice %118 {offsets = [0, 0], sizes = [8, 128], strides = [1, 1]} : vector<8x256xf32> to vector<8x128xf32>
    %120 = vector.extract_strided_slice %118 {offsets = [0, 128], sizes = [8, 128], strides = [1, 1]} : vector<8x256xf32> to vector<8x128xf32>
    %121 = vector.extract_strided_slice %107 {offsets = [0, 256], sizes = [8, 128], strides = [1, 1]} : vector<8x384xf32> to vector<8x128xf32>
    %122 = vector.extract_strided_slice %108 {offsets = [0, 256], sizes = [8, 128], strides = [1, 1]} : vector<8x384xf32> to vector<8x128xf32>
    %123 = vector.broadcast %26 : vector<1x128xf32> to vector<8x128xf32>
    %124 = arith.addf %122, %123 : vector<8x128xf32>
    %125 = arith.mulf %119, %124 : vector<8x128xf32>
    %126 = arith.addf %121, %125 : vector<8x128xf32>
    %127 = math.tanh %126 : vector<8x128xf32>
    %cst_46 = arith.constant 1.000000e+00 : f32
    %128 = vector.broadcast %cst_46 : f32 to vector<8x128xf32>
    %129 = arith.subf %128, %120 : vector<8x128xf32>
    %130 = arith.mulf %129, %127 : vector<8x128xf32>
    %131 = arith.mulf %120, %106 : vector<8x128xf32>
    %132 = arith.addf %130, %131 : vector<8x128xf32>
    %133 = vector.extract_strided_slice %24 {offsets = [32, 0], sizes = [8, 384], strides = [1, 1]} : vector<64x384xf32> to vector<8x384xf32>
    %cst_47 = arith.constant dense<0.000000e+00> : vector<8x384xf32>
    %134 = tpu.matmul %132, %25, %cst_47 {dimension_numbers = #tpu.dot_dimension_numbers<[1], [0], [0], [1], [0, 0, 1, 1], [], []>} : vector<8x128xf32>, vector<128x384xf32>, vector<8x384xf32> -> vector<8x384xf32>
    %135 = vector.extract_strided_slice %133 {offsets = [0, 0], sizes = [8, 256], strides = [1, 1]} : vector<8x384xf32> to vector<8x256xf32>
    %136 = vector.extract_strided_slice %134 {offsets = [0, 0], sizes = [8, 256], strides = [1, 1]} : vector<8x384xf32> to vector<8x256xf32>
    %137 = arith.addf %135, %136 : vector<8x256xf32>
    %cst_48 = arith.constant 5.000000e-01 : f32
    %138 = vector.broadcast %cst_48 : f32 to vector<8x256xf32>
    %139 = arith.mulf %138, %137 : vector<8x256xf32>
    %140 = math.tanh %139 : vector<8x256xf32>
    %cst_49 = arith.constant 5.000000e-01 : f32
    %141 = vector.broadcast %cst_49 : f32 to vector<8x256xf32>
    %142 = arith.mulf %141, %140 : vector<8x256xf32>
    %cst_50 = arith.constant 5.000000e-01 : f32
    %143 = vector.broadcast %cst_50 : f32 to vector<8x256xf32>
    %144 = arith.addf %142, %143 : vector<8x256xf32>
    %145 = vector.extract_strided_slice %144 {offsets = [0, 0], sizes = [8, 128], strides = [1, 1]} : vector<8x256xf32> to vector<8x128xf32>
    %146 = vector.extract_strided_slice %144 {offsets = [0, 128], sizes = [8, 128], strides = [1, 1]} : vector<8x256xf32> to vector<8x128xf32>
    %147 = vector.extract_strided_slice %133 {offsets = [0, 256], sizes = [8, 128], strides = [1, 1]} : vector<8x384xf32> to vector<8x128xf32>
    %148 = vector.extract_strided_slice %134 {offsets = [0, 256], sizes = [8, 128], strides = [1, 1]} : vector<8x384xf32> to vector<8x128xf32>
    %149 = vector.broadcast %26 : vector<1x128xf32> to vector<8x128xf32>
    %150 = arith.addf %148, %149 : vector<8x128xf32>
    %151 = arith.mulf %145, %150 : vector<8x128xf32>
    %152 = arith.addf %147, %151 : vector<8x128xf32>
    %153 = math.tanh %152 : vector<8x128xf32>
    %cst_51 = arith.constant 1.000000e+00 : f32
    %154 = vector.broadcast %cst_51 : f32 to vector<8x128xf32>
    %155 = arith.subf %154, %146 : vector<8x128xf32>
    %156 = arith.mulf %155, %153 : vector<8x128xf32>
    %157 = arith.mulf %146, %132 : vector<8x128xf32>
    %158 = arith.addf %156, %157 : vector<8x128xf32>
    %159 = vector.extract_strided_slice %24 {offsets = [40, 0], sizes = [8, 384], strides = [1, 1]} : vector<64x384xf32> to vector<8x384xf32>
    %cst_52 = arith.constant dense<0.000000e+00> : vector<8x384xf32>
    %160 = tpu.matmul %158, %25, %cst_52 {dimension_numbers = #tpu.dot_dimension_numbers<[1], [0], [0], [1], [0, 0, 1, 1], [], []>} : vector<8x128xf32>, vector<128x384xf32>, vector<8x384xf32> -> vector<8x384xf32>
    %161 = vector.extract_strided_slice %159 {offsets = [0, 0], sizes = [8, 256], strides = [1, 1]} : vector<8x384xf32> to vector<8x256xf32>
    %162 = vector.extract_strided_slice %160 {offsets = [0, 0], sizes = [8, 256], strides = [1, 1]} : vector<8x384xf32> to vector<8x256xf32>
    %163 = arith.addf %161, %162 : vector<8x256xf32>
    %cst_53 = arith.constant 5.000000e-01 : f32
    %164 = vector.broadcast %cst_53 : f32 to vector<8x256xf32>
    %165 = arith.mulf %164, %163 : vector<8x256xf32>
    %166 = math.tanh %165 : vector<8x256xf32>
    %cst_54 = arith.constant 5.000000e-01 : f32
    %167 = vector.broadcast %cst_54 : f32 to vector<8x256xf32>
    %168 = arith.mulf %167, %166 : vector<8x256xf32>
    %cst_55 = arith.constant 5.000000e-01 : f32
    %169 = vector.broadcast %cst_55 : f32 to vector<8x256xf32>
    %170 = arith.addf %168, %169 : vector<8x256xf32>
    %171 = vector.extract_strided_slice %170 {offsets = [0, 0], sizes = [8, 128], strides = [1, 1]} : vector<8x256xf32> to vector<8x128xf32>
    %172 = vector.extract_strided_slice %170 {offsets = [0, 128], sizes = [8, 128], strides = [1, 1]} : vector<8x256xf32> to vector<8x128xf32>
    %173 = vector.extract_strided_slice %159 {offsets = [0, 256], sizes = [8, 128], strides = [1, 1]} : vector<8x384xf32> to vector<8x128xf32>
    %174 = vector.extract_strided_slice %160 {offsets = [0, 256], sizes = [8, 128], strides = [1, 1]} : vector<8x384xf32> to vector<8x128xf32>
    %175 = vector.broadcast %26 : vector<1x128xf32> to vector<8x128xf32>
    %176 = arith.addf %174, %175 : vector<8x128xf32>
    %177 = arith.mulf %171, %176 : vector<8x128xf32>
    %178 = arith.addf %173, %177 : vector<8x128xf32>
    %179 = math.tanh %178 : vector<8x128xf32>
    %cst_56 = arith.constant 1.000000e+00 : f32
    %180 = vector.broadcast %cst_56 : f32 to vector<8x128xf32>
    %181 = arith.subf %180, %172 : vector<8x128xf32>
    %182 = arith.mulf %181, %179 : vector<8x128xf32>
    %183 = arith.mulf %172, %158 : vector<8x128xf32>
    %184 = arith.addf %182, %183 : vector<8x128xf32>
    %185 = vector.extract_strided_slice %24 {offsets = [48, 0], sizes = [8, 384], strides = [1, 1]} : vector<64x384xf32> to vector<8x384xf32>
    %cst_57 = arith.constant dense<0.000000e+00> : vector<8x384xf32>
    %186 = tpu.matmul %184, %25, %cst_57 {dimension_numbers = #tpu.dot_dimension_numbers<[1], [0], [0], [1], [0, 0, 1, 1], [], []>} : vector<8x128xf32>, vector<128x384xf32>, vector<8x384xf32> -> vector<8x384xf32>
    %187 = vector.extract_strided_slice %185 {offsets = [0, 0], sizes = [8, 256], strides = [1, 1]} : vector<8x384xf32> to vector<8x256xf32>
    %188 = vector.extract_strided_slice %186 {offsets = [0, 0], sizes = [8, 256], strides = [1, 1]} : vector<8x384xf32> to vector<8x256xf32>
    %189 = arith.addf %187, %188 : vector<8x256xf32>
    %cst_58 = arith.constant 5.000000e-01 : f32
    %190 = vector.broadcast %cst_58 : f32 to vector<8x256xf32>
    %191 = arith.mulf %190, %189 : vector<8x256xf32>
    %192 = math.tanh %191 : vector<8x256xf32>
    %cst_59 = arith.constant 5.000000e-01 : f32
    %193 = vector.broadcast %cst_59 : f32 to vector<8x256xf32>
    %194 = arith.mulf %193, %192 : vector<8x256xf32>
    %cst_60 = arith.constant 5.000000e-01 : f32
    %195 = vector.broadcast %cst_60 : f32 to vector<8x256xf32>
    %196 = arith.addf %194, %195 : vector<8x256xf32>
    %197 = vector.extract_strided_slice %196 {offsets = [0, 0], sizes = [8, 128], strides = [1, 1]} : vector<8x256xf32> to vector<8x128xf32>
    %198 = vector.extract_strided_slice %196 {offsets = [0, 128], sizes = [8, 128], strides = [1, 1]} : vector<8x256xf32> to vector<8x128xf32>
    %199 = vector.extract_strided_slice %185 {offsets = [0, 256], sizes = [8, 128], strides = [1, 1]} : vector<8x384xf32> to vector<8x128xf32>
    %200 = vector.extract_strided_slice %186 {offsets = [0, 256], sizes = [8, 128], strides = [1, 1]} : vector<8x384xf32> to vector<8x128xf32>
    %201 = vector.broadcast %26 : vector<1x128xf32> to vector<8x128xf32>
    %202 = arith.addf %200, %201 : vector<8x128xf32>
    %203 = arith.mulf %197, %202 : vector<8x128xf32>
    %204 = arith.addf %199, %203 : vector<8x128xf32>
    %205 = math.tanh %204 : vector<8x128xf32>
    %cst_61 = arith.constant 1.000000e+00 : f32
    %206 = vector.broadcast %cst_61 : f32 to vector<8x128xf32>
    %207 = arith.subf %206, %198 : vector<8x128xf32>
    %208 = arith.mulf %207, %205 : vector<8x128xf32>
    %209 = arith.mulf %198, %184 : vector<8x128xf32>
    %210 = arith.addf %208, %209 : vector<8x128xf32>
    %211 = vector.extract_strided_slice %24 {offsets = [56, 0], sizes = [8, 384], strides = [1, 1]} : vector<64x384xf32> to vector<8x384xf32>
    %cst_62 = arith.constant dense<0.000000e+00> : vector<8x384xf32>
    %212 = tpu.matmul %210, %25, %cst_62 {dimension_numbers = #tpu.dot_dimension_numbers<[1], [0], [0], [1], [0, 0, 1, 1], [], []>} : vector<8x128xf32>, vector<128x384xf32>, vector<8x384xf32> -> vector<8x384xf32>
    %213 = vector.extract_strided_slice %211 {offsets = [0, 0], sizes = [8, 256], strides = [1, 1]} : vector<8x384xf32> to vector<8x256xf32>
    %214 = vector.extract_strided_slice %212 {offsets = [0, 0], sizes = [8, 256], strides = [1, 1]} : vector<8x384xf32> to vector<8x256xf32>
    %215 = arith.addf %213, %214 : vector<8x256xf32>
    %cst_63 = arith.constant 5.000000e-01 : f32
    %216 = vector.broadcast %cst_63 : f32 to vector<8x256xf32>
    %217 = arith.mulf %216, %215 : vector<8x256xf32>
    %218 = math.tanh %217 : vector<8x256xf32>
    %cst_64 = arith.constant 5.000000e-01 : f32
    %219 = vector.broadcast %cst_64 : f32 to vector<8x256xf32>
    %220 = arith.mulf %219, %218 : vector<8x256xf32>
    %cst_65 = arith.constant 5.000000e-01 : f32
    %221 = vector.broadcast %cst_65 : f32 to vector<8x256xf32>
    %222 = arith.addf %220, %221 : vector<8x256xf32>
    %223 = vector.extract_strided_slice %222 {offsets = [0, 0], sizes = [8, 128], strides = [1, 1]} : vector<8x256xf32> to vector<8x128xf32>
    %224 = vector.extract_strided_slice %222 {offsets = [0, 128], sizes = [8, 128], strides = [1, 1]} : vector<8x256xf32> to vector<8x128xf32>
    %225 = vector.extract_strided_slice %211 {offsets = [0, 256], sizes = [8, 128], strides = [1, 1]} : vector<8x384xf32> to vector<8x128xf32>
    %226 = vector.extract_strided_slice %212 {offsets = [0, 256], sizes = [8, 128], strides = [1, 1]} : vector<8x384xf32> to vector<8x128xf32>
    %227 = vector.broadcast %26 : vector<1x128xf32> to vector<8x128xf32>
    %228 = arith.addf %226, %227 : vector<8x128xf32>
    %229 = arith.mulf %223, %228 : vector<8x128xf32>
    %230 = arith.addf %225, %229 : vector<8x128xf32>
    %231 = math.tanh %230 : vector<8x128xf32>
    %cst_66 = arith.constant 1.000000e+00 : f32
    %232 = vector.broadcast %cst_66 : f32 to vector<8x128xf32>
    %233 = arith.subf %232, %224 : vector<8x128xf32>
    %234 = arith.mulf %233, %231 : vector<8x128xf32>
    %235 = arith.mulf %224, %210 : vector<8x128xf32>
    %236 = arith.addf %234, %235 : vector<8x128xf32>
    %c0_67 = arith.constant 0 : index
    %c0_68 = arith.constant 0 : index
    %c0_69 = arith.constant 0 : index
    %237 = vector.load %arg18[%c0_67, %c0_68, %c0_69] : memref<2x8x128xf32, #tpu.memory_space<vmem>>, vector<1x8x128xf32>
    %238 = vector.shape_cast %237 : vector<1x8x128xf32> to vector<8x128xf32>
    %239 = vector.shape_cast %236 : vector<8x128xf32> to vector<1x8x128xf32>
    tpu.vector_store %arg18[%c0_67, %c0_68, %c0_69], %239 {strides = array<i32>} : memref<2x8x128xf32, #tpu.memory_space<vmem>>, vector<1x8x128xf32>,
    %240 = tpu.concatenate %54, %80, %106, %132, %158, %184, %210, %236 in 0 : vector<8x128xf32>, vector<8x128xf32>, vector<8x128xf32>, vector<8x128xf32>, vector<8x128xf32>, vector<8x128xf32>, vector<8x128xf32>, vector<8x128xf32> -> vector<64x128xf32>
    %c0_70 = arith.constant 0 : index
    %c0_71 = arith.constant 0 : index
    %241 = vector.load %arg11[%c0_70, %c0_71] : memref<128x384xf32, #tpu.memory_space<vmem>>, vector<128x384xf32>
    %cst_72 = arith.constant dense<0.000000e+00> : vector<64x384xf32>
    %242 = tpu.matmul %240, %241, %cst_72 {dimension_numbers = #tpu.dot_dimension_numbers<[1], [0], [0], [1], [0, 0, 1, 1], [], []>} : vector<64x128xf32>, vector<128x384xf32>, vector<64x384xf32> -> vector<64x384xf32>
    %c0_73 = arith.constant 0 : index
    %c0_74 = arith.constant 0 : index
    %243 = vector.load %arg13[%c0_73, %c0_74] : memref<1x384xf32, #tpu.memory_space<vmem>>, vector<1x384xf32>
    %244 = vector.broadcast %243 : vector<1x384xf32> to vector<64x384xf32>
    %245 = arith.addf %242, %244 : vector<64x384xf32>
    %c0_75 = arith.constant 0 : index
    %c0_76 = arith.constant 0 : index
    %246 = vector.load %arg12[%c0_75, %c0_76] : memref<128x384xf32, #tpu.memory_space<vmem>>, vector<128x384xf32>
    %c0_77 = arith.constant 0 : index
    %c0_78 = arith.constant 0 : index
    %247 = vector.load %arg14[%c0_77, %c0_78] : memref<1x128xf32, #tpu.memory_space<vmem>>, vector<1x128xf32>
    %c1 = arith.constant 1 : index
    %c0_79 = arith.constant 0 : index
    %c0_80 = arith.constant 0 : index
    %248 = vector.load %arg2[%c1, %c0_79, %c0_80] : memref<2x8x128xf32, #tpu.memory_space<vmem>>, vector<1x8x128xf32>
    %249 = vector.shape_cast %248 : vector<1x8x128xf32> to vector<8x128xf32>
    %250 = vector.extract_strided_slice %245 {offsets = [0, 0], sizes = [8, 384], strides = [1, 1]} : vector<64x384xf32> to vector<8x384xf32>
    %cst_81 = arith.constant dense<0.000000e+00> : vector<8x384xf32>
    %251 = tpu.matmul %249, %246, %cst_81 {dimension_numbers = #tpu.dot_dimension_numbers<[1], [0], [0], [1], [0, 0, 1, 1], [], []>} : vector<8x128xf32>, vector<128x384xf32>, vector<8x384xf32> -> vector<8x384xf32>
    %252 = vector.extract_strided_slice %250 {offsets = [0, 0], sizes = [8, 256], strides = [1, 1]} : vector<8x384xf32> to vector<8x256xf32>
    %253 = vector.extract_strided_slice %251 {offsets = [0, 0], sizes = [8, 256], strides = [1, 1]} : vector<8x384xf32> to vector<8x256xf32>
    %254 = arith.addf %252, %253 : vector<8x256xf32>
    %cst_82 = arith.constant 5.000000e-01 : f32
    %255 = vector.broadcast %cst_82 : f32 to vector<8x256xf32>
    %256 = arith.mulf %255, %254 : vector<8x256xf32>
    %257 = math.tanh %256 : vector<8x256xf32>
    %cst_83 = arith.constant 5.000000e-01 : f32
    %258 = vector.broadcast %cst_83 : f32 to vector<8x256xf32>
    %259 = arith.mulf %258, %257 : vector<8x256xf32>
    %cst_84 = arith.constant 5.000000e-01 : f32
    %260 = vector.broadcast %cst_84 : f32 to vector<8x256xf32>
    %261 = arith.addf %259, %260 : vector<8x256xf32>
    %262 = vector.extract_strided_slice %261 {offsets = [0, 0], sizes = [8, 128], strides = [1, 1]} : vector<8x256xf32> to vector<8x128xf32>
    %263 = vector.extract_strided_slice %261 {offsets = [0, 128], sizes = [8, 128], strides = [1, 1]} : vector<8x256xf32> to vector<8x128xf32>
    %264 = vector.extract_strided_slice %250 {offsets = [0, 256], sizes = [8, 128], strides = [1, 1]} : vector<8x384xf32> to vector<8x128xf32>
    %265 = vector.extract_strided_slice %251 {offsets = [0, 256], sizes = [8, 128], strides = [1, 1]} : vector<8x384xf32> to vector<8x128xf32>
    %266 = vector.broadcast %247 : vector<1x128xf32> to vector<8x128xf32>
    %267 = arith.addf %265, %266 : vector<8x128xf32>
    %268 = arith.mulf %262, %267 : vector<8x128xf32>
    %269 = arith.addf %264, %268 : vector<8x128xf32>
    %270 = math.tanh %269 : vector<8x128xf32>
    %cst_85 = arith.constant 1.000000e+00 : f32
    %271 = vector.broadcast %cst_85 : f32 to vector<8x128xf32>
    %272 = arith.subf %271, %263 : vector<8x128xf32>
    %273 = arith.mulf %272, %270 : vector<8x128xf32>
    %274 = arith.mulf %263, %249 : vector<8x128xf32>
    %275 = arith.addf %273, %274 : vector<8x128xf32>
    %276 = vector.extract_strided_slice %245 {offsets = [8, 0], sizes = [8, 384], strides = [1, 1]} : vector<64x384xf32> to vector<8x384xf32>
    %cst_86 = arith.constant dense<0.000000e+00> : vector<8x384xf32>
    %277 = tpu.matmul %275, %246, %cst_86 {dimension_numbers = #tpu.dot_dimension_numbers<[1], [0], [0], [1], [0, 0, 1, 1], [], []>} : vector<8x128xf32>, vector<128x384xf32>, vector<8x384xf32> -> vector<8x384xf32>
    %278 = vector.extract_strided_slice %276 {offsets = [0, 0], sizes = [8, 256], strides = [1, 1]} : vector<8x384xf32> to vector<8x256xf32>
    %279 = vector.extract_strided_slice %277 {offsets = [0, 0], sizes = [8, 256], strides = [1, 1]} : vector<8x384xf32> to vector<8x256xf32>
    %280 = arith.addf %278, %279 : vector<8x256xf32>
    %cst_87 = arith.constant 5.000000e-01 : f32
    %281 = vector.broadcast %cst_87 : f32 to vector<8x256xf32>
    %282 = arith.mulf %281, %280 : vector<8x256xf32>
    %283 = math.tanh %282 : vector<8x256xf32>
    %cst_88 = arith.constant 5.000000e-01 : f32
    %284 = vector.broadcast %cst_88 : f32 to vector<8x256xf32>
    %285 = arith.mulf %284, %283 : vector<8x256xf32>
    %cst_89 = arith.constant 5.000000e-01 : f32
    %286 = vector.broadcast %cst_89 : f32 to vector<8x256xf32>
    %287 = arith.addf %285, %286 : vector<8x256xf32>
    %288 = vector.extract_strided_slice %287 {offsets = [0, 0], sizes = [8, 128], strides = [1, 1]} : vector<8x256xf32> to vector<8x128xf32>
    %289 = vector.extract_strided_slice %287 {offsets = [0, 128], sizes = [8, 128], strides = [1, 1]} : vector<8x256xf32> to vector<8x128xf32>
    %290 = vector.extract_strided_slice %276 {offsets = [0, 256], sizes = [8, 128], strides = [1, 1]} : vector<8x384xf32> to vector<8x128xf32>
    %291 = vector.extract_strided_slice %277 {offsets = [0, 256], sizes = [8, 128], strides = [1, 1]} : vector<8x384xf32> to vector<8x128xf32>
    %292 = vector.broadcast %247 : vector<1x128xf32> to vector<8x128xf32>
    %293 = arith.addf %291, %292 : vector<8x128xf32>
    %294 = arith.mulf %288, %293 : vector<8x128xf32>
    %295 = arith.addf %290, %294 : vector<8x128xf32>
    %296 = math.tanh %295 : vector<8x128xf32>
    %cst_90 = arith.constant 1.000000e+00 : f32
    %297 = vector.broadcast %cst_90 : f32 to vector<8x128xf32>
    %298 = arith.subf %297, %289 : vector<8x128xf32>
    %299 = arith.mulf %298, %296 : vector<8x128xf32>
    %300 = arith.mulf %289, %275 : vector<8x128xf32>
    %301 = arith.addf %299, %300 : vector<8x128xf32>
    %302 = vector.extract_strided_slice %245 {offsets = [16, 0], sizes = [8, 384], strides = [1, 1]} : vector<64x384xf32> to vector<8x384xf32>
    %cst_91 = arith.constant dense<0.000000e+00> : vector<8x384xf32>
    %303 = tpu.matmul %301, %246, %cst_91 {dimension_numbers = #tpu.dot_dimension_numbers<[1], [0], [0], [1], [0, 0, 1, 1], [], []>} : vector<8x128xf32>, vector<128x384xf32>, vector<8x384xf32> -> vector<8x384xf32>
    %304 = vector.extract_strided_slice %302 {offsets = [0, 0], sizes = [8, 256], strides = [1, 1]} : vector<8x384xf32> to vector<8x256xf32>
    %305 = vector.extract_strided_slice %303 {offsets = [0, 0], sizes = [8, 256], strides = [1, 1]} : vector<8x384xf32> to vector<8x256xf32>
    %306 = arith.addf %304, %305 : vector<8x256xf32>
    %cst_92 = arith.constant 5.000000e-01 : f32
    %307 = vector.broadcast %cst_92 : f32 to vector<8x256xf32>
    %308 = arith.mulf %307, %306 : vector<8x256xf32>
    %309 = math.tanh %308 : vector<8x256xf32>
    %cst_93 = arith.constant 5.000000e-01 : f32
    %310 = vector.broadcast %cst_93 : f32 to vector<8x256xf32>
    %311 = arith.mulf %310, %309 : vector<8x256xf32>
    %cst_94 = arith.constant 5.000000e-01 : f32
    %312 = vector.broadcast %cst_94 : f32 to vector<8x256xf32>
    %313 = arith.addf %311, %312 : vector<8x256xf32>
    %314 = vector.extract_strided_slice %313 {offsets = [0, 0], sizes = [8, 128], strides = [1, 1]} : vector<8x256xf32> to vector<8x128xf32>
    %315 = vector.extract_strided_slice %313 {offsets = [0, 128], sizes = [8, 128], strides = [1, 1]} : vector<8x256xf32> to vector<8x128xf32>
    %316 = vector.extract_strided_slice %302 {offsets = [0, 256], sizes = [8, 128], strides = [1, 1]} : vector<8x384xf32> to vector<8x128xf32>
    %317 = vector.extract_strided_slice %303 {offsets = [0, 256], sizes = [8, 128], strides = [1, 1]} : vector<8x384xf32> to vector<8x128xf32>
    %318 = vector.broadcast %247 : vector<1x128xf32> to vector<8x128xf32>
    %319 = arith.addf %317, %318 : vector<8x128xf32>
    %320 = arith.mulf %314, %319 : vector<8x128xf32>
    %321 = arith.addf %316, %320 : vector<8x128xf32>
    %322 = math.tanh %321 : vector<8x128xf32>
    %cst_95 = arith.constant 1.000000e+00 : f32
    %323 = vector.broadcast %cst_95 : f32 to vector<8x128xf32>
    %324 = arith.subf %323, %315 : vector<8x128xf32>
    %325 = arith.mulf %324, %322 : vector<8x128xf32>
    %326 = arith.mulf %315, %301 : vector<8x128xf32>
    %327 = arith.addf %325, %326 : vector<8x128xf32>
    %328 = vector.extract_strided_slice %245 {offsets = [24, 0], sizes = [8, 384], strides = [1, 1]} : vector<64x384xf32> to vector<8x384xf32>
    %cst_96 = arith.constant dense<0.000000e+00> : vector<8x384xf32>
    %329 = tpu.matmul %327, %246, %cst_96 {dimension_numbers = #tpu.dot_dimension_numbers<[1], [0], [0], [1], [0, 0, 1, 1], [], []>} : vector<8x128xf32>, vector<128x384xf32>, vector<8x384xf32> -> vector<8x384xf32>
    %330 = vector.extract_strided_slice %328 {offsets = [0, 0], sizes = [8, 256], strides = [1, 1]} : vector<8x384xf32> to vector<8x256xf32>
    %331 = vector.extract_strided_slice %329 {offsets = [0, 0], sizes = [8, 256], strides = [1, 1]} : vector<8x384xf32> to vector<8x256xf32>
    %332 = arith.addf %330, %331 : vector<8x256xf32>
    %cst_97 = arith.constant 5.000000e-01 : f32
    %333 = vector.broadcast %cst_97 : f32 to vector<8x256xf32>
    %334 = arith.mulf %333, %332 : vector<8x256xf32>
    %335 = math.tanh %334 : vector<8x256xf32>
    %cst_98 = arith.constant 5.000000e-01 : f32
    %336 = vector.broadcast %cst_98 : f32 to vector<8x256xf32>
    %337 = arith.mulf %336, %335 : vector<8x256xf32>
    %cst_99 = arith.constant 5.000000e-01 : f32
    %338 = vector.broadcast %cst_99 : f32 to vector<8x256xf32>
    %339 = arith.addf %337, %338 : vector<8x256xf32>
    %340 = vector.extract_strided_slice %339 {offsets = [0, 0], sizes = [8, 128], strides = [1, 1]} : vector<8x256xf32> to vector<8x128xf32>
    %341 = vector.extract_strided_slice %339 {offsets = [0, 128], sizes = [8, 128], strides = [1, 1]} : vector<8x256xf32> to vector<8x128xf32>
    %342 = vector.extract_strided_slice %328 {offsets = [0, 256], sizes = [8, 128], strides = [1, 1]} : vector<8x384xf32> to vector<8x128xf32>
    %343 = vector.extract_strided_slice %329 {offsets = [0, 256], sizes = [8, 128], strides = [1, 1]} : vector<8x384xf32> to vector<8x128xf32>
    %344 = vector.broadcast %247 : vector<1x128xf32> to vector<8x128xf32>
    %345 = arith.addf %343, %344 : vector<8x128xf32>
    %346 = arith.mulf %340, %345 : vector<8x128xf32>
    %347 = arith.addf %342, %346 : vector<8x128xf32>
    %348 = math.tanh %347 : vector<8x128xf32>
    %cst_100 = arith.constant 1.000000e+00 : f32
    %349 = vector.broadcast %cst_100 : f32 to vector<8x128xf32>
    %350 = arith.subf %349, %341 : vector<8x128xf32>
    %351 = arith.mulf %350, %348 : vector<8x128xf32>
    %352 = arith.mulf %341, %327 : vector<8x128xf32>
    %353 = arith.addf %351, %352 : vector<8x128xf32>
    %354 = vector.extract_strided_slice %245 {offsets = [32, 0], sizes = [8, 384], strides = [1, 1]} : vector<64x384xf32> to vector<8x384xf32>
    %cst_101 = arith.constant dense<0.000000e+00> : vector<8x384xf32>
    %355 = tpu.matmul %353, %246, %cst_101 {dimension_numbers = #tpu.dot_dimension_numbers<[1], [0], [0], [1], [0, 0, 1, 1], [], []>} : vector<8x128xf32>, vector<128x384xf32>, vector<8x384xf32> -> vector<8x384xf32>
    %356 = vector.extract_strided_slice %354 {offsets = [0, 0], sizes = [8, 256], strides = [1, 1]} : vector<8x384xf32> to vector<8x256xf32>
    %357 = vector.extract_strided_slice %355 {offsets = [0, 0], sizes = [8, 256], strides = [1, 1]} : vector<8x384xf32> to vector<8x256xf32>
    %358 = arith.addf %356, %357 : vector<8x256xf32>
    %cst_102 = arith.constant 5.000000e-01 : f32
    %359 = vector.broadcast %cst_102 : f32 to vector<8x256xf32>
    %360 = arith.mulf %359, %358 : vector<8x256xf32>
    %361 = math.tanh %360 : vector<8x256xf32>
    %cst_103 = arith.constant 5.000000e-01 : f32
    %362 = vector.broadcast %cst_103 : f32 to vector<8x256xf32>
    %363 = arith.mulf %362, %361 : vector<8x256xf32>
    %cst_104 = arith.constant 5.000000e-01 : f32
    %364 = vector.broadcast %cst_104 : f32 to vector<8x256xf32>
    %365 = arith.addf %363, %364 : vector<8x256xf32>
    %366 = vector.extract_strided_slice %365 {offsets = [0, 0], sizes = [8, 128], strides = [1, 1]} : vector<8x256xf32> to vector<8x128xf32>
    %367 = vector.extract_strided_slice %365 {offsets = [0, 128], sizes = [8, 128], strides = [1, 1]} : vector<8x256xf32> to vector<8x128xf32>
    %368 = vector.extract_strided_slice %354 {offsets = [0, 256], sizes = [8, 128], strides = [1, 1]} : vector<8x384xf32> to vector<8x128xf32>
    %369 = vector.extract_strided_slice %355 {offsets = [0, 256], sizes = [8, 128], strides = [1, 1]} : vector<8x384xf32> to vector<8x128xf32>
    %370 = vector.broadcast %247 : vector<1x128xf32> to vector<8x128xf32>
    %371 = arith.addf %369, %370 : vector<8x128xf32>
    %372 = arith.mulf %366, %371 : vector<8x128xf32>
    %373 = arith.addf %368, %372 : vector<8x128xf32>
    %374 = math.tanh %373 : vector<8x128xf32>
    %cst_105 = arith.constant 1.000000e+00 : f32
    %375 = vector.broadcast %cst_105 : f32 to vector<8x128xf32>
    %376 = arith.subf %375, %367 : vector<8x128xf32>
    %377 = arith.mulf %376, %374 : vector<8x128xf32>
    %378 = arith.mulf %367, %353 : vector<8x128xf32>
    %379 = arith.addf %377, %378 : vector<8x128xf32>
    %380 = vector.extract_strided_slice %245 {offsets = [40, 0], sizes = [8, 384], strides = [1, 1]} : vector<64x384xf32> to vector<8x384xf32>
    %cst_106 = arith.constant dense<0.000000e+00> : vector<8x384xf32>
    %381 = tpu.matmul %379, %246, %cst_106 {dimension_numbers = #tpu.dot_dimension_numbers<[1], [0], [0], [1], [0, 0, 1, 1], [], []>} : vector<8x128xf32>, vector<128x384xf32>, vector<8x384xf32> -> vector<8x384xf32>
    %382 = vector.extract_strided_slice %380 {offsets = [0, 0], sizes = [8, 256], strides = [1, 1]} : vector<8x384xf32> to vector<8x256xf32>
    %383 = vector.extract_strided_slice %381 {offsets = [0, 0], sizes = [8, 256], strides = [1, 1]} : vector<8x384xf32> to vector<8x256xf32>
    %384 = arith.addf %382, %383 : vector<8x256xf32>
    %cst_107 = arith.constant 5.000000e-01 : f32
    %385 = vector.broadcast %cst_107 : f32 to vector<8x256xf32>
    %386 = arith.mulf %385, %384 : vector<8x256xf32>
    %387 = math.tanh %386 : vector<8x256xf32>
    %cst_108 = arith.constant 5.000000e-01 : f32
    %388 = vector.broadcast %cst_108 : f32 to vector<8x256xf32>
    %389 = arith.mulf %388, %387 : vector<8x256xf32>
    %cst_109 = arith.constant 5.000000e-01 : f32
    %390 = vector.broadcast %cst_109 : f32 to vector<8x256xf32>
    %391 = arith.addf %389, %390 : vector<8x256xf32>
    %392 = vector.extract_strided_slice %391 {offsets = [0, 0], sizes = [8, 128], strides = [1, 1]} : vector<8x256xf32> to vector<8x128xf32>
    %393 = vector.extract_strided_slice %391 {offsets = [0, 128], sizes = [8, 128], strides = [1, 1]} : vector<8x256xf32> to vector<8x128xf32>
    %394 = vector.extract_strided_slice %380 {offsets = [0, 256], sizes = [8, 128], strides = [1, 1]} : vector<8x384xf32> to vector<8x128xf32>
    %395 = vector.extract_strided_slice %381 {offsets = [0, 256], sizes = [8, 128], strides = [1, 1]} : vector<8x384xf32> to vector<8x128xf32>
    %396 = vector.broadcast %247 : vector<1x128xf32> to vector<8x128xf32>
    %397 = arith.addf %395, %396 : vector<8x128xf32>
    %398 = arith.mulf %392, %397 : vector<8x128xf32>
    %399 = arith.addf %394, %398 : vector<8x128xf32>
    %400 = math.tanh %399 : vector<8x128xf32>
    %cst_110 = arith.constant 1.000000e+00 : f32
    %401 = vector.broadcast %cst_110 : f32 to vector<8x128xf32>
    %402 = arith.subf %401, %393 : vector<8x128xf32>
    %403 = arith.mulf %402, %400 : vector<8x128xf32>
    %404 = arith.mulf %393, %379 : vector<8x128xf32>
    %405 = arith.addf %403, %404 : vector<8x128xf32>
    %406 = vector.extract_strided_slice %245 {offsets = [48, 0], sizes = [8, 384], strides = [1, 1]} : vector<64x384xf32> to vector<8x384xf32>
    %cst_111 = arith.constant dense<0.000000e+00> : vector<8x384xf32>
    %407 = tpu.matmul %405, %246, %cst_111 {dimension_numbers = #tpu.dot_dimension_numbers<[1], [0], [0], [1], [0, 0, 1, 1], [], []>} : vector<8x128xf32>, vector<128x384xf32>, vector<8x384xf32> -> vector<8x384xf32>
    %408 = vector.extract_strided_slice %406 {offsets = [0, 0], sizes = [8, 256], strides = [1, 1]} : vector<8x384xf32> to vector<8x256xf32>
    %409 = vector.extract_strided_slice %407 {offsets = [0, 0], sizes = [8, 256], strides = [1, 1]} : vector<8x384xf32> to vector<8x256xf32>
    %410 = arith.addf %408, %409 : vector<8x256xf32>
    %cst_112 = arith.constant 5.000000e-01 : f32
    %411 = vector.broadcast %cst_112 : f32 to vector<8x256xf32>
    %412 = arith.mulf %411, %410 : vector<8x256xf32>
    %413 = math.tanh %412 : vector<8x256xf32>
    %cst_113 = arith.constant 5.000000e-01 : f32
    %414 = vector.broadcast %cst_113 : f32 to vector<8x256xf32>
    %415 = arith.mulf %414, %413 : vector<8x256xf32>
    %cst_114 = arith.constant 5.000000e-01 : f32
    %416 = vector.broadcast %cst_114 : f32 to vector<8x256xf32>
    %417 = arith.addf %415, %416 : vector<8x256xf32>
    %418 = vector.extract_strided_slice %417 {offsets = [0, 0], sizes = [8, 128], strides = [1, 1]} : vector<8x256xf32> to vector<8x128xf32>
    %419 = vector.extract_strided_slice %417 {offsets = [0, 128], sizes = [8, 128], strides = [1, 1]} : vector<8x256xf32> to vector<8x128xf32>
    %420 = vector.extract_strided_slice %406 {offsets = [0, 256], sizes = [8, 128], strides = [1, 1]} : vector<8x384xf32> to vector<8x128xf32>
    %421 = vector.extract_strided_slice %407 {offsets = [0, 256], sizes = [8, 128], strides = [1, 1]} : vector<8x384xf32> to vector<8x128xf32>
    %422 = vector.broadcast %247 : vector<1x128xf32> to vector<8x128xf32>
    %423 = arith.addf %421, %422 : vector<8x128xf32>
    %424 = arith.mulf %418, %423 : vector<8x128xf32>
    %425 = arith.addf %420, %424 : vector<8x128xf32>
    %426 = math.tanh %425 : vector<8x128xf32>
    %cst_115 = arith.constant 1.000000e+00 : f32
    %427 = vector.broadcast %cst_115 : f32 to vector<8x128xf32>
    %428 = arith.subf %427, %419 : vector<8x128xf32>
    %429 = arith.mulf %428, %426 : vector<8x128xf32>
    %430 = arith.mulf %419, %405 : vector<8x128xf32>
    %431 = arith.addf %429, %430 : vector<8x128xf32>
    %432 = vector.extract_strided_slice %245 {offsets = [56, 0], sizes = [8, 384], strides = [1, 1]} : vector<64x384xf32> to vector<8x384xf32>
    %cst_116 = arith.constant dense<0.000000e+00> : vector<8x384xf32>
    %433 = tpu.matmul %431, %246, %cst_116 {dimension_numbers = #tpu.dot_dimension_numbers<[1], [0], [0], [1], [0, 0, 1, 1], [], []>} : vector<8x128xf32>, vector<128x384xf32>, vector<8x384xf32> -> vector<8x384xf32>
    %434 = vector.extract_strided_slice %432 {offsets = [0, 0], sizes = [8, 256], strides = [1, 1]} : vector<8x384xf32> to vector<8x256xf32>
    %435 = vector.extract_strided_slice %433 {offsets = [0, 0], sizes = [8, 256], strides = [1, 1]} : vector<8x384xf32> to vector<8x256xf32>
    %436 = arith.addf %434, %435 : vector<8x256xf32>
    %cst_117 = arith.constant 5.000000e-01 : f32
    %437 = vector.broadcast %cst_117 : f32 to vector<8x256xf32>
    %438 = arith.mulf %437, %436 : vector<8x256xf32>
    %439 = math.tanh %438 : vector<8x256xf32>
    %cst_118 = arith.constant 5.000000e-01 : f32
    %440 = vector.broadcast %cst_118 : f32 to vector<8x256xf32>
    %441 = arith.mulf %440, %439 : vector<8x256xf32>
    %cst_119 = arith.constant 5.000000e-01 : f32
    %442 = vector.broadcast %cst_119 : f32 to vector<8x256xf32>
    %443 = arith.addf %441, %442 : vector<8x256xf32>
    %444 = vector.extract_strided_slice %443 {offsets = [0, 0], sizes = [8, 128], strides = [1, 1]} : vector<8x256xf32> to vector<8x128xf32>
    %445 = vector.extract_strided_slice %443 {offsets = [0, 128], sizes = [8, 128], strides = [1, 1]} : vector<8x256xf32> to vector<8x128xf32>
    %446 = vector.extract_strided_slice %432 {offsets = [0, 256], sizes = [8, 128], strides = [1, 1]} : vector<8x384xf32> to vector<8x128xf32>
    %447 = vector.extract_strided_slice %433 {offsets = [0, 256], sizes = [8, 128], strides = [1, 1]} : vector<8x384xf32> to vector<8x128xf32>
    %448 = vector.broadcast %247 : vector<1x128xf32> to vector<8x128xf32>
    %449 = arith.addf %447, %448 : vector<8x128xf32>
    %450 = arith.mulf %444, %449 : vector<8x128xf32>
    %451 = arith.addf %446, %450 : vector<8x128xf32>
    %452 = math.tanh %451 : vector<8x128xf32>
    %cst_120 = arith.constant 1.000000e+00 : f32
    %453 = vector.broadcast %cst_120 : f32 to vector<8x128xf32>
    %454 = arith.subf %453, %445 : vector<8x128xf32>
    %455 = arith.mulf %454, %452 : vector<8x128xf32>
    %456 = arith.mulf %445, %431 : vector<8x128xf32>
    %457 = arith.addf %455, %456 : vector<8x128xf32>
    %c1_121 = arith.constant 1 : index
    %c0_122 = arith.constant 0 : index
    %c0_123 = arith.constant 0 : index
    %458 = vector.load %arg18[%c1_121, %c0_122, %c0_123] : memref<2x8x128xf32, #tpu.memory_space<vmem>>, vector<1x8x128xf32>
    %459 = vector.shape_cast %458 : vector<1x8x128xf32> to vector<8x128xf32>
    %460 = vector.shape_cast %457 : vector<8x128xf32> to vector<1x8x128xf32>
    tpu.vector_store %arg18[%c1_121, %c0_122, %c0_123], %460 {strides = array<i32>} : memref<2x8x128xf32, #tpu.memory_space<vmem>>, vector<1x8x128xf32>,
    %cst_124 = arith.constant 0.000000e+00 : f32
    %461 = vector.broadcast %cst_124 : f32 to vector<8x128xf32>
    %462 = arith.maximumf %457, %461 : vector<8x128xf32>
    %c0_125 = arith.constant 0 : index
    %c0_126 = arith.constant 0 : index
    %463 = vector.load %arg15[%c0_125, %c0_126] : memref<128x128xf32, #tpu.memory_space<vmem>>, vector<128x128xf32>
    %cst_127 = arith.constant dense<0.000000e+00> : vector<8x128xf32>
    %464 = tpu.matmul %462, %463, %cst_127 {dimension_numbers = #tpu.dot_dimension_numbers<[1], [0], [0], [1], [0, 0, 1, 1], [], []>} : vector<8x128xf32>, vector<128x128xf32>, vector<8x128xf32> -> vector<8x128xf32>
    %c0_128 = arith.constant 0 : index
    %c0_129 = arith.constant 0 : index
    %465 = vector.load %arg16[%c0_128, %c0_129] : memref<1x128xf32, #tpu.memory_space<vmem>>, vector<1x128xf32>
    %466 = vector.broadcast %465 : vector<1x128xf32> to vector<8x128xf32>
    %467 = arith.addf %464, %466 : vector<8x128xf32>
    %c0_130 = arith.constant 0 : index
    %c0_131 = arith.constant 0 : index
    %468 = vector.load %arg17[%c0_130, %c0_131] : memref<8x128xf32, #tpu.memory_space<vmem>>, vector<8x128xf32>
    tpu.vector_store %arg17[%c0_130, %c0_131], %467 {strides = array<i32>} : memref<8x128xf32, #tpu.memory_space<vmem>>, vector<8x128xf32>,
    return
  }
}

</mosaic_0001>

<llo_original>
// kernel: grunet_forward.1
$region0: #{grunet_forward.1}
  #allocation0 [shape = 'u32[]', space=smem, size = 0x4, offset = 0x4, fixed_abs, tag = 'smem constant byte address 0x4 - core index']
  #allocation1 [shape = 'u32[72,128]{1,0:T(1,128)}', space=vmem, size = 0x9000, scoped, tag = 'internal scratch']
  %s0 = inlined_call_operand.vmem [shape: f32[64,48], index: 0, kind: input, shape index: {}]
  %s1 = inlined_call_operand.vmem [shape: f32[64,40], index: 1, kind: input, shape index: {}]
  %s2 = inlined_call_operand.vmem [shape: f32[2,8,128], index: 2, kind: input, shape index: {}]
  %s3 = inlined_call_operand.vmem [shape: f32[48,32], index: 3, kind: input, shape index: {}]
  %s4 = inlined_call_operand.vmem [shape: f32[1,32], index: 4, kind: input, shape index: {}]
  %s5 = inlined_call_operand.vmem [shape: f32[40,32], index: 5, kind: input, shape index: {}]
  %s6 = inlined_call_operand.vmem [shape: f32[1,32], index: 6, kind: input, shape index: {}]
  %s7 = inlined_call_operand.vmem [shape: f32[64,384], index: 7, kind: input, shape index: {}]
  %s8 = inlined_call_operand.hbm [shape: f32[128,384], index: 8, kind: input, shape index: {}]
  %s9 = inlined_call_operand.vmem [shape: f32[1,384], index: 9, kind: input, shape index: {}]
  %s10 = inlined_call_operand.vmem [shape: f32[1,128], index: 10, kind: input, shape index: {}]
  %s11 = inlined_call_operand.hbm [shape: f32[128,384], index: 11, kind: input, shape index: {}]
  %s12 = inlined_call_operand.hbm [shape: f32[128,384], index: 12, kind: input, shape index: {}]
  %s13 = inlined_call_operand.vmem [shape: f32[1,384], index: 13, kind: input, shape index: {}]
  %s14 = inlined_call_operand.vmem [shape: f32[1,128], index: 14, kind: input, shape index: {}]
  %s15 = inlined_call_operand.hbm [shape: f32[128,128], index: 15, kind: input, shape index: {}]
  %s16 = inlined_call_operand.vmem [shape: f32[1,128], index: 16, kind: input, shape index: {}]
  %s17 = inlined_call_operand.vmem [shape: f32[8,128], index: 17, kind: output, shape index: {0}]
  %s18 = inlined_call_operand.vmem [shape: f32[2,8,128], index: 18, kind: output, shape index: {1}]
  %19 = xla_tuple %s17, %s18
  %s20 = sld [smem:[#allocation0]]
  $region102: #{grunet_forward.1} parent=0
    _
  %s22 = ssub.s32 1, %s20
  %s23 = scalar_select 0, %s22, %s20
  $region1: #{grunet_forward.1} parent=0
    #allocation2 [shape = 'u8[196608]{0}', space=vmem, size = 0x30000, scoped, tag = 'input window, operand 8, single buffered']
    #allocation3 [shape = 's32[1]{0}', space=sflag, size = 0x4, scoped, tag = 'scoped memory for grunet_forward.1']
    #allocation4 [shape = 'u8[196608]{0}', space=vmem, size = 0x30000, scoped, tag = 'input window, operand 11, single buffered']
    #allocation5 [shape = 's32[1]{0}', space=sflag, size = 0x4, scoped, tag = 'scoped memory for grunet_forward.1']
    #allocation6 [shape = 'u8[196608]{0}', space=vmem, size = 0x30000, scoped, tag = 'input window, operand 12, single buffered']
    #allocation7 [shape = 'u8[65536]{0}', space=vmem, size = 0x10000, scoped, tag = 'input window, operand 15, single buffered']
    #allocation8 [shape = 's32[1]{0}', space=sflag, size = 0x4, scoped, tag = 'scoped memory for grunet_forward.1']
    %24 = vsyncpa [#allocation3], 0
    %25 = vsyncpa [#allocation5], 0
    %26 = vsyncpa [#allocation8], 0
    // Predicated region
    $region2: #{grunet_forward.1} parent=1 // pred_check
      _
    $region3: #{grunet_forward.1} parent=1 // pred_check_branch
      %28 = sbr.rel (0) target = $region5
    $region4: #{grunet_forward.1} parent=1 // pred_region
      _
    $region5: #{grunet_forward.1} parent=1 // pred_fallthru
      _
    // Predicated region
    $region6: #{grunet_forward.1} parent=1 // pred_check
      _
    $region7: #{grunet_forward.1} parent=1 // pred_check_branch
      %30 = sbr.rel (0) target = $region9
    $region8: #{grunet_forward.1} parent=1 // pred_region
      _
    $region9: #{grunet_forward.1} parent=1 // pred_fallthru
      _
    // Predicated region
    $region10: #{grunet_forward.1} parent=1 // pred_check
      _
    $region11: #{grunet_forward.1} parent=1 // pred_check_branch
      %32 = sbr.rel (0) target = $region13
    $region12: #{grunet_forward.1} parent=1 // pred_region
      _
    $region13: #{grunet_forward.1} parent=1 // pred_fallthru
      _
    // Predicated region
    $region14: #{grunet_forward.1} parent=1 // pred_check
      _
    $region15: #{grunet_forward.1} parent=1 // pred_check_branch
      %34 = sbr.rel (0) target = $region17
    $region16: #{grunet_forward.1} parent=1 // pred_region
      _
    $region17: #{grunet_forward.1} parent=1 // pred_fallthru
      _
    // Predicated region
    $region18: #{grunet_forward.1} parent=1 // pred_check
      _
    $region19: #{grunet_forward.1} parent=1 // pred_check_branch
      %36 = sbr.rel (0) target = $region21
    $region20: #{grunet_forward.1} parent=1 // pred_region
      _
    $region21: #{grunet_forward.1} parent=1 // pred_fallthru
      _
    // Predicated region
    $region22: #{grunet_forward.1} parent=1 // pred_check
      _
    $region23: #{grunet_forward.1} parent=1 // pred_check_branch
      %38 = sbr.rel (0) target = $region25
    $region24: #{grunet_forward.1} parent=1 // pred_region
      _
    $region25: #{grunet_forward.1} parent=1 // pred_fallthru
      _
    // Predicated region
    $region26: #{grunet_forward.1} parent=1 // pred_check
      _
    $region27: #{grunet_forward.1} parent=1 // pred_check_branch
      %40 = sbr.rel (0) target = $region29
    $region28: #{grunet_forward.1} parent=1 // pred_region
      _
    $region29: #{grunet_forward.1} parent=1 // pred_fallthru
      _
    // Predicated region
    $region30: #{grunet_forward.1} parent=1 // pred_check
      _
    $region31: #{grunet_forward.1} parent=1 // pred_check_branch
      %42 = sbr.rel (0) target = $region33
    $region32: #{grunet_forward.1} parent=1 // pred_region
      _
    $region33: #{grunet_forward.1} parent=1 // pred_fallthru
      _
    // Predicated region
    $region34: #{grunet_forward.1} parent=1 // pred_check
      _
    $region35: #{grunet_forward.1} parent=1 // pred_check_branch
      %44 = sbr.rel (0) target = $region37
    $region36: #{grunet_forward.1} parent=1 // pred_region
      %46 = vsyncadd [#allocation3], 0
      %s47 = sshll.u32 %s8, 4
      %s48 = int_to_ptr.hbm [resolvable:$true] %s47
      %s49 = sshll.u32 [#allocation2], 4
      %s50 = int_to_ptr.vmem [resolvable:$true] %s49
      %55 = dma.hbm_to_vmem [thread:$0]  %s48, 6144, %s50, [#allocation3], 384, 384, 24
    $region37: #{grunet_forward.1} parent=1 // pred_fallthru
      _
    // Predicated region
    $region38: #{grunet_forward.1} parent=1 // pred_check
      _
    $region39: #{grunet_forward.1} parent=1 // pred_check_branch
      %57 = sbr.rel (0) target = $region41
    $region40: #{grunet_forward.1} parent=1 // pred_region
      _
    $region41: #{grunet_forward.1} parent=1 // pred_fallthru
      _
    // Predicated region
    $region42: #{grunet_forward.1} parent=1 // pred_check
      _
    $region43: #{grunet_forward.1} parent=1 // pred_check_branch
      %59 = sbr.rel (0) target = $region45
    $region44: #{grunet_forward.1} parent=1 // pred_region
      _
    $region45: #{grunet_forward.1} parent=1 // pred_fallthru
      _
    // Predicated region
    $region46: #{grunet_forward.1} parent=1 // pred_check
      _
    $region47: #{grunet_forward.1} parent=1 // pred_check_branch
      %61 = sbr.rel (0) target = $region49
    $region48: #{grunet_forward.1} parent=1 // pred_region
      %63 = vsyncadd [#allocation5], 0
      %s64 = sshll.u32 %s11, 4
      %s65 = int_to_ptr.hbm [resolvable:$true] %s64
      %s66 = sshll.u32 [#allocation4], 4
      %s67 = int_to_ptr.vmem [resolvable:$true] %s66
      %72 = dma.hbm_to_vmem [thread:$0]  %s65, 6144, %s67, [#allocation5], 384, 384, 24
    $region49: #{grunet_forward.1} parent=1 // pred_fallthru
      _
    // Predicated region
    $region50: #{grunet_forward.1} parent=1 // pred_check
      _
    $region51: #{grunet_forward.1} parent=1 // pred_check_branch
      %74 = sbr.rel (0) target = $region53
    $region52: #{grunet_forward.1} parent=1 // pred_region
      %76 = vsyncadd [#allocation5], 0
      %s77 = sshll.u32 %s12, 4
      %s78 = int_to_ptr.hbm [resolvable:$true] %s77
      %s79 = sshll.u32 [#allocation6], 4
      %s80 = int_to_ptr.vmem [resolvable:$true] %s79
      %85 = dma.hbm_to_vmem [thread:$0]  %s78, 6144, %s80, [#allocation5], 384, 384, 24
    $region53: #{grunet_forward.1} parent=1 // pred_fallthru
      _
    // Predicated region
    $region54: #{grunet_forward.1} parent=1 // pred_check
      _
    $region55: #{grunet_forward.1} parent=1 // pred_check_branch
      %87 = sbr.rel (0) target = $region57
    $region56: #{grunet_forward.1} parent=1 // pred_region
      _
    $region57: #{grunet_forward.1} parent=1 // pred_fallthru
      _
    // Predicated region
    $region58: #{grunet_forward.1} parent=1 // pred_check
      _
    $region59: #{grunet_forward.1} parent=1 // pred_check_branch
      %89 = sbr.rel (0) target = $region61
    $region60: #{grunet_forward.1} parent=1 // pred_region
      _
    $region61: #{grunet_forward.1} parent=1 // pred_fallthru
      _
    // Predicated region
    $region62: #{grunet_forward.1} parent=1 // pred_check
      _
    $region63: #{grunet_forward.1} parent=1 // pred_check_branch
      %91 = sbr.rel (0) target = $region65
    $region64: #{grunet_forward.1} parent=1 // pred_region
      %93 = vsyncadd [#allocation8], 0
      %s94 = sshll.u32 %s15, 4
      %s95 = int_to_ptr.hbm [resolvable:$true] %s94
      %s96 = sshll.u32 [#allocation7], 4
      %s97 = int_to_ptr.vmem [resolvable:$true] %s96
      %102 = dma.hbm_to_vmem [thread:$0]  %s95, 2048, %s97, [#allocation8], 128, 128, 8
    $region65: #{grunet_forward.1} parent=1 // pred_fallthru
      _
    // Predicated region
    $region66: #{grunet_forward.1} parent=1 // pred_check
      _
    $region67: #{grunet_forward.1} parent=1 // pred_check_branch
      %104 = sbr.rel (0) target = $region69
    $region68: #{grunet_forward.1} parent=1 // pred_region
      _
    $region69: #{grunet_forward.1} parent=1 // pred_fallthru
      _
    // Predicated region
    $region70: #{grunet_forward.1} parent=1 // pred_check
      _
    $region71: #{grunet_forward.1} parent=1 // pred_check_branch
      %106 = sbr.rel (0) target = $region73
    $region72: #{grunet_forward.1} parent=1 // pred_region
      %108 = dma.done [#allocation3], 6144
    $region73: #{grunet_forward.1} parent=1 // pred_fallthru
      _
    // Predicated region
    $region74: #{grunet_forward.1} parent=1 // pred_check
      _
    $region75: #{grunet_forward.1} parent=1 // pred_check_branch
      %110 = sbr.rel (0) target = $region77
    $region76: #{grunet_forward.1} parent=1 // pred_region
      %112 = dma.done [#allocation5], 6144
    $region77: #{grunet_forward.1} parent=1 // pred_fallthru
      _
    // Predicated region
    $region78: #{grunet_forward.1} parent=1 // pred_check
      _
    $region79: #{grunet_forward.1} parent=1 // pred_check_branch
      %114 = sbr.rel (0) target = $region81
    $region80: #{grunet_forward.1} parent=1 // pred_region
      %116 = dma.done [#allocation5], 6144
    $region81: #{grunet_forward.1} parent=1 // pred_fallthru
      _
    // Predicated region
    $region82: #{grunet_forward.1} parent=1 // pred_check
      _
    $region83: #{grunet_forward.1} parent=1 // pred_check_branch
      %118 = sbr.rel (0) target = $region85
    $region84: #{grunet_forward.1} parent=1 // pred_region
      %120 = dma.done [#allocation8], 2048
    $region85: #{grunet_forward.1} parent=1 // pred_fallthru
      _
    %v121 = vld [vmem:[%s0] sm:$0xff]
    %v122 = vld [vmem:[%s0 + $0x8] sm:$0xff]
    %v123 = vld [vmem:[%s0 + $0x10] sm:$0xff]
    %v124 = vld [vmem:[%s0 + $0x18] sm:$0xff]
    %v125 = vld [vmem:[%s0 + $0x20] sm:$0xff]
    %v126 = vld [vmem:[%s0 + $0x28] sm:$0xff]
    %v127 = vld [vmem:[%s0 + $0x30] sm:$0xff]
    %v128 = vld [vmem:[%s0 + $0x38] sm:$0xff]
    %v129 = vld [vmem:[%s3] sm:$0xff]
    %v130 = vld [vmem:[%s3 + $0x8] sm:$0xff]
    %v131 = vld [vmem:[%s3 + $0x10] sm:$0xff]
    %v132 = vld [vmem:[%s3 + $0x18] sm:$0xff]
    %v133 = vld [vmem:[%s3 + $0x20] sm:$0xff]
    %v134 = vld [vmem:[%s3 + $0x28] sm:$0xff]
    %v135 = vld [vmem:[%s4] sm:$0x1]
    %v137 = vperm.slane %v135, 0
    %vm139 = vcmask 392192
    %v141 = vsel %vm139, %v121, 0
    %v144 = vsel %vm139, %v122, 0
    %v147 = vsel %vm139, %v123, 0
    %v150 = vsel %vm139, %v124, 0
    %v153 = vsel %vm139, %v125, 0
    %v156 = vsel %vm139, %v126, 0
    %v159 = vsel %vm139, %v127, 0
    %v162 = vsel %vm139, %v128, 0
    %164 = vmatpush.msra.mxu0 0.0
    %165 = vmatpush.msra.mxu0 0.0
    %166 = vmatpush.msra.mxu0 0.0
    %167 = vmatpush.msra.mxu0 0.0
    %168 = vmatpush.msra.mxu0 0.0
    %169 = vmatpush.msra.mxu0 0.0
    %170 = vmatpush.msra.mxu0 0.0
    %171 = vmatpush.msra.mxu0 0.0
    %172 = vmatpush.msra.mxu0 0.0
    %173 = vmatpush.msra.mxu0 0.0
    %174 = vmatpush.msra.mxu0 %v134
    %175 = vmatpush.msra.mxu0 %v133
    %176 = vmatpush.msra.mxu0 %v132
    %177 = vmatpush.msra.mxu0 %v131
    %178 = vmatpush.msra.mxu0 %v130
    %179 = vmatpush.msra.mxu0 %v129
    %180 = vmatmul.f32.gmra.mxu0 %v141
    %v181 = vpop.f32.mrf.mxu0
    %v182 = vadd.f32 %v137, %v181
    %183 = vmatmul.f32.gmra.mxu0 %v144
    %v184 = vpop.f32.mrf.mxu0
    %v185 = vadd.f32 %v137, %v184
    %186 = vmatmul.f32.gmra.mxu0 %v147
    %v187 = vpop.f32.mrf.mxu0
    %v188 = vadd.f32 %v137, %v187
    %189 = vmatmul.f32.gmra.mxu0 %v150
    %v190 = vpop.f32.mrf.mxu0
    %v191 = vadd.f32 %v137, %v190
    %192 = vmatmul.f32.gmra.mxu0 %v153
    %v193 = vpop.f32.mrf.mxu0
    %v194 = vadd.f32 %v137, %v193
    %195 = vmatmul.f32.gmra.mxu0 %v156
    %v196 = vpop.f32.mrf.mxu0
    %v197 = vadd.f32 %v137, %v196
    %198 = vmatmul.f32.gmra.mxu0 %v159
    %v199 = vpop.f32.mrf.mxu0
    %v200 = vadd.f32 %v137, %v199
    %201 = vmatmul.f32.gmra.mxu0 %v162
    %v202 = vpop.f32.mrf.mxu0
    %v203 = vadd.f32 %v137, %v202
    %204 = vdwg.mxu0
    %v205 = vmax.f32 %v182, 0.0
    %v206 = vmax.f32 %v185, 0.0
    %v207 = vmax.f32 %v188, 0.0
    %v208 = vmax.f32 %v191, 0.0
    %v209 = vmax.f32 %v194, 0.0
    %v210 = vmax.f32 %v197, 0.0
    %v211 = vmax.f32 %v200, 0.0
    %v212 = vmax.f32 %v203, 0.0
    %v213 = vld [vmem:[%s1] sm:$0xff]
    %v214 = vld [vmem:[%s1 + $0x8] sm:$0xff]
    %v215 = vld [vmem:[%s1 + $0x10] sm:$0xff]
    %v216 = vld [vmem:[%s1 + $0x18] sm:$0xff]
    %v217 = vld [vmem:[%s1 + $0x20] sm:$0xff]
    %v218 = vld [vmem:[%s1 + $0x28] sm:$0xff]
    %v219 = vld [vmem:[%s1 + $0x30] sm:$0xff]
    %v220 = vld [vmem:[%s1 + $0x38] sm:$0xff]
    %v221 = vld [vmem:[%s5] sm:$0xff]
    %v222 = vld [vmem:[%s5 + $0x8] sm:$0xff]
    %v223 = vld [vmem:[%s5 + $0x10] sm:$0xff]
    %v224 = vld [vmem:[%s5 + $0x18] sm:$0xff]
    %v225 = vld [vmem:[%s5 + $0x20] sm:$0xff]
    %v226 = vld [vmem:[%s6] sm:$0x1]
    %v228 = vperm.slane %v226, 0
    %vm230 = vcmask 326656
    %v232 = vsel %vm230, %v213, 0
    %v235 = vsel %vm230, %v214, 0
    %v238 = vsel %vm230, %v215, 0
    %v241 = vsel %vm230, %v216, 0
    %v244 = vsel %vm230, %v217, 0
    %v247 = vsel %vm230, %v218, 0
    %v250 = vsel %vm230, %v219, 0
    %v253 = vsel %vm230, %v220, 0
    %255 = vmatpush.msra.mxu0 0.0
    %256 = vmatpush.msra.mxu0 0.0
    %257 = vmatpush.msra.mxu0 0.0
    %258 = vmatpush.msra.mxu0 0.0
    %259 = vmatpush.msra.mxu0 0.0
    %260 = vmatpush.msra.mxu0 0.0
    %261 = vmatpush.msra.mxu0 0.0
    %262 = vmatpush.msra.mxu0 0.0
    %263 = vmatpush.msra.mxu0 0.0
    %264 = vmatpush.msra.mxu0 0.0
    %265 = vmatpush.msra.mxu0 0.0
    %266 = vmatpush.msra.mxu0 %v225
    %267 = vmatpush.msra.mxu0 %v224
    %268 = vmatpush.msra.mxu0 %v223
    %269 = vmatpush.msra.mxu0 %v222
    %270 = vmatpush.msra.mxu0 %v221
    %271 = vmatmul.f32.gmra.mxu0 %v232
    %v272 = vpop.f32.mrf.mxu0
    %v273 = vadd.f32 %v228, %v272
    %274 = vmatmul.f32.gmra.mxu0 %v235
    %v275 = vpop.f32.mrf.mxu0
    %v276 = vadd.f32 %v228, %v275
    %277 = vmatmul.f32.gmra.mxu0 %v238
    %v278 = vpop.f32.mrf.mxu0
    %v279 = vadd.f32 %v228, %v278
    %280 = vmatmul.f32.gmra.mxu0 %v241
    %v281 = vpop.f32.mrf.mxu0
    %v282 = vadd.f32 %v228, %v281
    %283 = vmatmul.f32.gmra.mxu0 %v244
    %v284 = vpop.f32.mrf.mxu0
    %v285 = vadd.f32 %v228, %v284
    %286 = vmatmul.f32.gmra.mxu0 %v247
    %v287 = vpop.f32.mrf.mxu0
    %v288 = vadd.f32 %v228, %v287
    %289 = vmatmul.f32.gmra.mxu0 %v250
    %v290 = vpop.f32.mrf.mxu0
    %v291 = vadd.f32 %v228, %v290
    %292 = vmatmul.f32.gmra.mxu0 %v253
    %v293 = vpop.f32.mrf.mxu0
    %v294 = vadd.f32 %v228, %v293
    %295 = vdwg.mxu0
    %v296 = vmax.f32 %v273, 0.0
    %v297 = vmax.f32 %v276, 0.0
    %v298 = vmax.f32 %v279, 0.0
    %v299 = vmax.f32 %v282, 0.0
    %v300 = vmax.f32 %v285, 0.0
    %v301 = vmax.f32 %v288, 0.0
    %v302 = vmax.f32 %v291, 0.0
    %v303 = vmax.f32 %v294, 0.0
    %v304 = vld [vmem:[%s7] sm:$0xff]
    %v305 = vld [vmem:[%s7 + $0x8] sm:$0xff]
    %v306 = vld [vmem:[%s7 + $0x10] sm:$0xff]
    %v307 = vld [vmem:[%s7 + $0x18] sm:$0xff]
    %v308 = vld [vmem:[%s7 + $0x20] sm:$0xff]
    %v309 = vld [vmem:[%s7 + $0x28] sm:$0xff]
    %v310 = vld [vmem:[%s7 + $0x30] sm:$0xff]
    %v311 = vld [vmem:[%s7 + $0x38] sm:$0xff]
    %v312 = vld [vmem:[%s7 + $0x40] sm:$0xff]
    %v313 = vld [vmem:[%s7 + $0x48] sm:$0xff]
    %v314 = vld [vmem:[%s7 + $0x50] sm:$0xff]
    %v315 = vld [vmem:[%s7 + $0x58] sm:$0xff]
    %v316 = vld [vmem:[%s7 + $0x60] sm:$0xff]
    %v317 = vld [vmem:[%s7 + $0x68] sm:$0xff]
    %v318 = vld [vmem:[%s7 + $0x70] sm:$0xff]
    %v319 = vld [vmem:[%s7 + $0x78] sm:$0xff]
    %v320 = vld [vmem:[%s7 + $0x80] sm:$0xff]
    %v321 = vld [vmem:[%s7 + $0x88] sm:$0xff]
    %v322 = vld [vmem:[%s7 + $0x90] sm:$0xff]
    %v323 = vld [vmem:[%s7 + $0x98] sm:$0xff]
    %v324 = vld [vmem:[%s7 + $0xa0] sm:$0xff]
    %v325 = vld [vmem:[%s7 + $0xa8] sm:$0xff]
    %v326 = vld [vmem:[%s7 + $0xb0] sm:$0xff]
    %v327 = vld [vmem:[%s7 + $0xb8] sm:$0xff]
    %vm328 = vcmask 261120
    %v330 = vsel %vm328, %v296, 0
    %v333 = vsel %vm328, %v297, 0
    %v336 = vsel %vm328, %v298, 0
    %v339 = vsel %vm328, %v299, 0
    %v342 = vsel %vm328, %v300, 0
    %v345 = vsel %vm328, %v301, 0
    %v348 = vsel %vm328, %v302, 0
    %v351 = vsel %vm328, %v303, 0
    %353 = vmatpush.msra.mxu0 0.0
    %354 = vmatpush.msra.mxu0 0.0
    %355 = vmatpush.msra.mxu0 0.0
    %356 = vmatpush.msra.mxu0 0.0
    %357 = vmatpush.msra.mxu0 0.0
    %358 = vmatpush.msra.mxu0 0.0
    %359 = vmatpush.msra.mxu0 0.0
    %360 = vmatpush.msra.mxu0 0.0
    %361 = vmatpush.msra.mxu0 0.0
    %362 = vmatpush.msra.mxu0 0.0
    %363 = vmatpush.msra.mxu0 0.0
    %364 = vmatpush.msra.mxu0 0.0
    %365 = vmatpush.msra.mxu0 %v325
    %366 = vmatpush.msra.mxu0 %v322
    %367 = vmatpush.msra.mxu0 %v319
    %368 = vmatpush.msra.mxu0 %v316
    %369 = vmatmul.f32.gmra.mxu0 %v330
    %v370 = vpop.f32.mrf.mxu0
    %v371 = vadd.f32 0.0, %v370
    %372 = vmatmul.f32.gmra.mxu0 %v333
    %v373 = vpop.f32.mrf.mxu0
    %v374 = vadd.f32 0.0, %v373
    %375 = vmatmul.f32.gmra.mxu0 %v336
    %v376 = vpop.f32.mrf.mxu0
    %v377 = vadd.f32 0.0, %v376
    %378 = vmatmul.f32.gmra.mxu0 %v339
    %v379 = vpop.f32.mrf.mxu0
    %v380 = vadd.f32 0.0, %v379
    %381 = vmatmul.f32.gmra.mxu0 %v342
    %v382 = vpop.f32.mrf.mxu0
    %v383 = vadd.f32 0.0, %v382
    %384 = vmatmul.f32.gmra.mxu0 %v345
    %v385 = vpop.f32.mrf.mxu0
    %v386 = vadd.f32 0.0, %v385
    %387 = vmatmul.f32.gmra.mxu0 %v348
    %v388 = vpop.f32.mrf.mxu0
    %v389 = vadd.f32 0.0, %v388
    %390 = vmatmul.f32.gmra.mxu0 %v351
    %v391 = vpop.f32.mrf.mxu0
    %v392 = vadd.f32 0.0, %v391
    %393 = vdwg.mxu0
    %394 = vmatpush.msra.mxu0 0.0
    %395 = vmatpush.msra.mxu0 0.0
    %396 = vmatpush.msra.mxu0 0.0
    %397 = vmatpush.msra.mxu0 0.0
    %398 = vmatpush.msra.mxu0 0.0
    %399 = vmatpush.msra.mxu0 0.0
    %400 = vmatpush.msra.mxu0 0.0
    %401 = vmatpush.msra.mxu0 0.0
    %402 = vmatpush.msra.mxu0 0.0
    %403 = vmatpush.msra.mxu0 0.0
    %404 = vmatpush.msra.mxu0 0.0
    %405 = vmatpush.msra.mxu0 0.0
    %406 = vmatpush.msra.mxu0 %v326
    %407 = vmatpush.msra.mxu0 %v323
    %408 = vmatpush.msra.mxu0 %v320
    %409 = vmatpush.msra.mxu0 %v317
    %410 = vmatmul.f32.gmra.mxu0 %v330
    %v411 = vpop.f32.mrf.mxu0
    %v412 = vadd.f32 0.0, %v411
    %413 = vmatmul.f32.gmra.mxu0 %v333
    %v414 = vpop.f32.mrf.mxu0
    %v415 = vadd.f32 0.0, %v414
    %416 = vmatmul.f32.gmra.mxu0 %v336
    %v417 = vpop.f32.mrf.mxu0
    %v418 = vadd.f32 0.0, %v417
    %419 = vmatmul.f32.gmra.mxu0 %v339
    %v420 = vpop.f32.mrf.mxu0
    %v421 = vadd.f32 0.0, %v420
    %422 = vmatmul.f32.gmra.mxu0 %v342
    %v423 = vpop.f32.mrf.mxu0
    %v424 = vadd.f32 0.0, %v423
    %425 = vmatmul.f32.gmra.mxu0 %v345
    %v426 = vpop.f32.mrf.mxu0
    %v427 = vadd.f32 0.0, %v426
    %428 = vmatmul.f32.gmra.mxu0 %v348
    %v429 = vpop.f32.mrf.mxu0
    %v430 = vadd.f32 0.0, %v429
    %431 = vmatmul.f32.gmra.mxu0 %v351
    %v432 = vpop.f32.mrf.mxu0
    %v433 = vadd.f32 0.0, %v432
    %434 = vdwg.mxu0
    %435 = vmatpush.msra.mxu0 0.0
    %436 = vmatpush.msra.mxu0 0.0
    %437 = vmatpush.msra.mxu0 0.0
    %438 = vmatpush.msra.mxu0 0.0
    %439 = vmatpush.msra.mxu0 0.0
    %440 = vmatpush.msra.mxu0 0.0
    %441 = vmatpush.msra.mxu0 0.0
    %442 = vmatpush.msra.mxu0 0.0
    %443 = vmatpush.msra.mxu0 0.0
    %444 = vmatpush.msra.mxu0 0.0
    %445 = vmatpush.msra.mxu0 0.0
    %446 = vmatpush.msra.mxu0 0.0
    %447 = vmatpush.msra.mxu0 %v327
    %448 = vmatpush.msra.mxu0 %v324
    %449 = vmatpush.msra.mxu0 %v321
    %450 = vmatpush.msra.mxu0 %v318
    %451 = vmatmul.f32.gmra.mxu0 %v330
    %v452 = vpop.f32.mrf.mxu0
    %v453 = vadd.f32 0.0, %v452
    %454 = vmatmul.f32.gmra.mxu0 %v333
    %v455 = vpop.f32.mrf.mxu0
    %v456 = vadd.f32 0.0, %v455
    %457 = vmatmul.f32.gmra.mxu0 %v336
    %v458 = vpop.f32.mrf.mxu0
    %v459 = vadd.f32 0.0, %v458
    %460 = vmatmul.f32.gmra.mxu0 %v339
    %v461 = vpop.f32.mrf.mxu0
    %v462 = vadd.f32 0.0, %v461
    %463 = vmatmul.f32.gmra.mxu0 %v342
    %v464 = vpop.f32.mrf.mxu0
    %v465 = vadd.f32 0.0, %v464
    %466 = vmatmul.f32.gmra.mxu0 %v345
    %v467 = vpop.f32.mrf.mxu0
    %v468 = vadd.f32 0.0, %v467
    %469 = vmatmul.f32.gmra.mxu0 %v348
    %v470 = vpop.f32.mrf.mxu0
    %v471 = vadd.f32 0.0, %v470
    %472 = vmatmul.f32.gmra.mxu0 %v351
    %v473 = vpop.f32.mrf.mxu0
    %v474 = vadd.f32 0.0, %v473
    %475 = vdwg.mxu0
    %v477 = vsel %vm328, %v205, 0
    %v480 = vsel %vm328, %v206, 0
    %v483 = vsel %vm328, %v207, 0
    %v486 = vsel %vm328, %v208, 0
    %v489 = vsel %vm328, %v209, 0
    %v492 = vsel %vm328, %v210, 0
    %v495 = vsel %vm328, %v211, 0
    %v498 = vsel %vm328, %v212, 0
    %500 = vmatpush.msra.mxu0 0.0
    %501 = vmatpush.msra.mxu0 0.0
    %502 = vmatpush.msra.mxu0 0.0
    %503 = vmatpush.msra.mxu0 0.0
    %504 = vmatpush.msra.mxu0 0.0
    %505 = vmatpush.msra.mxu0 0.0
    %506 = vmatpush.msra.mxu0 0.0
    %507 = vmatpush.msra.mxu0 0.0
    %508 = vmatpush.msra.mxu0 0.0
    %509 = vmatpush.msra.mxu0 0.0
    %510 = vmatpush.msra.mxu0 0.0
    %511 = vmatpush.msra.mxu0 0.0
    %512 = vmatpush.msra.mxu0 %v313
    %513 = vmatpush.msra.mxu0 %v310
    %514 = vmatpush.msra.mxu0 %v307
    %515 = vmatpush.msra.mxu0 %v304
    %516 = vmatmul.f32.gmra.mxu0 %v477
    %v517 = vpop.f32.mrf.mxu0
    %v518 = vadd.f32 %v371, %v517
    %519 = vmatmul.f32.gmra.mxu0 %v480
    %v520 = vpop.f32.mrf.mxu0
    %v521 = vadd.f32 %v374, %v520
    %522 = vmatmul.f32.gmra.mxu0 %v483
    %v523 = vpop.f32.mrf.mxu0
    %v524 = vadd.f32 %v377, %v523
    %525 = vmatmul.f32.gmra.mxu0 %v486
    %v526 = vpop.f32.mrf.mxu0
    %v527 = vadd.f32 %v380, %v526
    %528 = vmatmul.f32.gmra.mxu0 %v489
    %v529 = vpop.f32.mrf.mxu0
    %v530 = vadd.f32 %v383, %v529
    %531 = vmatmul.f32.gmra.mxu0 %v492
    %v532 = vpop.f32.mrf.mxu0
    %v533 = vadd.f32 %v386, %v532
    %534 = vmatmul.f32.gmra.mxu0 %v495
    %v535 = vpop.f32.mrf.mxu0
    %v536 = vadd.f32 %v389, %v535
    %537 = vmatmul.f32.gmra.mxu0 %v498
    %v538 = vpop.f32.mrf.mxu0
    %v539 = vadd.f32 %v392, %v538
    %540 = vdwg.mxu0
    %541 = vmatpush.msra.mxu0 0.0
    %542 = vmatpush.msra.mxu0 0.0
    %543 = vmatpush.msra.mxu0 0.0
    %544 = vmatpush.msra.mxu0 0.0
    %545 = vmatpush.msra.mxu0 0.0
    %546 = vmatpush.msra.mxu0 0.0
    %547 = vmatpush.msra.mxu0 0.0
    %548 = vmatpush.msra.mxu0 0.0
    %549 = vmatpush.msra.mxu0 0.0
    %550 = vmatpush.msra.mxu0 0.0
    %551 = vmatpush.msra.mxu0 0.0
    %552 = vmatpush.msra.mxu0 0.0
    %553 = vmatpush.msra.mxu0 %v314
    %554 = vmatpush.msra.mxu0 %v311
    %555 = vmatpush.msra.mxu0 %v308
    %556 = vmatpush.msra.mxu0 %v305
    %557 = vmatmul.f32.gmra.mxu0 %v477
    %v558 = vpop.f32.mrf.mxu0
    %v559 = vadd.f32 %v412, %v558
    %560 = vmatmul.f32.gmra.mxu0 %v480
    %v561 = vpop.f32.mrf.mxu0
    %v562 = vadd.f32 %v415, %v561
    %563 = vmatmul.f32.gmra.mxu0 %v483
    %v564 = vpop.f32.mrf.mxu0
    %v565 = vadd.f32 %v418, %v564
    %566 = vmatmul.f32.gmra.mxu0 %v486
    %v567 = vpop.f32.mrf.mxu0
    %v568 = vadd.f32 %v421, %v567
    %569 = vmatmul.f32.gmra.mxu0 %v489
    %v570 = vpop.f32.mrf.mxu0
    %v571 = vadd.f32 %v424, %v570
    %572 = vmatmul.f32.gmra.mxu0 %v492
    %v573 = vpop.f32.mrf.mxu0
    %v574 = vadd.f32 %v427, %v573
    %575 = vmatmul.f32.gmra.mxu0 %v495
    %v576 = vpop.f32.mrf.mxu0
    %v577 = vadd.f32 %v430, %v576
    %578 = vmatmul.f32.gmra.mxu0 %v498
    %v579 = vpop.f32.mrf.mxu0
    %v580 = vadd.f32 %v433, %v579
    %581 = vdwg.mxu0
    %582 = vmatpush.msra.mxu0 0.0
    %583 = vmatpush.msra.mxu0 0.0
    %584 = vmatpush.msra.mxu0 0.0
    %585 = vmatpush.msra.mxu0 0.0
    %586 = vmatpush.msra.mxu0 0.0
    %587 = vmatpush.msra.mxu0 0.0
    %588 = vmatpush.msra.mxu0 0.0
    %589 = vmatpush.msra.mxu0 0.0
    %590 = vmatpush.msra.mxu0 0.0
    %591 = vmatpush.msra.mxu0 0.0
    %592 = vmatpush.msra.mxu0 0.0
    %593 = vmatpush.msra.mxu0 0.0
    %594 = vmatpush.msra.mxu0 %v315
    %595 = vmatpush.msra.mxu0 %v312
    %596 = vmatpush.msra.mxu0 %v309
    %597 = vmatpush.msra.mxu0 %v306
    %598 = vmatmul.f32.gmra.mxu0 %v477
    %v599 = vpop.f32.mrf.mxu0
    %v600 = vadd.f32 %v453, %v599
    %601 = vmatmul.f32.gmra.mxu0 %v480
    %v602 = vpop.f32.mrf.mxu0
    %v603 = vadd.f32 %v456, %v602
    %604 = vmatmul.f32.gmra.mxu0 %v483
    %v605 = vpop.f32.mrf.mxu0
    %v606 = vadd.f32 %v459, %v605
    %607 = vmatmul.f32.gmra.mxu0 %v486
    %v608 = vpop.f32.mrf.mxu0
    %v609 = vadd.f32 %v462, %v608
    %610 = vmatmul.f32.gmra.mxu0 %v489
    %v611 = vpop.f32.mrf.mxu0
    %v612 = vadd.f32 %v465, %v611
    %613 = vmatmul.f32.gmra.mxu0 %v492
    %v614 = vpop.f32.mrf.mxu0
    %v615 = vadd.f32 %v468, %v614
    %616 = vmatmul.f32.gmra.mxu0 %v495
    %v617 = vpop.f32.mrf.mxu0
    %v618 = vadd.f32 %v471, %v617
    %619 = vmatmul.f32.gmra.mxu0 %v498
    %v620 = vpop.f32.mrf.mxu0
    %v621 = vadd.f32 %v474, %v620
    %622 = vdwg.mxu0
    %v623 = vld [vmem:[%s9] sm:$0x7]
    %v625 = vperm.slane %v623, 0
    %v626 = vperm.slane %v623, 1
    %v627 = vperm.slane %v623, 2
    %v631 = vadd.f32 %v518, %v625
    %v632 = vadd.f32 %v559, %v626
    %v633 = vadd.f32 %v600, %v627
    %v634 = vadd.f32 %v521, %v625
    %v635 = vadd.f32 %v562, %v626
    %v636 = vadd.f32 %v603, %v627
    %v637 = vadd.f32 %v524, %v625
    %v638 = vadd.f32 %v565, %v626
    %v639 = vadd.f32 %v606, %v627
    %v640 = vadd.f32 %v527, %v625
    %v641 = vadd.f32 %v568, %v626
    %v642 = vadd.f32 %v609, %v627
    %v643 = vadd.f32 %v530, %v625
    %v644 = vadd.f32 %v571, %v626
    %v645 = vadd.f32 %v612, %v627
    %v646 = vadd.f32 %v533, %v625
    %v647 = vadd.f32 %v574, %v626
    %v648 = vadd.f32 %v615, %v627
    %v649 = vadd.f32 %v536, %v625
    %v650 = vadd.f32 %v577, %v626
    %v651 = vadd.f32 %v618, %v627
    %v652 = vadd.f32 %v539, %v625
    %v653 = vadd.f32 %v580, %v626
    %v654 = vadd.f32 %v621, %v627
    %v655 = vld [vmem:[#allocation2] sm:$0xff]
    %v656 = vld [vmem:[#allocation2 + $0x8] sm:$0xff]
    %v657 = vld [vmem:[#allocation2 + $0x10] sm:$0xff]
    %v658 = vld [vmem:[#allocation2 + $0x18] sm:$0xff]
    %v659 = vld [vmem:[#allocation2 + $0x20] sm:$0xff]
    %v660 = vld [vmem:[#allocation2 + $0x28] sm:$0xff]
    %v661 = vld [vmem:[#allocation2 + $0x30] sm:$0xff]
    %v662 = vld [vmem:[#allocation2 + $0x38] sm:$0xff]
    %v663 = vld [vmem:[#allocation2 + $0x40] sm:$0xff]
    %v664 = vld [vmem:[#allocation2 + $0x48] sm:$0xff]
    %v665 = vld [vmem:[#allocation2 + $0x50] sm:$0xff]
    %v666 = vld [vmem:[#allocation2 + $0x58] sm:$0xff]
    %v667 = vld [vmem:[#allocation2 + $0x60] sm:$0xff]
    %v668 = vld [vmem:[#allocation2 + $0x68] sm:$0xff]
    %v669 = vld [vmem:[#allocation2 + $0x70] sm:$0xff]
    %v670 = vld [vmem:[#allocation2 + $0x78] sm:$0xff]
    %v671 = vld [vmem:[#allocation2 + $0x80] sm:$0xff]
    %v672 = vld [vmem:[#allocation2 + $0x88] sm:$0xff]
    %v673 = vld [vmem:[#allocation2 + $0x90] sm:$0xff]
    %v674 = vld [vmem:[#allocation2 + $0x98] sm:$0xff]
    %v675 = vld [vmem:[#allocation2 + $0xa0] sm:$0xff]
    %v676 = vld [vmem:[#allocation2 + $0xa8] sm:$0xff]
    %v677 = vld [vmem:[#allocation2 + $0xb0] sm:$0xff]
    %v678 = vld [vmem:[#allocation2 + $0xb8] sm:$0xff]
    %v679 = vld [vmem:[#allocation2 + $0xc0] sm:$0xff]
    %v680 = vld [vmem:[#allocation2 + $0xc8] sm:$0xff]
    %v681 = vld [vmem:[#allocation2 + $0xd0] sm:$0xff]
    %v682 = vld [vmem:[#allocation2 + $0xd8] sm:$0xff]
    %v683 = vld [vmem:[#allocation2 + $0xe0] sm:$0xff]
    %v684 = vld [vmem:[#allocation2 + $0xe8] sm:$0xff]
    %v685 = vld [vmem:[#allocation2 + $0xf0] sm:$0xff]
    %v686 = vld [vmem:[#allocation2 + $0xf8] sm:$0xff]
    %v687 = vld [vmem:[#allocation2 + $0x100] sm:$0xff]
    %v688 = vld [vmem:[#allocation2 + $0x108] sm:$0xff]
    %v689 = vld [vmem:[#allocation2 + $0x110] sm:$0xff]
    %v690 = vld [vmem:[#allocation2 + $0x118] sm:$0xff]
    %v691 = vld [vmem:[#allocation2 + $0x120] sm:$0xff]
    %v692 = vld [vmem:[#allocation2 + $0x128] sm:$0xff]
    %v693 = vld [vmem:[#allocation2 + $0x130] sm:$0xff]
    %v694 = vld [vmem:[#allocation2 + $0x138] sm:$0xff]
    %v695 = vld [vmem:[#allocation2 + $0x140] sm:$0xff]
    %v696 = vld [vmem:[#allocation2 + $0x148] sm:$0xff]
    %v697 = vld [vmem:[#allocation2 + $0x150] sm:$0xff]
    %v698 = vld [vmem:[#allocation2 + $0x158] sm:$0xff]
    %v699 = vld [vmem:[#allocation2 + $0x160] sm:$0xff]
    %v700 = vld [vmem:[#allocation2 + $0x168] sm:$0xff]
    %v701 = vld [vmem:[#allocation2 + $0x170] sm:$0xff]
    %v702 = vld [vmem:[#allocation2 + $0x178] sm:$0xff]
    %v703 = vld [vmem:[%s10] sm:$0x1]
    %v704 = vld [vmem:[%s2] sm:$0xff]
    %705 = vmatpush.msra.mxu0 %v700
    %706 = vmatpush.msra.mxu0 %v697
    %707 = vmatpush.msra.mxu0 %v694
    %708 = vmatpush.msra.mxu0 %v691
    %709 = vmatpush.msra.mxu0 %v688
    %710 = vmatpush.msra.mxu0 %v685
    %711 = vmatpush.msra.mxu0 %v682
    %712 = vmatpush.msra.mxu0 %v679
    %713 = vmatpush.msra.mxu0 %v676
    %714 = vmatpush.msra.mxu0 %v673
    %715 = vmatpush.msra.mxu0 %v670
    %716 = vmatpush.msra.mxu0 %v667
    %717 = vmatpush.msra.mxu0 %v664
    %718 = vmatpush.msra.mxu0 %v661
    %719 = vmatpush.msra.mxu0 %v658
    %720 = vmatpush.msra.mxu0 %v655
    %721 = vmatmul.f32.gmra.mxu0 %v704
    %v722 = vpop.f32.mrf.mxu0
    %v723 = vadd.f32 0.0, %v722
    %724 = vdwg.mxu0
    %725 = vmatpush.msra.mxu0 %v701
    %726 = vmatpush.msra.mxu0 %v698
    %727 = vmatpush.msra.mxu0 %v695
    %728 = vmatpush.msra.mxu0 %v692
    %729 = vmatpush.msra.mxu0 %v689
    %730 = vmatpush.msra.mxu0 %v686
    %731 = vmatpush.msra.mxu0 %v683
    %732 = vmatpush.msra.mxu0 %v680
    %733 = vmatpush.msra.mxu0 %v677
    %734 = vmatpush.msra.mxu0 %v674
    %735 = vmatpush.msra.mxu0 %v671
    %736 = vmatpush.msra.mxu0 %v668
    %737 = vmatpush.msra.mxu0 %v665
    %738 = vmatpush.msra.mxu0 %v662
    %739 = vmatpush.msra.mxu0 %v659
    %740 = vmatpush.msra.mxu0 %v656
    %741 = vmatmul.f32.gmra.mxu0 %v704
    %v742 = vpop.f32.mrf.mxu0
    %v743 = vadd.f32 0.0, %v742
    %744 = vdwg.mxu0
    %745 = vmatpush.msra.mxu0 %v702
    %746 = vmatpush.msra.mxu0 %v699
    %747 = vmatpush.msra.mxu0 %v696
    %748 = vmatpush.msra.mxu0 %v693
    %749 = vmatpush.msra.mxu0 %v690
    %750 = vmatpush.msra.mxu0 %v687
    %751 = vmatpush.msra.mxu0 %v684
    %752 = vmatpush.msra.mxu0 %v681
    %753 = vmatpush.msra.mxu0 %v678
    %754 = vmatpush.msra.mxu0 %v675
    %755 = vmatpush.msra.mxu0 %v672
    %756 = vmatpush.msra.mxu0 %v669
    %757 = vmatpush.msra.mxu0 %v666
    %758 = vmatpush.msra.mxu0 %v663
    %759 = vmatpush.msra.mxu0 %v660
    %760 = vmatpush.msra.mxu0 %v657
    %761 = vmatmul.f32.gmra.mxu0 %v704
    %v762 = vpop.f32.mrf.mxu0
    %v763 = vadd.f32 0.0, %v762
    %764 = vdwg.mxu0
    %v765 = vadd.f32 %v631, %v723
    %v766 = vadd.f32 %v632, %v743
    %v767 = vmul.f32 %v765, 0.5
    %v768 = vmul.f32 %v766, 0.5
    %v769 = vtanh.pop %v767
    %v770 = vtanh.pop %v768
    %v771 = vmul.f32 %v769, 0.5
    %v772 = vmul.f32 %v770, 0.5
    %v773 = vadd.f32 %v771, 0.5
    %v774 = vadd.f32 %v772, 0.5
    %v776 = vperm.slane %v703, 0
    %v778 = vadd.f32 %v763, %v776
    %v779 = vmul.f32 %v773, %v778
    %v780 = vadd.f32 %v633, %v779
    %v781 = vtanh.pop %v780
    %v782 = vsub.f32 1.0, %v774
    %v783 = vmul.f32 %v782, %v781
    %v784 = vmul.f32 %v774, %v704
    %v785 = vadd.f32 %v783, %v784
    %786 = vmatpush.msra.mxu0 %v700
    %787 = vmatpush.msra.mxu0 %v697
    %788 = vmatpush.msra.mxu0 %v694
    %789 = vmatpush.msra.mxu0 %v691
    %790 = vmatpush.msra.mxu0 %v688
    %791 = vmatpush.msra.mxu0 %v685
    %792 = vmatpush.msra.mxu0 %v682
    %793 = vmatpush.msra.mxu0 %v679
    %794 = vmatpush.msra.mxu0 %v676
    %795 = vmatpush.msra.mxu0 %v673
    %796 = vmatpush.msra.mxu0 %v670
    %797 = vmatpush.msra.mxu0 %v667
    %798 = vmatpush.msra.mxu0 %v664
    %799 = vmatpush.msra.mxu0 %v661
    %800 = vmatpush.msra.mxu0 %v658
    %801 = vmatpush.msra.mxu0 %v655
    %802 = vmatmul.f32.gmra.mxu0 %v785
    %v803 = vpop.f32.mrf.mxu0
    %v804 = vadd.f32 0.0, %v803
    %805 = vdwg.mxu0
    %806 = vmatpush.msra.mxu0 %v701
    %807 = vmatpush.msra.mxu0 %v698
    %808 = vmatpush.msra.mxu0 %v695
    %809 = vmatpush.msra.mxu0 %v692
    %810 = vmatpush.msra.mxu0 %v689
    %811 = vmatpush.msra.mxu0 %v686
    %812 = vmatpush.msra.mxu0 %v683
    %813 = vmatpush.msra.mxu0 %v680
    %814 = vmatpush.msra.mxu0 %v677
    %815 = vmatpush.msra.mxu0 %v674
    %816 = vmatpush.msra.mxu0 %v671
    %817 = vmatpush.msra.mxu0 %v668
    %818 = vmatpush.msra.mxu0 %v665
    %819 = vmatpush.msra.mxu0 %v662
    %820 = vmatpush.msra.mxu0 %v659
    %821 = vmatpush.msra.mxu0 %v656
    %822 = vmatmul.f32.gmra.mxu0 %v785
    %v823 = vpop.f32.mrf.mxu0
    %v824 = vadd.f32 0.0, %v823
    %825 = vdwg.mxu0
    %826 = vmatpush.msra.mxu0 %v702
    %827 = vmatpush.msra.mxu0 %v699
    %828 = vmatpush.msra.mxu0 %v696
    %829 = vmatpush.msra.mxu0 %v693
    %830 = vmatpush.msra.mxu0 %v690
    %831 = vmatpush.msra.mxu0 %v687
    %832 = vmatpush.msra.mxu0 %v684
    %833 = vmatpush.msra.mxu0 %v681
    %834 = vmatpush.msra.mxu0 %v678
    %835 = vmatpush.msra.mxu0 %v675
    %836 = vmatpush.msra.mxu0 %v672
    %837 = vmatpush.msra.mxu0 %v669
    %838 = vmatpush.msra.mxu0 %v666
    %839 = vmatpush.msra.mxu0 %v663
    %840 = vmatpush.msra.mxu0 %v660
    %841 = vmatpush.msra.mxu0 %v657
    %842 = vmatmul.f32.gmra.mxu0 %v785
    %v843 = vpop.f32.mrf.mxu0
    %v844 = vadd.f32 0.0, %v843
    %845 = vdwg.mxu0
    %v846 = vadd.f32 %v634, %v804
    %v847 = vadd.f32 %v635, %v824
    %v848 = vmul.f32 %v846, 0.5
    %v849 = vmul.f32 %v847, 0.5
    %v850 = vtanh.pop %v848
    %v851 = vtanh.pop %v849
    %v852 = vmul.f32 %v850, 0.5
    %v853 = vmul.f32 %v851, 0.5
    %v854 = vadd.f32 %v852, 0.5
    %v855 = vadd.f32 %v853, 0.5
    %v856 = vadd.f32 %v844, %v776
    %v857 = vmul.f32 %v854, %v856
    %v858 = vadd.f32 %v636, %v857
    %v859 = vtanh.pop %v858
    %v860 = vsub.f32 1.0, %v855
    %v861 = vmul.f32 %v860, %v859
    %v862 = vmul.f32 %v855, %v785
    %v863 = vadd.f32 %v861, %v862
    %864 = vmatpush.msra.mxu0 %v700
    %865 = vmatpush.msra.mxu0 %v697
    %866 = vmatpush.msra.mxu0 %v694
    %867 = vmatpush.msra.mxu0 %v691
    %868 = vmatpush.msra.mxu0 %v688
    %869 = vmatpush.msra.mxu0 %v685
    %870 = vmatpush.msra.mxu0 %v682
    %871 = vmatpush.msra.mxu0 %v679
    %872 = vmatpush.msra.mxu0 %v676
    %873 = vmatpush.msra.mxu0 %v673
    %874 = vmatpush.msra.mxu0 %v670
    %875 = vmatpush.msra.mxu0 %v667
    %876 = vmatpush.msra.mxu0 %v664
    %877 = vmatpush.msra.mxu0 %v661
    %878 = vmatpush.msra.mxu0 %v658
    %879 = vmatpush.msra.mxu0 %v655
    %880 = vmatmul.f32.gmra.mxu0 %v863
    %v881 = vpop.f32.mrf.mxu0
    %v882 = vadd.f32 0.0, %v881
    %883 = vdwg.mxu0
    %884 = vmatpush.msra.mxu0 %v701
    %885 = vmatpush.msra.mxu0 %v698
    %886 = vmatpush.msra.mxu0 %v695
    %887 = vmatpush.msra.mxu0 %v692
    %888 = vmatpush.msra.mxu0 %v689
    %889 = vmatpush.msra.mxu0 %v686
    %890 = vmatpush.msra.mxu0 %v683
    %891 = vmatpush.msra.mxu0 %v680
    %892 = vmatpush.msra.mxu0 %v677
    %893 = vmatpush.msra.mxu0 %v674
    %894 = vmatpush.msra.mxu0 %v671
    %895 = vmatpush.msra.mxu0 %v668
    %896 = vmatpush.msra.mxu0 %v665
    %897 = vmatpush.msra.mxu0 %v662
    %898 = vmatpush.msra.mxu0 %v659
    %899 = vmatpush.msra.mxu0 %v656
    %900 = vmatmul.f32.gmra.mxu0 %v863
    %v901 = vpop.f32.mrf.mxu0
    %v902 = vadd.f32 0.0, %v901
    %903 = vdwg.mxu0
    %904 = vmatpush.msra.mxu0 %v702
    %905 = vmatpush.msra.mxu0 %v699
    %906 = vmatpush.msra.mxu0 %v696
    %907 = vmatpush.msra.mxu0 %v693
    %908 = vmatpush.msra.mxu0 %v690
    %909 = vmatpush.msra.mxu0 %v687
    %910 = vmatpush.msra.mxu0 %v684
    %911 = vmatpush.msra.mxu0 %v681
    %912 = vmatpush.msra.mxu0 %v678
    %913 = vmatpush.msra.mxu0 %v675
    %914 = vmatpush.msra.mxu0 %v672
    %915 = vmatpush.msra.mxu0 %v669
    %916 = vmatpush.msra.mxu0 %v666
    %917 = vmatpush.msra.mxu0 %v663
    %918 = vmatpush.msra.mxu0 %v660
    %919 = vmatpush.msra.mxu0 %v657
    %920 = vmatmul.f32.gmra.mxu0 %v863
    %v921 = vpop.f32.mrf.mxu0
    %v922 = vadd.f32 0.0, %v921
    %923 = vdwg.mxu0
    %v924 = vadd.f32 %v637, %v882
    %v925 = vadd.f32 %v638, %v902
    %v926 = vmul.f32 %v924, 0.5
    %v927 = vmul.f32 %v925, 0.5
    %v928 = vtanh.pop %v926
    %v929 = vtanh.pop %v927
    %v930 = vmul.f32 %v928, 0.5
    %v931 = vmul.f32 %v929, 0.5
    %v932 = vadd.f32 %v930, 0.5
    %v933 = vadd.f32 %v931, 0.5
    %v934 = vadd.f32 %v922, %v776
    %v935 = vmul.f32 %v932, %v934
    %v936 = vadd.f32 %v639, %v935
    %v937 = vtanh.pop %v936
    %v938 = vsub.f32 1.0, %v933
    %v939 = vmul.f32 %v938, %v937
    %v940 = vmul.f32 %v933, %v863
    %v941 = vadd.f32 %v939, %v940
    %942 = vmatpush.msra.mxu0 %v700
    %943 = vmatpush.msra.mxu0 %v697
    %944 = vmatpush.msra.mxu0 %v694
    %945 = vmatpush.msra.mxu0 %v691
    %946 = vmatpush.msra.mxu0 %v688
    %947 = vmatpush.msra.mxu0 %v685
    %948 = vmatpush.msra.mxu0 %v682
    %949 = vmatpush.msra.mxu0 %v679
    %950 = vmatpush.msra.mxu0 %v676
    %951 = vmatpush.msra.mxu0 %v673
    %952 = vmatpush.msra.mxu0 %v670
    %953 = vmatpush.msra.mxu0 %v667
    %954 = vmatpush.msra.mxu0 %v664
    %955 = vmatpush.msra.mxu0 %v661
    %956 = vmatpush.msra.mxu0 %v658
    %957 = vmatpush.msra.mxu0 %v655
    %958 = vmatmul.f32.gmra.mxu0 %v941
    %v959 = vpop.f32.mrf.mxu0
    %v960 = vadd.f32 0.0, %v959
    %961 = vdwg.mxu0
    %962 = vmatpush.msra.mxu0 %v701
    %963 = vmatpush.msra.mxu0 %v698
    %964 = vmatpush.msra.mxu0 %v695
    %965 = vmatpush.msra.mxu0 %v692
    %966 = vmatpush.msra.mxu0 %v689
    %967 = vmatpush.msra.mxu0 %v686
    %968 = vmatpush.msra.mxu0 %v683
    %969 = vmatpush.msra.mxu0 %v680
    %970 = vmatpush.msra.mxu0 %v677
    %971 = vmatpush.msra.mxu0 %v674
    %972 = vmatpush.msra.mxu0 %v671
    %973 = vmatpush.msra.mxu0 %v668
    %974 = vmatpush.msra.mxu0 %v665
    %975 = vmatpush.msra.mxu0 %v662
    %976 = vmatpush.msra.mxu0 %v659
    %977 = vmatpush.msra.mxu0 %v656
    %978 = vmatmul.f32.gmra.mxu0 %v941
    %v979 = vpop.f32.mrf.mxu0
    %v980 = vadd.f32 0.0, %v979
    %981 = vdwg.mxu0
    %982 = vmatpush.msra.mxu0 %v702
    %983 = vmatpush.msra.mxu0 %v699
    %984 = vmatpush.msra.mxu0 %v696
    %985 = vmatpush.msra.mxu0 %v693
    %986 = vmatpush.msra.mxu0 %v690
    %987 = vmatpush.msra.mxu0 %v687
    %988 = vmatpush.msra.mxu0 %v684
    %989 = vmatpush.msra.mxu0 %v681
    %990 = vmatpush.msra.mxu0 %v678
    %991 = vmatpush.msra.mxu0 %v675
    %992 = vmatpush.msra.mxu0 %v672
    %993 = vmatpush.msra.mxu0 %v669
    %994 = vmatpush.msra.mxu0 %v666
    %995 = vmatpush.msra.mxu0 %v663
    %996 = vmatpush.msra.mxu0 %v660
    %997 = vmatpush.msra.mxu0 %v657
    %998 = vmatmul.f32.gmra.mxu0 %v941
    %v999 = vpop.f32.mrf.mxu0
    %v1000 = vadd.f32 0.0, %v999
    %1001 = vdwg.mxu0
    %v1002 = vadd.f32 %v640, %v960
    %v1003 = vadd.f32 %v641, %v980
    %v1004 = vmul.f32 %v1002, 0.5
    %v1005 = vmul.f32 %v1003, 0.5
    %v1006 = vtanh.pop %v1004
    %v1007 = vtanh.pop %v1005
    %v1008 = vmul.f32 %v1006, 0.5
    %v1009 = vmul.f32 %v1007, 0.5
    %v1010 = vadd.f32 %v1008, 0.5
    %v1011 = vadd.f32 %v1009, 0.5
    %v1012 = vadd.f32 %v1000, %v776
    %v1013 = vmul.f32 %v1010, %v1012
    %v1014 = vadd.f32 %v642, %v1013
    %v1015 = vtanh.pop %v1014
    %v1016 = vsub.f32 1.0, %v1011
    %v1017 = vmul.f32 %v1016, %v1015
    %v1018 = vmul.f32 %v1011, %v941
    %v1019 = vadd.f32 %v1017, %v1018
    %1020 = vmatpush.msra.mxu0 %v700
    %1021 = vmatpush.msra.mxu0 %v697
    %1022 = vmatpush.msra.mxu0 %v694
    %1023 = vmatpush.msra.mxu0 %v691
    %1024 = vmatpush.msra.mxu0 %v688
    %1025 = vmatpush.msra.mxu0 %v685
    %1026 = vmatpush.msra.mxu0 %v682
    %1027 = vmatpush.msra.mxu0 %v679
    %1028 = vmatpush.msra.mxu0 %v676
    %1029 = vmatpush.msra.mxu0 %v673
    %1030 = vmatpush.msra.mxu0 %v670
    %1031 = vmatpush.msra.mxu0 %v667
    %1032 = vmatpush.msra.mxu0 %v664
    %1033 = vmatpush.msra.mxu0 %v661
    %1034 = vmatpush.msra.mxu0 %v658
    %1035 = vmatpush.msra.mxu0 %v655
    %1036 = vmatmul.f32.gmra.mxu0 %v1019
    %v1037 = vpop.f32.mrf.mxu0
    %v1038 = vadd.f32 0.0, %v1037
    %1039 = vdwg.mxu0
    %1040 = vmatpush.msra.mxu0 %v701
    %1041 = vmatpush.msra.mxu0 %v698
    %1042 = vmatpush.msra.mxu0 %v695
    %1043 = vmatpush.msra.mxu0 %v692
    %1044 = vmatpush.msra.mxu0 %v689
    %1045 = vmatpush.msra.mxu0 %v686
    %1046 = vmatpush.msra.mxu0 %v683
    %1047 = vmatpush.msra.mxu0 %v680
    %1048 = vmatpush.msra.mxu0 %v677
    %1049 = vmatpush.msra.mxu0 %v674
    %1050 = vmatpush.msra.mxu0 %v671
    %1051 = vmatpush.msra.mxu0 %v668
    %1052 = vmatpush.msra.mxu0 %v665
    %1053 = vmatpush.msra.mxu0 %v662
    %1054 = vmatpush.msra.mxu0 %v659
    %1055 = vmatpush.msra.mxu0 %v656
    %1056 = vmatmul.f32.gmra.mxu0 %v1019
    %v1057 = vpop.f32.mrf.mxu0
    %v1058 = vadd.f32 0.0, %v1057
    %1059 = vdwg.mxu0
    %1060 = vmatpush.msra.mxu0 %v702
    %1061 = vmatpush.msra.mxu0 %v699
    %1062 = vmatpush.msra.mxu0 %v696
    %1063 = vmatpush.msra.mxu0 %v693
    %1064 = vmatpush.msra.mxu0 %v690
    %1065 = vmatpush.msra.mxu0 %v687
    %1066 = vmatpush.msra.mxu0 %v684
    %1067 = vmatpush.msra.mxu0 %v681
    %1068 = vmatpush.msra.mxu0 %v678
    %1069 = vmatpush.msra.mxu0 %v675
    %1070 = vmatpush.msra.mxu0 %v672
    %1071 = vmatpush.msra.mxu0 %v669
    %1072 = vmatpush.msra.mxu0 %v666
    %1073 = vmatpush.msra.mxu0 %v663
    %1074 = vmatpush.msra.mxu0 %v660
    %1075 = vmatpush.msra.mxu0 %v657
    %1076 = vmatmul.f32.gmra.mxu0 %v1019
    %v1077 = vpop.f32.mrf.mxu0
    %v1078 = vadd.f32 0.0, %v1077
    %1079 = vdwg.mxu0
    %v1080 = vadd.f32 %v643, %v1038
    %v1081 = vadd.f32 %v644, %v1058
    %v1082 = vmul.f32 %v1080, 0.5
    %v1083 = vmul.f32 %v1081, 0.5
    %v1084 = vtanh.pop %v1082
    %v1085 = vtanh.pop %v1083
    %v1086 = vmul.f32 %v1084, 0.5
    %v1087 = vmul.f32 %v1085, 0.5
    %v1088 = vadd.f32 %v1086, 0.5
    %v1089 = vadd.f32 %v1087, 0.5
    %v1090 = vadd.f32 %v1078, %v776
    %v1091 = vmul.f32 %v1088, %v1090
    %v1092 = vadd.f32 %v645, %v1091
    %v1093 = vtanh.pop %v1092
    %v1094 = vsub.f32 1.0, %v1089
    %v1095 = vmul.f32 %v1094, %v1093
    %v1096 = vmul.f32 %v1089, %v1019
    %v1097 = vadd.f32 %v1095, %v1096
    %1098 = vmatpush.msra.mxu0 %v700
    %1099 = vmatpush.msra.mxu0 %v697
    %1100 = vmatpush.msra.mxu0 %v694
    %1101 = vmatpush.msra.mxu0 %v691
    %1102 = vmatpush.msra.mxu0 %v688
    %1103 = vmatpush.msra.mxu0 %v685
    %1104 = vmatpush.msra.mxu0 %v682
    %1105 = vmatpush.msra.mxu0 %v679
    %1106 = vmatpush.msra.mxu0 %v676
    %1107 = vmatpush.msra.mxu0 %v673
    %1108 = vmatpush.msra.mxu0 %v670
    %1109 = vmatpush.msra.mxu0 %v667
    %1110 = vmatpush.msra.mxu0 %v664
    %1111 = vmatpush.msra.mxu0 %v661
    %1112 = vmatpush.msra.mxu0 %v658
    %1113 = vmatpush.msra.mxu0 %v655
    %1114 = vmatmul.f32.gmra.mxu0 %v1097
    %v1115 = vpop.f32.mrf.mxu0
    %v1116 = vadd.f32 0.0, %v1115
    %1117 = vdwg.mxu0
    %1118 = vmatpush.msra.mxu0 %v701
    %1119 = vmatpush.msra.mxu0 %v698
    %1120 = vmatpush.msra.mxu0 %v695
    %1121 = vmatpush.msra.mxu0 %v692
    %1122 = vmatpush.msra.mxu0 %v689
    %1123 = vmatpush.msra.mxu0 %v686
    %1124 = vmatpush.msra.mxu0 %v683
    %1125 = vmatpush.msra.mxu0 %v680
    %1126 = vmatpush.msra.mxu0 %v677
    %1127 = vmatpush.msra.mxu0 %v674
    %1128 = vmatpush.msra.mxu0 %v671
    %1129 = vmatpush.msra.mxu0 %v668
    %1130 = vmatpush.msra.mxu0 %v665
    %1131 = vmatpush.msra.mxu0 %v662
    %1132 = vmatpush.msra.mxu0 %v659
    %1133 = vmatpush.msra.mxu0 %v656
    %1134 = vmatmul.f32.gmra.mxu0 %v1097
    %v1135 = vpop.f32.mrf.mxu0
    %v1136 = vadd.f32 0.0, %v1135
    %1137 = vdwg.mxu0
    %1138 = vmatpush.msra.mxu0 %v702
    %1139 = vmatpush.msra.mxu0 %v699
    %1140 = vmatpush.msra.mxu0 %v696
    %1141 = vmatpush.msra.mxu0 %v693
    %1142 = vmatpush.msra.mxu0 %v690
    %1143 = vmatpush.msra.mxu0 %v687
    %1144 = vmatpush.msra.mxu0 %v684
    %1145 = vmatpush.msra.mxu0 %v681
    %1146 = vmatpush.msra.mxu0 %v678
    %1147 = vmatpush.msra.mxu0 %v675
    %1148 = vmatpush.msra.mxu0 %v672
    %1149 = vmatpush.msra.mxu0 %v669
    %1150 = vmatpush.msra.mxu0 %v666
    %1151 = vmatpush.msra.mxu0 %v663
    %1152 = vmatpush.msra.mxu0 %v660
    %1153 = vmatpush.msra.mxu0 %v657
    %1154 = vmatmul.f32.gmra.mxu0 %v1097
    %v1155 = vpop.f32.mrf.mxu0
    %v1156 = vadd.f32 0.0, %v1155
    %1157 = vdwg.mxu0
    %v1158 = vadd.f32 %v646, %v1116
    %v1159 = vadd.f32 %v647, %v1136
    %v1160 = vmul.f32 %v1158, 0.5
    %v1161 = vmul.f32 %v1159, 0.5
    %v1162 = vtanh.pop %v1160
    %v1163 = vtanh.pop %v1161
    %v1164 = vmul.f32 %v1162, 0.5
    %v1165 = vmul.f32 %v1163, 0.5
    %v1166 = vadd.f32 %v1164, 0.5
    %v1167 = vadd.f32 %v1165, 0.5
    %v1168 = vadd.f32 %v1156, %v776
    %v1169 = vmul.f32 %v1166, %v1168
    %v1170 = vadd.f32 %v648, %v1169
    %v1171 = vtanh.pop %v1170
    %v1172 = vsub.f32 1.0, %v1167
    %v1173 = vmul.f32 %v1172, %v1171
    %v1174 = vmul.f32 %v1167, %v1097
    %v1175 = vadd.f32 %v1173, %v1174
    %1176 = vmatpush.msra.mxu0 %v700
    %1177 = vmatpush.msra.mxu0 %v697
    %1178 = vmatpush.msra.mxu0 %v694
    %1179 = vmatpush.msra.mxu0 %v691
    %1180 = vmatpush.msra.mxu0 %v688
    %1181 = vmatpush.msra.mxu0 %v685
    %1182 = vmatpush.msra.mxu0 %v682
    %1183 = vmatpush.msra.mxu0 %v679
    %1184 = vmatpush.msra.mxu0 %v676
    %1185 = vmatpush.msra.mxu0 %v673
    %1186 = vmatpush.msra.mxu0 %v670
    %1187 = vmatpush.msra.mxu0 %v667
    %1188 = vmatpush.msra.mxu0 %v664
    %1189 = vmatpush.msra.mxu0 %v661
    %1190 = vmatpush.msra.mxu0 %v658
    %1191 = vmatpush.msra.mxu0 %v655
    %1192 = vmatmul.f32.gmra.mxu0 %v1175
    %v1193 = vpop.f32.mrf.mxu0
    %v1194 = vadd.f32 0.0, %v1193
    %1195 = vdwg.mxu0
    %1196 = vmatpush.msra.mxu0 %v701
    %1197 = vmatpush.msra.mxu0 %v698
    %1198 = vmatpush.msra.mxu0 %v695
    %1199 = vmatpush.msra.mxu0 %v692
    %1200 = vmatpush.msra.mxu0 %v689
    %1201 = vmatpush.msra.mxu0 %v686
    %1202 = vmatpush.msra.mxu0 %v683
    %1203 = vmatpush.msra.mxu0 %v680
    %1204 = vmatpush.msra.mxu0 %v677
    %1205 = vmatpush.msra.mxu0 %v674
    %1206 = vmatpush.msra.mxu0 %v671
    %1207 = vmatpush.msra.mxu0 %v668
    %1208 = vmatpush.msra.mxu0 %v665
    %1209 = vmatpush.msra.mxu0 %v662
    %1210 = vmatpush.msra.mxu0 %v659
    %1211 = vmatpush.msra.mxu0 %v656
    %1212 = vmatmul.f32.gmra.mxu0 %v1175
    %v1213 = vpop.f32.mrf.mxu0
    %v1214 = vadd.f32 0.0, %v1213
    %1215 = vdwg.mxu0
    %1216 = vmatpush.msra.mxu0 %v702
    %1217 = vmatpush.msra.mxu0 %v699
    %1218 = vmatpush.msra.mxu0 %v696
    %1219 = vmatpush.msra.mxu0 %v693
    %1220 = vmatpush.msra.mxu0 %v690
    %1221 = vmatpush.msra.mxu0 %v687
    %1222 = vmatpush.msra.mxu0 %v684
    %1223 = vmatpush.msra.mxu0 %v681
    %1224 = vmatpush.msra.mxu0 %v678
    %1225 = vmatpush.msra.mxu0 %v675
    %1226 = vmatpush.msra.mxu0 %v672
    %1227 = vmatpush.msra.mxu0 %v669
    %1228 = vmatpush.msra.mxu0 %v666
    %1229 = vmatpush.msra.mxu0 %v663
    %1230 = vmatpush.msra.mxu0 %v660
    %1231 = vmatpush.msra.mxu0 %v657
    %1232 = vmatmul.f32.gmra.mxu0 %v1175
    %v1233 = vpop.f32.mrf.mxu0
    %v1234 = vadd.f32 0.0, %v1233
    %1235 = vdwg.mxu0
    %v1236 = vadd.f32 %v649, %v1194
    %v1237 = vadd.f32 %v650, %v1214
    %v1238 = vmul.f32 %v1236, 0.5
    %v1239 = vmul.f32 %v1237, 0.5
    %v1240 = vtanh.pop %v1238
    %v1241 = vtanh.pop %v1239
    %v1242 = vmul.f32 %v1240, 0.5
    %v1243 = vmul.f32 %v1241, 0.5
    %v1244 = vadd.f32 %v1242, 0.5
    %v1245 = vadd.f32 %v1243, 0.5
    %v1246 = vadd.f32 %v1234, %v776
    %v1247 = vmul.f32 %v1244, %v1246
    %v1248 = vadd.f32 %v651, %v1247
    %v1249 = vtanh.pop %v1248
    %v1250 = vsub.f32 1.0, %v1245
    %v1251 = vmul.f32 %v1250, %v1249
    %v1252 = vmul.f32 %v1245, %v1175
    %v1253 = vadd.f32 %v1251, %v1252
    %1254 = vmatpush.msra.mxu0 %v700
    %1255 = vmatpush.msra.mxu0 %v697
    %1256 = vmatpush.msra.mxu0 %v694
    %1257 = vmatpush.msra.mxu0 %v691
    %1258 = vmatpush.msra.mxu0 %v688
    %1259 = vmatpush.msra.mxu0 %v685
    %1260 = vmatpush.msra.mxu0 %v682
    %1261 = vmatpush.msra.mxu0 %v679
    %1262 = vmatpush.msra.mxu0 %v676
    %1263 = vmatpush.msra.mxu0 %v673
    %1264 = vmatpush.msra.mxu0 %v670
    %1265 = vmatpush.msra.mxu0 %v667
    %1266 = vmatpush.msra.mxu0 %v664
    %1267 = vmatpush.msra.mxu0 %v661
    %1268 = vmatpush.msra.mxu0 %v658
    %1269 = vmatpush.msra.mxu0 %v655
    %1270 = vmatmul.f32.gmra.mxu0 %v1253
    %v1271 = vpop.f32.mrf.mxu0
    %v1272 = vadd.f32 0.0, %v1271
    %1273 = vdwg.mxu0
    %1274 = vmatpush.msra.mxu0 %v701
    %1275 = vmatpush.msra.mxu0 %v698
    %1276 = vmatpush.msra.mxu0 %v695
    %1277 = vmatpush.msra.mxu0 %v692
    %1278 = vmatpush.msra.mxu0 %v689
    %1279 = vmatpush.msra.mxu0 %v686
    %1280 = vmatpush.msra.mxu0 %v683
    %1281 = vmatpush.msra.mxu0 %v680
    %1282 = vmatpush.msra.mxu0 %v677
    %1283 = vmatpush.msra.mxu0 %v674
    %1284 = vmatpush.msra.mxu0 %v671
    %1285 = vmatpush.msra.mxu0 %v668
    %1286 = vmatpush.msra.mxu0 %v665
    %1287 = vmatpush.msra.mxu0 %v662
    %1288 = vmatpush.msra.mxu0 %v659
    %1289 = vmatpush.msra.mxu0 %v656
    %1290 = vmatmul.f32.gmra.mxu0 %v1253
    %v1291 = vpop.f32.mrf.mxu0
    %v1292 = vadd.f32 0.0, %v1291
    %1293 = vdwg.mxu0
    %1294 = vmatpush.msra.mxu0 %v702
    %1295 = vmatpush.msra.mxu0 %v699
    %1296 = vmatpush.msra.mxu0 %v696
    %1297 = vmatpush.msra.mxu0 %v693
    %1298 = vmatpush.msra.mxu0 %v690
    %1299 = vmatpush.msra.mxu0 %v687
    %1300 = vmatpush.msra.mxu0 %v684
    %1301 = vmatpush.msra.mxu0 %v681
    %1302 = vmatpush.msra.mxu0 %v678
    %1303 = vmatpush.msra.mxu0 %v675
    %1304 = vmatpush.msra.mxu0 %v672
    %1305 = vmatpush.msra.mxu0 %v669
    %1306 = vmatpush.msra.mxu0 %v666
    %1307 = vmatpush.msra.mxu0 %v663
    %1308 = vmatpush.msra.mxu0 %v660
    %1309 = vmatpush.msra.mxu0 %v657
    %1310 = vmatmul.f32.gmra.mxu0 %v1253
    %v1311 = vpop.f32.mrf.mxu0
    %v1312 = vadd.f32 0.0, %v1311
    %1313 = vdwg.mxu0
    %v1314 = vadd.f32 %v652, %v1272
    %v1315 = vadd.f32 %v653, %v1292
    %v1316 = vmul.f32 %v1314, 0.5
    %v1317 = vmul.f32 %v1315, 0.5
    %v1318 = vtanh.pop %v1316
    %v1319 = vtanh.pop %v1317
    %v1320 = vmul.f32 %v1318, 0.5
    %v1321 = vmul.f32 %v1319, 0.5
    %v1322 = vadd.f32 %v1320, 0.5
    %v1323 = vadd.f32 %v1321, 0.5
    %v1324 = vadd.f32 %v1312, %v776
    %v1325 = vmul.f32 %v1322, %v1324
    %v1326 = vadd.f32 %v654, %v1325
    %v1327 = vtanh.pop %v1326
    %v1328 = vsub.f32 1.0, %v1323
    %v1329 = vmul.f32 %v1328, %v1327
    %v1330 = vmul.f32 %v1323, %v1253
    %v1331 = vadd.f32 %v1329, %v1330
    %1332 = vst [vmem:[%s18] sm:$0xff] %v1331
    %v1333 = vld [vmem:[#allocation4] sm:$0xff]
    %v1334 = vld [vmem:[#allocation4 + $0x8] sm:$0xff]
    %v1335 = vld [vmem:[#allocation4 + $0x10] sm:$0xff]
    %v1336 = vld [vmem:[#allocation4 + $0x18] sm:$0xff]
    %v1337 = vld [vmem:[#allocation4 + $0x20] sm:$0xff]
    %v1338 = vld [vmem:[#allocation4 + $0x28] sm:$0xff]
    %v1339 = vld [vmem:[#allocation4 + $0x30] sm:$0xff]
    %v1340 = vld [vmem:[#allocation4 + $0x38] sm:$0xff]
    %v1341 = vld [vmem:[#allocation4 + $0x40] sm:$0xff]
    %v1342 = vld [vmem:[#allocation4 + $0x48] sm:$0xff]
    %v1343 = vld [vmem:[#allocation4 + $0x50] sm:$0xff]
    %v1344 = vld [vmem:[#allocation4 + $0x58] sm:$0xff]
    %v1345 = vld [vmem:[#allocation4 + $0x60] sm:$0xff]
    %v1346 = vld [vmem:[#allocation4 + $0x68] sm:$0xff]
    %v1347 = vld [vmem:[#allocation4 + $0x70] sm:$0xff]
    %v1348 = vld [vmem:[#allocation4 + $0x78] sm:$0xff]
    %v1349 = vld [vmem:[#allocation4 + $0x80] sm:$0xff]
    %v1350 = vld [vmem:[#allocation4 + $0x88] sm:$0xff]
    %v1351 = vld [vmem:[#allocation4 + $0x90] sm:$0xff]
    %v1352 = vld [vmem:[#allocation4 + $0x98] sm:$0xff]
    %v1353 = vld [vmem:[#allocation4 + $0xa0] sm:$0xff]
    %v1354 = vld [vmem:[#allocation4 + $0xa8] sm:$0xff]
    %v1355 = vld [vmem:[#allocation4 + $0xb0] sm:$0xff]
    %v1356 = vld [vmem:[#allocation4 + $0xb8] sm:$0xff]
    %v1357 = vld [vmem:[#allocation4 + $0xc0] sm:$0xff]
    %v1358 = vld [vmem:[#allocation4 + $0xc8] sm:$0xff]
    %v1359 = vld [vmem:[#allocation4 + $0xd0] sm:$0xff]
    %v1360 = vld [vmem:[#allocation4 + $0xd8] sm:$0xff]
    %v1361 = vld [vmem:[#allocation4 + $0xe0] sm:$0xff]
    %v1362 = vld [vmem:[#allocation4 + $0xe8] sm:$0xff]
    %v1363 = vld [vmem:[#allocation4 + $0xf0] sm:$0xff]
    %v1364 = vld [vmem:[#allocation4 + $0xf8] sm:$0xff]
    %v1365 = vld [vmem:[#allocation4 + $0x100] sm:$0xff]
    %v1366 = vld [vmem:[#allocation4 + $0x108] sm:$0xff]
    %v1367 = vld [vmem:[#allocation4 + $0x110] sm:$0xff]
    %v1368 = vld [vmem:[#allocation4 + $0x118] sm:$0xff]
    %v1369 = vld [vmem:[#allocation4 + $0x120] sm:$0xff]
    %v1370 = vld [vmem:[#allocation4 + $0x128] sm:$0xff]
    %v1371 = vld [vmem:[#allocation4 + $0x130] sm:$0xff]
    %v1372 = vld [vmem:[#allocation4 + $0x138] sm:$0xff]
    %v1373 = vld [vmem:[#allocation4 + $0x140] sm:$0xff]
    %v1374 = vld [vmem:[#allocation4 + $0x148] sm:$0xff]
    %v1375 = vld [vmem:[#allocation4 + $0x150] sm:$0xff]
    %v1376 = vld [vmem:[#allocation4 + $0x158] sm:$0xff]
    %v1377 = vld [vmem:[#allocation4 + $0x160] sm:$0xff]
    %v1378 = vld [vmem:[#allocation4 + $0x168] sm:$0xff]
    %v1379 = vld [vmem:[#allocation4 + $0x170] sm:$0xff]
    %v1380 = vld [vmem:[#allocation4 + $0x178] sm:$0xff]
    %v1381 = vld [vmem:[%s13] sm:$0x7]
    %v1383 = vperm.slane %v1381, 0
    %v1384 = vperm.slane %v1381, 1
    %v1385 = vperm.slane %v1381, 2
    %1389 = vmatpush.msra.mxu0 %v1378
    %1390 = vmatpush.msra.mxu0 %v1375
    %1391 = vmatpush.msra.mxu0 %v1372
    %1392 = vmatpush.msra.mxu0 %v1369
    %1393 = vmatpush.msra.mxu0 %v1366
    %1394 = vmatpush.msra.mxu0 %v1363
    %1395 = vmatpush.msra.mxu0 %v1360
    %1396 = vmatpush.msra.mxu0 %v1357
    %1397 = vmatpush.msra.mxu0 %v1354
    %1398 = vmatpush.msra.mxu0 %v1351
    %1399 = vmatpush.msra.mxu0 %v1348
    %1400 = vmatpush.msra.mxu0 %v1345
    %1401 = vmatpush.msra.mxu0 %v1342
    %1402 = vmatpush.msra.mxu0 %v1339
    %1403 = vmatpush.msra.mxu0 %v1336
    %1404 = vmatpush.msra.mxu0 %v1333
    %1405 = vmatmul.f32.gmra.mxu0 %v785
    %v1406 = vpop.f32.mrf.mxu0
    %v1407 = vadd.f32 %v1383, %v1406
    %1408 = vmatmul.f32.gmra.mxu0 %v863
    %v1409 = vpop.f32.mrf.mxu0
    %v1410 = vadd.f32 %v1383, %v1409
    %1411 = vmatmul.f32.gmra.mxu0 %v941
    %v1412 = vpop.f32.mrf.mxu0
    %v1413 = vadd.f32 %v1383, %v1412
    %1414 = vmatmul.f32.gmra.mxu0 %v1019
    %v1415 = vpop.f32.mrf.mxu0
    %v1416 = vadd.f32 %v1383, %v1415
    %1417 = vmatmul.f32.gmra.mxu0 %v1097
    %v1418 = vpop.f32.mrf.mxu0
    %v1419 = vadd.f32 %v1383, %v1418
    %1420 = vmatmul.f32.gmra.mxu0 %v1175
    %v1421 = vpop.f32.mrf.mxu0
    %v1422 = vadd.f32 %v1383, %v1421
    %1423 = vmatmul.f32.gmra.mxu0 %v1253
    %v1424 = vpop.f32.mrf.mxu0
    %v1425 = vadd.f32 %v1383, %v1424
    %1426 = vmatmul.f32.gmra.mxu0 %v1331
    %v1427 = vpop.f32.mrf.mxu0
    %v1428 = vadd.f32 %v1383, %v1427
    %1429 = vdwg.mxu0
    %1430 = vmatpush.msra.mxu0 %v1379
    %1431 = vmatpush.msra.mxu0 %v1376
    %1432 = vmatpush.msra.mxu0 %v1373
    %1433 = vmatpush.msra.mxu0 %v1370
    %1434 = vmatpush.msra.mxu0 %v1367
    %1435 = vmatpush.msra.mxu0 %v1364
    %1436 = vmatpush.msra.mxu0 %v1361
    %1437 = vmatpush.msra.mxu0 %v1358
    %1438 = vmatpush.msra.mxu0 %v1355
    %1439 = vmatpush.msra.mxu0 %v1352
    %1440 = vmatpush.msra.mxu0 %v1349
    %1441 = vmatpush.msra.mxu0 %v1346
    %1442 = vmatpush.msra.mxu0 %v1343
    %1443 = vmatpush.msra.mxu0 %v1340
    %1444 = vmatpush.msra.mxu0 %v1337
    %1445 = vmatpush.msra.mxu0 %v1334
    %1446 = vmatmul.f32.gmra.mxu0 %v785
    %v1447 = vpop.f32.mrf.mxu0
    %v1448 = vadd.f32 %v1384, %v1447
    %1449 = vmatmul.f32.gmra.mxu0 %v863
    %v1450 = vpop.f32.mrf.mxu0
    %v1451 = vadd.f32 %v1384, %v1450
    %1452 = vmatmul.f32.gmra.mxu0 %v941
    %v1453 = vpop.f32.mrf.mxu0
    %v1454 = vadd.f32 %v1384, %v1453
    %1455 = vmatmul.f32.gmra.mxu0 %v1019
    %v1456 = vpop.f32.mrf.mxu0
    %v1457 = vadd.f32 %v1384, %v1456
    %1458 = vmatmul.f32.gmra.mxu0 %v1097
    %v1459 = vpop.f32.mrf.mxu0
    %v1460 = vadd.f32 %v1384, %v1459
    %1461 = vmatmul.f32.gmra.mxu0 %v1175
    %v1462 = vpop.f32.mrf.mxu0
    %v1463 = vadd.f32 %v1384, %v1462
    %1464 = vmatmul.f32.gmra.mxu0 %v1253
    %v1465 = vpop.f32.mrf.mxu0
    %v1466 = vadd.f32 %v1384, %v1465
    %1467 = vmatmul.f32.gmra.mxu0 %v1331
    %v1468 = vpop.f32.mrf.mxu0
    %v1469 = vadd.f32 %v1384, %v1468
    %1470 = vdwg.mxu0
    %1471 = vmatpush.msra.mxu0 %v1380
    %1472 = vmatpush.msra.mxu0 %v1377
    %1473 = vmatpush.msra.mxu0 %v1374
    %1474 = vmatpush.msra.mxu0 %v1371
    %1475 = vmatpush.msra.mxu0 %v1368
    %1476 = vmatpush.msra.mxu0 %v1365
    %1477 = vmatpush.msra.mxu0 %v1362
    %1478 = vmatpush.msra.mxu0 %v1359
    %1479 = vmatpush.msra.mxu0 %v1356
    %1480 = vmatpush.msra.mxu0 %v1353
    %1481 = vmatpush.msra.mxu0 %v1350
    %1482 = vmatpush.msra.mxu0 %v1347
    %1483 = vmatpush.msra.mxu0 %v1344
    %1484 = vmatpush.msra.mxu0 %v1341
    %1485 = vmatpush.msra.mxu0 %v1338
    %1486 = vmatpush.msra.mxu0 %v1335
    %1487 = vmatmul.f32.gmra.mxu0 %v785
    %v1488 = vpop.f32.mrf.mxu0
    %v1489 = vadd.f32 %v1385, %v1488
    %1490 = vmatmul.f32.gmra.mxu0 %v863
    %v1491 = vpop.f32.mrf.mxu0
    %v1492 = vadd.f32 %v1385, %v1491
    %1493 = vmatmul.f32.gmra.mxu0 %v941
    %v1494 = vpop.f32.mrf.mxu0
    %v1495 = vadd.f32 %v1385, %v1494
    %1496 = vmatmul.f32.gmra.mxu0 %v1019
    %v1497 = vpop.f32.mrf.mxu0
    %v1498 = vadd.f32 %v1385, %v1497
    %1499 = vmatmul.f32.gmra.mxu0 %v1097
    %v1500 = vpop.f32.mrf.mxu0
    %v1501 = vadd.f32 %v1385, %v1500
    %1502 = vmatmul.f32.gmra.mxu0 %v1175
    %v1503 = vpop.f32.mrf.mxu0
    %v1504 = vadd.f32 %v1385, %v1503
    %1505 = vmatmul.f32.gmra.mxu0 %v1253
    %v1506 = vpop.f32.mrf.mxu0
    %v1507 = vadd.f32 %v1385, %v1506
    %1508 = vmatmul.f32.gmra.mxu0 %v1331
    %v1509 = vpop.f32.mrf.mxu0
    %v1510 = vadd.f32 %v1385, %v1509
    %1511 = vdwg.mxu0
    %v1512 = vld [vmem:[#allocation6] sm:$0xff]
    %v1513 = vld [vmem:[#allocation6 + $0x8] sm:$0xff]
    %v1514 = vld [vmem:[#allocation6 + $0x10] sm:$0xff]
    %v1515 = vld [vmem:[#allocation6 + $0x18] sm:$0xff]
    %v1516 = vld [vmem:[#allocation6 + $0x20] sm:$0xff]
    %v1517 = vld [vmem:[#allocation6 + $0x28] sm:$0xff]
    %v1518 = vld [vmem:[#allocation6 + $0x30] sm:$0xff]
    %v1519 = vld [vmem:[#allocation6 + $0x38] sm:$0xff]
    %v1520 = vld [vmem:[#allocation6 + $0x40] sm:$0xff]
    %v1521 = vld [vmem:[#allocation6 + $0x48] sm:$0xff]
    %v1522 = vld [vmem:[#allocation6 + $0x50] sm:$0xff]
    %v1523 = vld [vmem:[#allocation6 + $0x58] sm:$0xff]
    %v1524 = vld [vmem:[#allocation6 + $0x60] sm:$0xff]
    %v1525 = vld [vmem:[#allocation6 + $0x68] sm:$0xff]
    %v1526 = vld [vmem:[#allocation6 + $0x70] sm:$0xff]
    %v1527 = vld [vmem:[#allocation6 + $0x78] sm:$0xff]
    %v1528 = vld [vmem:[#allocation6 + $0x80] sm:$0xff]
    %v1529 = vld [vmem:[#allocation6 + $0x88] sm:$0xff]
    %v1530 = vld [vmem:[#allocation6 + $0x90] sm:$0xff]
    %v1531 = vld [vmem:[#allocation6 + $0x98] sm:$0xff]
    %v1532 = vld [vmem:[#allocation6 + $0xa0] sm:$0xff]
    %v1533 = vld [vmem:[#allocation6 + $0xa8] sm:$0xff]
    %v1534 = vld [vmem:[#allocation6 + $0xb0] sm:$0xff]
    %v1535 = vld [vmem:[#allocation6 + $0xb8] sm:$0xff]
    %v1536 = vld [vmem:[#allocation6 + $0xc0] sm:$0xff]
    %v1537 = vld [vmem:[#allocation6 + $0xc8] sm:$0xff]
    %v1538 = vld [vmem:[#allocation6 + $0xd0] sm:$0xff]
    %v1539 = vld [vmem:[#allocation6 + $0xd8] sm:$0xff]
    %v1540 = vld [vmem:[#allocation6 + $0xe0] sm:$0xff]
    %v1541 = vld [vmem:[#allocation6 + $0xe8] sm:$0xff]
    %v1542 = vld [vmem:[#allocation6 + $0xf0] sm:$0xff]
    %v1543 = vld [vmem:[#allocation6 + $0xf8] sm:$0xff]
    %v1544 = vld [vmem:[#allocation6 + $0x100] sm:$0xff]
    %v1545 = vld [vmem:[#allocation6 + $0x108] sm:$0xff]
    %v1546 = vld [vmem:[#allocation6 + $0x110] sm:$0xff]
    %v1547 = vld [vmem:[#allocation6 + $0x118] sm:$0xff]
    %v1548 = vld [vmem:[#allocation6 + $0x120] sm:$0xff]
    %v1549 = vld [vmem:[#allocation6 + $0x128] sm:$0xff]
    %v1550 = vld [vmem:[#allocation6 + $0x130] sm:$0xff]
    %v1551 = vld [vmem:[#allocation6 + $0x138] sm:$0xff]
    %v1552 = vld [vmem:[#allocation6 + $0x140] sm:$0xff]
    %v1553 = vld [vmem:[#allocation6 + $0x148] sm:$0xff]
    %v1554 = vld [vmem:[#allocation6 + $0x150] sm:$0xff]
    %v1555 = vld [vmem:[#allocation6 + $0x158] sm:$0xff]
    %v1556 = vld [vmem:[#allocation6 + $0x160] sm:$0xff]
    %v1557 = vld [vmem:[#allocation6 + $0x168] sm:$0xff]
    %v1558 = vld [vmem:[#allocation6 + $0x170] sm:$0xff]
    %v1559 = vld [vmem:[#allocation6 + $0x178] sm:$0xff]
    %v1560 = vld [vmem:[%s14] sm:$0x1]
    %s1561 = scalar_lea.vmem %s2, 8
    %v1562 = vld [vmem:[%s1561] sm:$0xff]
    %1563 = vmatpush.msra.mxu0 %v1557
    %1564 = vmatpush.msra.mxu0 %v1554
    %1565 = vmatpush.msra.mxu0 %v1551
    %1566 = vmatpush.msra.mxu0 %v1548
    %1567 = vmatpush.msra.mxu0 %v1545
    %1568 = vmatpush.msra.mxu0 %v1542
    %1569 = vmatpush.msra.mxu0 %v1539
    %1570 = vmatpush.msra.mxu0 %v1536
    %1571 = vmatpush.msra.mxu0 %v1533
    %1572 = vmatpush.msra.mxu0 %v1530
    %1573 = vmatpush.msra.mxu0 %v1527
    %1574 = vmatpush.msra.mxu0 %v1524
    %1575 = vmatpush.msra.mxu0 %v1521
    %1576 = vmatpush.msra.mxu0 %v1518
    %1577 = vmatpush.msra.mxu0 %v1515
    %1578 = vmatpush.msra.mxu0 %v1512
    %1579 = vmatmul.f32.gmra.mxu0 %v1562
    %v1580 = vpop.f32.mrf.mxu0
    %v1581 = vadd.f32 0.0, %v1580
    %1582 = vdwg.mxu0
    %1583 = vmatpush.msra.mxu0 %v1558
    %1584 = vmatpush.msra.mxu0 %v1555
    %1585 = vmatpush.msra.mxu0 %v1552
    %1586 = vmatpush.msra.mxu0 %v1549
    %1587 = vmatpush.msra.mxu0 %v1546
    %1588 = vmatpush.msra.mxu0 %v1543
    %1589 = vmatpush.msra.mxu0 %v1540
    %1590 = vmatpush.msra.mxu0 %v1537
    %1591 = vmatpush.msra.mxu0 %v1534
    %1592 = vmatpush.msra.mxu0 %v1531
    %1593 = vmatpush.msra.mxu0 %v1528
    %1594 = vmatpush.msra.mxu0 %v1525
    %1595 = vmatpush.msra.mxu0 %v1522
    %1596 = vmatpush.msra.mxu0 %v1519
    %1597 = vmatpush.msra.mxu0 %v1516
    %1598 = vmatpush.msra.mxu0 %v1513
    %1599 = vmatmul.f32.gmra.mxu0 %v1562
    %v1600 = vpop.f32.mrf.mxu0
    %v1601 = vadd.f32 0.0, %v1600
    %1602 = vdwg.mxu0
    %1603 = vmatpush.msra.mxu0 %v1559
    %1604 = vmatpush.msra.mxu0 %v1556
    %1605 = vmatpush.msra.mxu0 %v1553
    %1606 = vmatpush.msra.mxu0 %v1550
    %1607 = vmatpush.msra.mxu0 %v1547
    %1608 = vmatpush.msra.mxu0 %v1544
    %1609 = vmatpush.msra.mxu0 %v1541
    %1610 = vmatpush.msra.mxu0 %v1538
    %1611 = vmatpush.msra.mxu0 %v1535
    %1612 = vmatpush.msra.mxu0 %v1532
    %1613 = vmatpush.msra.mxu0 %v1529
    %1614 = vmatpush.msra.mxu0 %v1526
    %1615 = vmatpush.msra.mxu0 %v1523
    %1616 = vmatpush.msra.mxu0 %v1520
    %1617 = vmatpush.msra.mxu0 %v1517
    %1618 = vmatpush.msra.mxu0 %v1514
    %1619 = vmatmul.f32.gmra.mxu0 %v1562
    %v1620 = vpop.f32.mrf.mxu0
    %v1621 = vadd.f32 0.0, %v1620
    %1622 = vdwg.mxu0
    %v1623 = vadd.f32 %v1407, %v1581
    %v1624 = vadd.f32 %v1448, %v1601
    %v1625 = vmul.f32 %v1623, 0.5
    %v1626 = vmul.f32 %v1624, 0.5
    %v1627 = vtanh.pop %v1625
    %v1628 = vtanh.pop %v1626
    %v1629 = vmul.f32 %v1627, 0.5
    %v1630 = vmul.f32 %v1628, 0.5
    %v1631 = vadd.f32 %v1629, 0.5
    %v1632 = vadd.f32 %v1630, 0.5
    %v1634 = vperm.slane %v1560, 0
    %v1636 = vadd.f32 %v1621, %v1634
    %v1637 = vmul.f32 %v1631, %v1636
    %v1638 = vadd.f32 %v1489, %v1637
    %v1639 = vtanh.pop %v1638
    %v1640 = vsub.f32 1.0, %v1632
    %v1641 = vmul.f32 %v1640, %v1639
    %v1642 = vmul.f32 %v1632, %v1562
    %v1643 = vadd.f32 %v1641, %v1642
    %1644 = vmatpush.msra.mxu0 %v1557
    %1645 = vmatpush.msra.mxu0 %v1554
    %1646 = vmatpush.msra.mxu0 %v1551
    %1647 = vmatpush.msra.mxu0 %v1548
    %1648 = vmatpush.msra.mxu0 %v1545
    %1649 = vmatpush.msra.mxu0 %v1542
    %1650 = vmatpush.msra.mxu0 %v1539
    %1651 = vmatpush.msra.mxu0 %v1536
    %1652 = vmatpush.msra.mxu0 %v1533
    %1653 = vmatpush.msra.mxu0 %v1530
    %1654 = vmatpush.msra.mxu0 %v1527
    %1655 = vmatpush.msra.mxu0 %v1524
    %1656 = vmatpush.msra.mxu0 %v1521
    %1657 = vmatpush.msra.mxu0 %v1518
    %1658 = vmatpush.msra.mxu0 %v1515
    %1659 = vmatpush.msra.mxu0 %v1512
    %1660 = vmatmul.f32.gmra.mxu0 %v1643
    %v1661 = vpop.f32.mrf.mxu0
    %v1662 = vadd.f32 0.0, %v1661
    %1663 = vdwg.mxu0
    %1664 = vmatpush.msra.mxu0 %v1558
    %1665 = vmatpush.msra.mxu0 %v1555
    %1666 = vmatpush.msra.mxu0 %v1552
    %1667 = vmatpush.msra.mxu0 %v1549
    %1668 = vmatpush.msra.mxu0 %v1546
    %1669 = vmatpush.msra.mxu0 %v1543
    %1670 = vmatpush.msra.mxu0 %v1540
    %1671 = vmatpush.msra.mxu0 %v1537
    %1672 = vmatpush.msra.mxu0 %v1534
    %1673 = vmatpush.msra.mxu0 %v1531
    %1674 = vmatpush.msra.mxu0 %v1528
    %1675 = vmatpush.msra.mxu0 %v1525
    %1676 = vmatpush.msra.mxu0 %v1522
    %1677 = vmatpush.msra.mxu0 %v1519
    %1678 = vmatpush.msra.mxu0 %v1516
    %1679 = vmatpush.msra.mxu0 %v1513
    %1680 = vmatmul.f32.gmra.mxu0 %v1643
    %v1681 = vpop.f32.mrf.mxu0
    %v1682 = vadd.f32 0.0, %v1681
    %1683 = vdwg.mxu0
    %1684 = vmatpush.msra.mxu0 %v1559
    %1685 = vmatpush.msra.mxu0 %v1556
    %1686 = vmatpush.msra.mxu0 %v1553
    %1687 = vmatpush.msra.mxu0 %v1550
    %1688 = vmatpush.msra.mxu0 %v1547
    %1689 = vmatpush.msra.mxu0 %v1544
    %1690 = vmatpush.msra.mxu0 %v1541
    %1691 = vmatpush.msra.mxu0 %v1538
    %1692 = vmatpush.msra.mxu0 %v1535
    %1693 = vmatpush.msra.mxu0 %v1532
    %1694 = vmatpush.msra.mxu0 %v1529
    %1695 = vmatpush.msra.mxu0 %v1526
    %1696 = vmatpush.msra.mxu0 %v1523
    %1697 = vmatpush.msra.mxu0 %v1520
    %1698 = vmatpush.msra.mxu0 %v1517
    %1699 = vmatpush.msra.mxu0 %v1514
    %1700 = vmatmul.f32.gmra.mxu0 %v1643
    %v1701 = vpop.f32.mrf.mxu0
    %v1702 = vadd.f32 0.0, %v1701
    %1703 = vdwg.mxu0
    %v1704 = vadd.f32 %v1410, %v1662
    %v1705 = vadd.f32 %v1451, %v1682
    %v1706 = vmul.f32 %v1704, 0.5
    %v1707 = vmul.f32 %v1705, 0.5
    %v1708 = vtanh.pop %v1706
    %v1709 = vtanh.pop %v1707
    %v1710 = vmul.f32 %v1708, 0.5
    %v1711 = vmul.f32 %v1709, 0.5
    %v1712 = vadd.f32 %v1710, 0.5
    %v1713 = vadd.f32 %v1711, 0.5
    %v1714 = vadd.f32 %v1702, %v1634
    %v1715 = vmul.f32 %v1712, %v1714
    %v1716 = vadd.f32 %v1492, %v1715
    %v1717 = vtanh.pop %v1716
    %v1718 = vsub.f32 1.0, %v1713
    %v1719 = vmul.f32 %v1718, %v1717
    %v1720 = vmul.f32 %v1713, %v1643
    %v1721 = vadd.f32 %v1719, %v1720
    %1722 = vmatpush.msra.mxu0 %v1557
    %1723 = vmatpush.msra.mxu0 %v1554
    %1724 = vmatpush.msra.mxu0 %v1551
    %1725 = vmatpush.msra.mxu0 %v1548
    %1726 = vmatpush.msra.mxu0 %v1545
    %1727 = vmatpush.msra.mxu0 %v1542
    %1728 = vmatpush.msra.mxu0 %v1539
    %1729 = vmatpush.msra.mxu0 %v1536
    %1730 = vmatpush.msra.mxu0 %v1533
    %1731 = vmatpush.msra.mxu0 %v1530
    %1732 = vmatpush.msra.mxu0 %v1527
    %1733 = vmatpush.msra.mxu0 %v1524
    %1734 = vmatpush.msra.mxu0 %v1521
    %1735 = vmatpush.msra.mxu0 %v1518
    %1736 = vmatpush.msra.mxu0 %v1515
    %1737 = vmatpush.msra.mxu0 %v1512
    %1738 = vmatmul.f32.gmra.mxu0 %v1721
    %v1739 = vpop.f32.mrf.mxu0
    %v1740 = vadd.f32 0.0, %v1739
    %1741 = vdwg.mxu0
    %1742 = vmatpush.msra.mxu0 %v1558
    %1743 = vmatpush.msra.mxu0 %v1555
    %1744 = vmatpush.msra.mxu0 %v1552
    %1745 = vmatpush.msra.mxu0 %v1549
    %1746 = vmatpush.msra.mxu0 %v1546
    %1747 = vmatpush.msra.mxu0 %v1543
    %1748 = vmatpush.msra.mxu0 %v1540
    %1749 = vmatpush.msra.mxu0 %v1537
    %1750 = vmatpush.msra.mxu0 %v1534
    %1751 = vmatpush.msra.mxu0 %v1531
    %1752 = vmatpush.msra.mxu0 %v1528
    %1753 = vmatpush.msra.mxu0 %v1525
    %1754 = vmatpush.msra.mxu0 %v1522
    %1755 = vmatpush.msra.mxu0 %v1519
    %1756 = vmatpush.msra.mxu0 %v1516
    %1757 = vmatpush.msra.mxu0 %v1513
    %1758 = vmatmul.f32.gmra.mxu0 %v1721
    %v1759 = vpop.f32.mrf.mxu0
    %v1760 = vadd.f32 0.0, %v1759
    %1761 = vdwg.mxu0
    %1762 = vmatpush.msra.mxu0 %v1559
    %1763 = vmatpush.msra.mxu0 %v1556
    %1764 = vmatpush.msra.mxu0 %v1553
    %1765 = vmatpush.msra.mxu0 %v1550
    %1766 = vmatpush.msra.mxu0 %v1547
    %1767 = vmatpush.msra.mxu0 %v1544
    %1768 = vmatpush.msra.mxu0 %v1541
    %1769 = vmatpush.msra.mxu0 %v1538
    %1770 = vmatpush.msra.mxu0 %v1535
    %1771 = vmatpush.msra.mxu0 %v1532
    %1772 = vmatpush.msra.mxu0 %v1529
    %1773 = vmatpush.msra.mxu0 %v1526
    %1774 = vmatpush.msra.mxu0 %v1523
    %1775 = vmatpush.msra.mxu0 %v1520
    %1776 = vmatpush.msra.mxu0 %v1517
    %1777 = vmatpush.msra.mxu0 %v1514
    %1778 = vmatmul.f32.gmra.mxu0 %v1721
    %v1779 = vpop.f32.mrf.mxu0
    %v1780 = vadd.f32 0.0, %v1779
    %1781 = vdwg.mxu0
    %v1782 = vadd.f32 %v1413, %v1740
    %v1783 = vadd.f32 %v1454, %v1760
    %v1784 = vmul.f32 %v1782, 0.5
    %v1785 = vmul.f32 %v1783, 0.5
    %v1786 = vtanh.pop %v1784
    %v1787 = vtanh.pop %v1785
    %v1788 = vmul.f32 %v1786, 0.5
    %v1789 = vmul.f32 %v1787, 0.5
    %v1790 = vadd.f32 %v1788, 0.5
    %v1791 = vadd.f32 %v1789, 0.5
    %v1792 = vadd.f32 %v1780, %v1634
    %v1793 = vmul.f32 %v1790, %v1792
    %v1794 = vadd.f32 %v1495, %v1793
    %v1795 = vtanh.pop %v1794
    %v1796 = vsub.f32 1.0, %v1791
    %v1797 = vmul.f32 %v1796, %v1795
    %v1798 = vmul.f32 %v1791, %v1721
    %v1799 = vadd.f32 %v1797, %v1798
    %1800 = vmatpush.msra.mxu0 %v1557
    %1801 = vmatpush.msra.mxu0 %v1554
    %1802 = vmatpush.msra.mxu0 %v1551
    %1803 = vmatpush.msra.mxu0 %v1548
    %1804 = vmatpush.msra.mxu0 %v1545
    %1805 = vmatpush.msra.mxu0 %v1542
    %1806 = vmatpush.msra.mxu0 %v1539
    %1807 = vmatpush.msra.mxu0 %v1536
    %1808 = vmatpush.msra.mxu0 %v1533
    %1809 = vmatpush.msra.mxu0 %v1530
    %1810 = vmatpush.msra.mxu0 %v1527
    %1811 = vmatpush.msra.mxu0 %v1524
    %1812 = vmatpush.msra.mxu0 %v1521
    %1813 = vmatpush.msra.mxu0 %v1518
    %1814 = vmatpush.msra.mxu0 %v1515
    %1815 = vmatpush.msra.mxu0 %v1512
    %1816 = vmatmul.f32.gmra.mxu0 %v1799
    %v1817 = vpop.f32.mrf.mxu0
    %v1818 = vadd.f32 0.0, %v1817
    %1819 = vdwg.mxu0
    %1820 = vmatpush.msra.mxu0 %v1558
    %1821 = vmatpush.msra.mxu0 %v1555
    %1822 = vmatpush.msra.mxu0 %v1552
    %1823 = vmatpush.msra.mxu0 %v1549
    %1824 = vmatpush.msra.mxu0 %v1546
    %1825 = vmatpush.msra.mxu0 %v1543
    %1826 = vmatpush.msra.mxu0 %v1540
    %1827 = vmatpush.msra.mxu0 %v1537
    %1828 = vmatpush.msra.mxu0 %v1534
    %1829 = vmatpush.msra.mxu0 %v1531
    %1830 = vmatpush.msra.mxu0 %v1528
    %1831 = vmatpush.msra.mxu0 %v1525
    %1832 = vmatpush.msra.mxu0 %v1522
    %1833 = vmatpush.msra.mxu0 %v1519
    %1834 = vmatpush.msra.mxu0 %v1516
    %1835 = vmatpush.msra.mxu0 %v1513
    %1836 = vmatmul.f32.gmra.mxu0 %v1799
    %v1837 = vpop.f32.mrf.mxu0
    %v1838 = vadd.f32 0.0, %v1837
    %1839 = vdwg.mxu0
    %1840 = vmatpush.msra.mxu0 %v1559
    %1841 = vmatpush.msra.mxu0 %v1556
    %1842 = vmatpush.msra.mxu0 %v1553
    %1843 = vmatpush.msra.mxu0 %v1550
    %1844 = vmatpush.msra.mxu0 %v1547
    %1845 = vmatpush.msra.mxu0 %v1544
    %1846 = vmatpush.msra.mxu0 %v1541
    %1847 = vmatpush.msra.mxu0 %v1538
    %1848 = vmatpush.msra.mxu0 %v1535
    %1849 = vmatpush.msra.mxu0 %v1532
    %1850 = vmatpush.msra.mxu0 %v1529
    %1851 = vmatpush.msra.mxu0 %v1526
    %1852 = vmatpush.msra.mxu0 %v1523
    %1853 = vmatpush.msra.mxu0 %v1520
    %1854 = vmatpush.msra.mxu0 %v1517
    %1855 = vmatpush.msra.mxu0 %v1514
    %1856 = vmatmul.f32.gmra.mxu0 %v1799
    %v1857 = vpop.f32.mrf.mxu0
    %v1858 = vadd.f32 0.0, %v1857
    %1859 = vdwg.mxu0
    %v1860 = vadd.f32 %v1416, %v1818
    %v1861 = vadd.f32 %v1457, %v1838
    %v1862 = vmul.f32 %v1860, 0.5
    %v1863 = vmul.f32 %v1861, 0.5
    %v1864 = vtanh.pop %v1862
    %v1865 = vtanh.pop %v1863
    %v1866 = vmul.f32 %v1864, 0.5
    %v1867 = vmul.f32 %v1865, 0.5
    %v1868 = vadd.f32 %v1866, 0.5
    %v1869 = vadd.f32 %v1867, 0.5
    %v1870 = vadd.f32 %v1858, %v1634
    %v1871 = vmul.f32 %v1868, %v1870
    %v1872 = vadd.f32 %v1498, %v1871
    %v1873 = vtanh.pop %v1872
    %v1874 = vsub.f32 1.0, %v1869
    %v1875 = vmul.f32 %v1874, %v1873
    %v1876 = vmul.f32 %v1869, %v1799
    %v1877 = vadd.f32 %v1875, %v1876
    %1878 = vmatpush.msra.mxu0 %v1557
    %1879 = vmatpush.msra.mxu0 %v1554
    %1880 = vmatpush.msra.mxu0 %v1551
    %1881 = vmatpush.msra.mxu0 %v1548
    %1882 = vmatpush.msra.mxu0 %v1545
    %1883 = vmatpush.msra.mxu0 %v1542
    %1884 = vmatpush.msra.mxu0 %v1539
    %1885 = vmatpush.msra.mxu0 %v1536
    %1886 = vmatpush.msra.mxu0 %v1533
    %1887 = vmatpush.msra.mxu0 %v1530
    %1888 = vmatpush.msra.mxu0 %v1527
    %1889 = vmatpush.msra.mxu0 %v1524
    %1890 = vmatpush.msra.mxu0 %v1521
    %1891 = vmatpush.msra.mxu0 %v1518
    %1892 = vmatpush.msra.mxu0 %v1515
    %1893 = vmatpush.msra.mxu0 %v1512
    %1894 = vmatmul.f32.gmra.mxu0 %v1877
    %v1895 = vpop.f32.mrf.mxu0
    %v1896 = vadd.f32 0.0, %v1895
    %1897 = vdwg.mxu0
    %1898 = vmatpush.msra.mxu0 %v1558
    %1899 = vmatpush.msra.mxu0 %v1555
    %1900 = vmatpush.msra.mxu0 %v1552
    %1901 = vmatpush.msra.mxu0 %v1549
    %1902 = vmatpush.msra.mxu0 %v1546
    %1903 = vmatpush.msra.mxu0 %v1543
    %1904 = vmatpush.msra.mxu0 %v1540
    %1905 = vmatpush.msra.mxu0 %v1537
    %1906 = vmatpush.msra.mxu0 %v1534
    %1907 = vmatpush.msra.mxu0 %v1531
    %1908 = vmatpush.msra.mxu0 %v1528
    %1909 = vmatpush.msra.mxu0 %v1525
    %1910 = vmatpush.msra.mxu0 %v1522
    %1911 = vmatpush.msra.mxu0 %v1519
    %1912 = vmatpush.msra.mxu0 %v1516
    %1913 = vmatpush.msra.mxu0 %v1513
    %1914 = vmatmul.f32.gmra.mxu0 %v1877
    %v1915 = vpop.f32.mrf.mxu0
    %v1916 = vadd.f32 0.0, %v1915
    %1917 = vdwg.mxu0
    %1918 = vmatpush.msra.mxu0 %v1559
    %1919 = vmatpush.msra.mxu0 %v1556
    %1920 = vmatpush.msra.mxu0 %v1553
    %1921 = vmatpush.msra.mxu0 %v1550
    %1922 = vmatpush.msra.mxu0 %v1547
    %1923 = vmatpush.msra.mxu0 %v1544
    %1924 = vmatpush.msra.mxu0 %v1541
    %1925 = vmatpush.msra.mxu0 %v1538
    %1926 = vmatpush.msra.mxu0 %v1535
    %1927 = vmatpush.msra.mxu0 %v1532
    %1928 = vmatpush.msra.mxu0 %v1529
    %1929 = vmatpush.msra.mxu0 %v1526
    %1930 = vmatpush.msra.mxu0 %v1523
    %1931 = vmatpush.msra.mxu0 %v1520
    %1932 = vmatpush.msra.mxu0 %v1517
    %1933 = vmatpush.msra.mxu0 %v1514
    %1934 = vmatmul.f32.gmra.mxu0 %v1877
    %v1935 = vpop.f32.mrf.mxu0
    %v1936 = vadd.f32 0.0, %v1935
    %1937 = vdwg.mxu0
    %v1938 = vadd.f32 %v1419, %v1896
    %v1939 = vadd.f32 %v1460, %v1916
    %v1940 = vmul.f32 %v1938, 0.5
    %v1941 = vmul.f32 %v1939, 0.5
    %v1942 = vtanh.pop %v1940
    %v1943 = vtanh.pop %v1941
    %v1944 = vmul.f32 %v1942, 0.5
    %v1945 = vmul.f32 %v1943, 0.5
    %v1946 = vadd.f32 %v1944, 0.5
    %v1947 = vadd.f32 %v1945, 0.5
    %v1948 = vadd.f32 %v1936, %v1634
    %v1949 = vmul.f32 %v1946, %v1948
    %v1950 = vadd.f32 %v1501, %v1949
    %v1951 = vtanh.pop %v1950
    %v1952 = vsub.f32 1.0, %v1947
    %v1953 = vmul.f32 %v1952, %v1951
    %v1954 = vmul.f32 %v1947, %v1877
    %v1955 = vadd.f32 %v1953, %v1954
    %1956 = vmatpush.msra.mxu0 %v1557
    %1957 = vmatpush.msra.mxu0 %v1554
    %1958 = vmatpush.msra.mxu0 %v1551
    %1959 = vmatpush.msra.mxu0 %v1548
    %1960 = vmatpush.msra.mxu0 %v1545
    %1961 = vmatpush.msra.mxu0 %v1542
    %1962 = vmatpush.msra.mxu0 %v1539
    %1963 = vmatpush.msra.mxu0 %v1536
    %1964 = vmatpush.msra.mxu0 %v1533
    %1965 = vmatpush.msra.mxu0 %v1530
    %1966 = vmatpush.msra.mxu0 %v1527
    %1967 = vmatpush.msra.mxu0 %v1524
    %1968 = vmatpush.msra.mxu0 %v1521
    %1969 = vmatpush.msra.mxu0 %v1518
    %1970 = vmatpush.msra.mxu0 %v1515
    %1971 = vmatpush.msra.mxu0 %v1512
    %1972 = vmatmul.f32.gmra.mxu0 %v1955
    %v1973 = vpop.f32.mrf.mxu0
    %v1974 = vadd.f32 0.0, %v1973
    %1975 = vdwg.mxu0
    %1976 = vmatpush.msra.mxu0 %v1558
    %1977 = vmatpush.msra.mxu0 %v1555
    %1978 = vmatpush.msra.mxu0 %v1552
    %1979 = vmatpush.msra.mxu0 %v1549
    %1980 = vmatpush.msra.mxu0 %v1546
    %1981 = vmatpush.msra.mxu0 %v1543
    %1982 = vmatpush.msra.mxu0 %v1540
    %1983 = vmatpush.msra.mxu0 %v1537
    %1984 = vmatpush.msra.mxu0 %v1534
    %1985 = vmatpush.msra.mxu0 %v1531
    %1986 = vmatpush.msra.mxu0 %v1528
    %1987 = vmatpush.msra.mxu0 %v1525
    %1988 = vmatpush.msra.mxu0 %v1522
    %1989 = vmatpush.msra.mxu0 %v1519
    %1990 = vmatpush.msra.mxu0 %v1516
    %1991 = vmatpush.msra.mxu0 %v1513
    %1992 = vmatmul.f32.gmra.mxu0 %v1955
    %v1993 = vpop.f32.mrf.mxu0
    %v1994 = vadd.f32 0.0, %v1993
    %1995 = vdwg.mxu0
    %1996 = vmatpush.msra.mxu0 %v1559
    %1997 = vmatpush.msra.mxu0 %v1556
    %1998 = vmatpush.msra.mxu0 %v1553
    %1999 = vmatpush.msra.mxu0 %v1550
    %2000 = vmatpush.msra.mxu0 %v1547
    %2001 = vmatpush.msra.mxu0 %v1544
    %2002 = vmatpush.msra.mxu0 %v1541
    %2003 = vmatpush.msra.mxu0 %v1538
    %2004 = vmatpush.msra.mxu0 %v1535
    %2005 = vmatpush.msra.mxu0 %v1532
    %2006 = vmatpush.msra.mxu0 %v1529
    %2007 = vmatpush.msra.mxu0 %v1526
    %2008 = vmatpush.msra.mxu0 %v1523
    %2009 = vmatpush.msra.mxu0 %v1520
    %2010 = vmatpush.msra.mxu0 %v1517
    %2011 = vmatpush.msra.mxu0 %v1514
    %2012 = vmatmul.f32.gmra.mxu0 %v1955
    %v2013 = vpop.f32.mrf.mxu0
    %v2014 = vadd.f32 0.0, %v2013
    %2015 = vdwg.mxu0
    %v2016 = vadd.f32 %v1422, %v1974
    %v2017 = vadd.f32 %v1463, %v1994
    %v2018 = vmul.f32 %v2016, 0.5
    %v2019 = vmul.f32 %v2017, 0.5
    %v2020 = vtanh.pop %v2018
    %v2021 = vtanh.pop %v2019
    %v2022 = vmul.f32 %v2020, 0.5
    %v2023 = vmul.f32 %v2021, 0.5
    %v2024 = vadd.f32 %v2022, 0.5
    %v2025 = vadd.f32 %v2023, 0.5
    %v2026 = vadd.f32 %v2014, %v1634
    %v2027 = vmul.f32 %v2024, %v2026
    %v2028 = vadd.f32 %v1504, %v2027
    %v2029 = vtanh.pop %v2028
    %v2030 = vsub.f32 1.0, %v2025
    %v2031 = vmul.f32 %v2030, %v2029
    %v2032 = vmul.f32 %v2025, %v1955
    %v2033 = vadd.f32 %v2031, %v2032
    %2034 = vmatpush.msra.mxu0 %v1557
    %2035 = vmatpush.msra.mxu0 %v1554
    %2036 = vmatpush.msra.mxu0 %v1551
    %2037 = vmatpush.msra.mxu0 %v1548
    %2038 = vmatpush.msra.mxu0 %v1545
    %2039 = vmatpush.msra.mxu0 %v1542
    %2040 = vmatpush.msra.mxu0 %v1539
    %2041 = vmatpush.msra.mxu0 %v1536
    %2042 = vmatpush.msra.mxu0 %v1533
    %2043 = vmatpush.msra.mxu0 %v1530
    %2044 = vmatpush.msra.mxu0 %v1527
    %2045 = vmatpush.msra.mxu0 %v1524
    %2046 = vmatpush.msra.mxu0 %v1521
    %2047 = vmatpush.msra.mxu0 %v1518
    %2048 = vmatpush.msra.mxu0 %v1515
    %2049 = vmatpush.msra.mxu0 %v1512
    %2050 = vmatmul.f32.gmra.mxu0 %v2033
    %v2051 = vpop.f32.mrf.mxu0
    %v2052 = vadd.f32 0.0, %v2051
    %2053 = vdwg.mxu0
    %2054 = vmatpush.msra.mxu0 %v1558
    %2055 = vmatpush.msra.mxu0 %v1555
    %2056 = vmatpush.msra.mxu0 %v1552
    %2057 = vmatpush.msra.mxu0 %v1549
    %2058 = vmatpush.msra.mxu0 %v1546
    %2059 = vmatpush.msra.mxu0 %v1543
    %2060 = vmatpush.msra.mxu0 %v1540
    %2061 = vmatpush.msra.mxu0 %v1537
    %2062 = vmatpush.msra.mxu0 %v1534
    %2063 = vmatpush.msra.mxu0 %v1531
    %2064 = vmatpush.msra.mxu0 %v1528
    %2065 = vmatpush.msra.mxu0 %v1525
    %2066 = vmatpush.msra.mxu0 %v1522
    %2067 = vmatpush.msra.mxu0 %v1519
    %2068 = vmatpush.msra.mxu0 %v1516
    %2069 = vmatpush.msra.mxu0 %v1513
    %2070 = vmatmul.f32.gmra.mxu0 %v2033
    %v2071 = vpop.f32.mrf.mxu0
    %v2072 = vadd.f32 0.0, %v2071
    %2073 = vdwg.mxu0
    %2074 = vmatpush.msra.mxu0 %v1559
    %2075 = vmatpush.msra.mxu0 %v1556
    %2076 = vmatpush.msra.mxu0 %v1553
    %2077 = vmatpush.msra.mxu0 %v1550
    %2078 = vmatpush.msra.mxu0 %v1547
    %2079 = vmatpush.msra.mxu0 %v1544
    %2080 = vmatpush.msra.mxu0 %v1541
    %2081 = vmatpush.msra.mxu0 %v1538
    %2082 = vmatpush.msra.mxu0 %v1535
    %2083 = vmatpush.msra.mxu0 %v1532
    %2084 = vmatpush.msra.mxu0 %v1529
    %2085 = vmatpush.msra.mxu0 %v1526
    %2086 = vmatpush.msra.mxu0 %v1523
    %2087 = vmatpush.msra.mxu0 %v1520
    %2088 = vmatpush.msra.mxu0 %v1517
    %2089 = vmatpush.msra.mxu0 %v1514
    %2090 = vmatmul.f32.gmra.mxu0 %v2033
    %v2091 = vpop.f32.mrf.mxu0
    %v2092 = vadd.f32 0.0, %v2091
    %2093 = vdwg.mxu0
    %v2094 = vadd.f32 %v1425, %v2052
    %v2095 = vadd.f32 %v1466, %v2072
    %v2096 = vmul.f32 %v2094, 0.5
    %v2097 = vmul.f32 %v2095, 0.5
    %v2098 = vtanh.pop %v2096
    %v2099 = vtanh.pop %v2097
    %v2100 = vmul.f32 %v2098, 0.5
    %v2101 = vmul.f32 %v2099, 0.5
    %v2102 = vadd.f32 %v2100, 0.5
    %v2103 = vadd.f32 %v2101, 0.5
    %v2104 = vadd.f32 %v2092, %v1634
    %v2105 = vmul.f32 %v2102, %v2104
    %v2106 = vadd.f32 %v1507, %v2105
    %v2107 = vtanh.pop %v2106
    %v2108 = vsub.f32 1.0, %v2103
    %v2109 = vmul.f32 %v2108, %v2107
    %v2110 = vmul.f32 %v2103, %v2033
    %v2111 = vadd.f32 %v2109, %v2110
    %2112 = vmatpush.msra.mxu0 %v1557
    %2113 = vmatpush.msra.mxu0 %v1554
    %2114 = vmatpush.msra.mxu0 %v1551
    %2115 = vmatpush.msra.mxu0 %v1548
    %2116 = vmatpush.msra.mxu0 %v1545
    %2117 = vmatpush.msra.mxu0 %v1542
    %2118 = vmatpush.msra.mxu0 %v1539
    %2119 = vmatpush.msra.mxu0 %v1536
    %2120 = vmatpush.msra.mxu0 %v1533
    %2121 = vmatpush.msra.mxu0 %v1530
    %2122 = vmatpush.msra.mxu0 %v1527
    %2123 = vmatpush.msra.mxu0 %v1524
    %2124 = vmatpush.msra.mxu0 %v1521
    %2125 = vmatpush.msra.mxu0 %v1518
    %2126 = vmatpush.msra.mxu0 %v1515
    %2127 = vmatpush.msra.mxu0 %v1512
    %2128 = vmatmul.f32.gmra.mxu0 %v2111
    %v2129 = vpop.f32.mrf.mxu0
    %v2130 = vadd.f32 0.0, %v2129
    %2131 = vdwg.mxu0
    %2132 = vmatpush.msra.mxu0 %v1558
    %2133 = vmatpush.msra.mxu0 %v1555
    %2134 = vmatpush.msra.mxu0 %v1552
    %2135 = vmatpush.msra.mxu0 %v1549
    %2136 = vmatpush.msra.mxu0 %v1546
    %2137 = vmatpush.msra.mxu0 %v1543
    %2138 = vmatpush.msra.mxu0 %v1540
    %2139 = vmatpush.msra.mxu0 %v1537
    %2140 = vmatpush.msra.mxu0 %v1534
    %2141 = vmatpush.msra.mxu0 %v1531
    %2142 = vmatpush.msra.mxu0 %v1528
    %2143 = vmatpush.msra.mxu0 %v1525
    %2144 = vmatpush.msra.mxu0 %v1522
    %2145 = vmatpush.msra.mxu0 %v1519
    %2146 = vmatpush.msra.mxu0 %v1516
    %2147 = vmatpush.msra.mxu0 %v1513
    %2148 = vmatmul.f32.gmra.mxu0 %v2111
    %v2149 = vpop.f32.mrf.mxu0
    %v2150 = vadd.f32 0.0, %v2149
    %2151 = vdwg.mxu0
    %2152 = vmatpush.msra.mxu0 %v1559
    %2153 = vmatpush.msra.mxu0 %v1556
    %2154 = vmatpush.msra.mxu0 %v1553
    %2155 = vmatpush.msra.mxu0 %v1550
    %2156 = vmatpush.msra.mxu0 %v1547
    %2157 = vmatpush.msra.mxu0 %v1544
    %2158 = vmatpush.msra.mxu0 %v1541
    %2159 = vmatpush.msra.mxu0 %v1538
    %2160 = vmatpush.msra.mxu0 %v1535
    %2161 = vmatpush.msra.mxu0 %v1532
    %2162 = vmatpush.msra.mxu0 %v1529
    %2163 = vmatpush.msra.mxu0 %v1526
    %2164 = vmatpush.msra.mxu0 %v1523
    %2165 = vmatpush.msra.mxu0 %v1520
    %2166 = vmatpush.msra.mxu0 %v1517
    %2167 = vmatpush.msra.mxu0 %v1514
    %2168 = vmatmul.f32.gmra.mxu0 %v2111
    %v2169 = vpop.f32.mrf.mxu0
    %v2170 = vadd.f32 0.0, %v2169
    %2171 = vdwg.mxu0
    %v2172 = vadd.f32 %v1428, %v2130
    %v2173 = vadd.f32 %v1469, %v2150
    %v2174 = vmul.f32 %v2172, 0.5
    %v2175 = vmul.f32 %v2173, 0.5
    %v2176 = vtanh.pop %v2174
    %v2177 = vtanh.pop %v2175
    %v2178 = vmul.f32 %v2176, 0.5
    %v2179 = vmul.f32 %v2177, 0.5
    %v2180 = vadd.f32 %v2178, 0.5
    %v2181 = vadd.f32 %v2179, 0.5
    %v2182 = vadd.f32 %v2170, %v1634
    %v2183 = vmul.f32 %v2180, %v2182
    %v2184 = vadd.f32 %v1510, %v2183
    %v2185 = vtanh.pop %v2184
    %v2186 = vsub.f32 1.0, %v2181
    %v2187 = vmul.f32 %v2186, %v2185
    %v2188 = vmul.f32 %v2181, %v2111
    %v2189 = vadd.f32 %v2187, %v2188
    %s2190 = scalar_lea.vmem %s18, 8
    %2191 = vst [vmem:[%s2190] sm:$0xff] %v2189
    %v2192 = vmax.f32 %v2189, 0.0
    %v2193 = vld [vmem:[#allocation7] sm:$0xff]
    %v2194 = vld [vmem:[#allocation7 + $0x8] sm:$0xff]
    %v2195 = vld [vmem:[#allocation7 + $0x10] sm:$0xff]
    %v2196 = vld [vmem:[#allocation7 + $0x18] sm:$0xff]
    %v2197 = vld [vmem:[#allocation7 + $0x20] sm:$0xff]
    %v2198 = vld [vmem:[#allocation7 + $0x28] sm:$0xff]
    %v2199 = vld [vmem:[#allocation7 + $0x30] sm:$0xff]
    %v2200 = vld [vmem:[#allocation7 + $0x38] sm:$0xff]
    %v2201 = vld [vmem:[#allocation7 + $0x40] sm:$0xff]
    %v2202 = vld [vmem:[#allocation7 + $0x48] sm:$0xff]
    %v2203 = vld [vmem:[#allocation7 + $0x50] sm:$0xff]
    %v2204 = vld [vmem:[#allocation7 + $0x58] sm:$0xff]
    %v2205 = vld [vmem:[#allocation7 + $0x60] sm:$0xff]
    %v2206 = vld [vmem:[#allocation7 + $0x68] sm:$0xff]
    %v2207 = vld [vmem:[#allocation7 + $0x70] sm:$0xff]
    %v2208 = vld [vmem:[#allocation7 + $0x78] sm:$0xff]
    %v2209 = vld [vmem:[%s16] sm:$0x1]
    %v2211 = vperm.slane %v2209, 0
    %2213 = vmatpush.msra.mxu0 %v2208
    %2214 = vmatpush.msra.mxu0 %v2207
    %2215 = vmatpush.msra.mxu0 %v2206
    %2216 = vmatpush.msra.mxu0 %v2205
    %2217 = vmatpush.msra.mxu0 %v2204
    %2218 = vmatpush.msra.mxu0 %v2203
    %2219 = vmatpush.msra.mxu0 %v2202
    %2220 = vmatpush.msra.mxu0 %v2201
    %2221 = vmatpush.msra.mxu0 %v2200
    %2222 = vmatpush.msra.mxu0 %v2199
    %2223 = vmatpush.msra.mxu0 %v2198
    %2224 = vmatpush.msra.mxu0 %v2197
    %2225 = vmatpush.msra.mxu0 %v2196
    %2226 = vmatpush.msra.mxu0 %v2195
    %2227 = vmatpush.msra.mxu0 %v2194
    %2228 = vmatpush.msra.mxu0 %v2193
    %2229 = vmatmul.f32.gmra.mxu0 %v2192
    %v2230 = vpop.f32.mrf.mxu0
    %v2231 = vadd.f32 %v2211, %v2230
    %2232 = vdwg.mxu0
    %2233 = vst [vmem:[%s17] sm:$0xff] %v2231
    // Predicated region
    $region86: #{grunet_forward.1} parent=1 // pred_check
      _
    $region87: #{grunet_forward.1} parent=1 // pred_check_branch
      %2235 = sbr.rel (0) target = $region89
    $region88: #{grunet_forward.1} parent=1 // pred_region
      _
    $region89: #{grunet_forward.1} parent=1 // pred_fallthru
      _
    // Predicated region
    $region90: #{grunet_forward.1} parent=1 // pred_check
      _
    $region91: #{grunet_forward.1} parent=1 // pred_check_branch
      %2237 = sbr.rel (0) target = $region93
    $region92: #{grunet_forward.1} parent=1 // pred_region
      _
    $region93: #{grunet_forward.1} parent=1 // pred_fallthru
      _
    // Predicated region
    $region94: #{grunet_forward.1} parent=1 // pred_check
      _
    $region95: #{grunet_forward.1} parent=1 // pred_check_branch
      %2239 = sbr.rel (0) target = $region97
    $region96: #{grunet_forward.1} parent=1 // pred_region
      _
    $region97: #{grunet_forward.1} parent=1 // pred_fallthru
      _
    // Predicated region
    $region98: #{grunet_forward.1} parent=1 // pred_check
      _
    $region99: #{grunet_forward.1} parent=1 // pred_check_branch
      %2241 = sbr.rel (0) target = $region101
    $region100: #{grunet_forward.1} parent=1 // pred_region
      _
    $region101: #{grunet_forward.1} parent=1 // pred_fallthru
      _
    %2242 = vsyncpa [#allocation3], 1
    %2243 = vsyncpa [#allocation5], 1
    %2244 = vsyncpa [#allocation8], 1

</llo_original>
